<compile_context>
chip_gen: v7x
topology: tpu7x:2x2x1
jax: 0.10.0
libtpu: 0.0.40
codegen_flags: <defaults>
</compile_context>

<pallas_src>
from typing import NamedTuple

import jax
import jax.numpy as jnp
from jax import lax
from jax.experimental import pallas as pl
from jax.experimental.pallas import tpu as pltpu

_SUBLANE = 8     # f32 sublane tile
_LANE = 128      # lane tile


def _round_up(n, m):
    return (n + m - 1) // m * m


class LayerParams(NamedTuple):
    w_t: jax.Array   # (Cout_pad, KH*KW*Cin_pad) im2col-flattened weight
    b: jax.Array     # (Cout_pad, 1)
    kh: int
    kw: int
    stride: int
    cout: int        # true (un-padded) output channels


def prepare_params(params):
    """One-time parameter prep, hoisted out of the forward hot path.

    params: list of (weight OIHW, bias (Cout,), stride) as in nn.Conv2d.
    Pads channels to the f32 sublane tile and flattens each weight to
    (Cout_pad, KH*KW*Cin_pad), row-major over (i, j, c) to match the kernel's
    tap order.
    """
    prepped = []
    for w_oihw, bias, stride in params:
        cout, cin, kh, kw = w_oihw.shape
        cin_p = _round_up(cin, _SUBLANE)
        cout_p = _round_up(cout, _SUBLANE)
        w_p = jnp.pad(w_oihw, ((0, cout_p - cout), (0, cin_p - cin),
                               (0, 0), (0, 0)))
        # (O,C,KH,KW) -> (O,KH,KW,C) -> (O, KH*KW*C); column = (i*KW+j)*C + c.
        w_t = jnp.transpose(w_p, (0, 2, 3, 1)).reshape(cout_p, kh * kw * cin_p)
        b_p = jnp.pad(bias, (0, cout_p - cout)).reshape(cout_p, 1)
        prepped.append(LayerParams(w_t=w_t, b=b_p, kh=kh, kw=kw,
                                   stride=int(stride), cout=int(cout)))
    return prepped


# ---------------------------------------------------------------------------
# Generation-aware knobs (perf only; correctness never depends on these).
# ---------------------------------------------------------------------------

def _device_kind():
    try:
        return jax.devices()[0].device_kind.lower().replace(" ", "")
    except Exception:
        return ""


def _is_v7(kind):
    return ("v7" in kind) or ("tpu7" in kind)


def _is_v5e(kind):
    return ("v5lite" in kind) or ("v5e" in kind)


def _vmem_limit_bytes(kind):
    """~3/4 of physical VMEM: ~96 MiB on v5e/v6e (128 MiB), ~48 MiB on v7x (64 MiB)."""
    cap = None
    try:
        cap = int(getattr(pltpu.get_tpu_info(), "vmem_capacity_bytes", 0)) or None
    except Exception:
        cap = None
    if cap is None:
        cap = (64 if _is_v7(kind) else 128) * 1024 * 1024
    return int(min(cap * 3 // 4, 100 * 1024 * 1024))


# ---------------------------------------------------------------------------
# Fused kernel
# ---------------------------------------------------------------------------

def _make_fused_kernel(layer_cfg, *, row_pitch, neg_slope, bt, hw, m_in,
                       act_dtype):
    """layer_cfg: tuple of (kh, kw, cin_pad, m_out) static python ints."""
    n_layers = len(layer_cfg)
    cin_p0 = layer_cfg[0][2]

    def kernel(*refs):
        x_ref = refs[0]                         # (bt, Cin_pad, H*W)
        wb = refs[1:1 + 2 * n_layers]           # alternating weight / bias refs
        o_ref = refs[1 + 2 * n_layers]          # (1, Cout_pad, m_final)
        patches_ref = refs[2 + 2 * n_layers]    # VMEM scratch (K_max, m_max)

        # Pack Bt images along lanes (pitch = H*W) and append a zero "tap room"
        # tail so every layer's lane length can be a multiple of 128.
        pieces = [x_ref[i].astype(act_dtype) for i in range(bt)]
        if m_in > bt * hw:
            pieces.append(jnp.zeros((cin_p0, m_in - bt * hw), act_dtype))
        act = pieces[0] if len(pieces) == 1 else jnp.concatenate(pieces, axis=1)

        for li, (kh, kw, cin_p, m_out) in enumerate(layer_cfg):
            w_ref = wb[2 * li]                  # (Cout_pad, KH*KW*Cin_pad)
            b_ref = wb[2 * li + 1]              # (Cout_pad, 1), f32
            k_rows = kh * kw * cin_p
            # im2col into the persistent scratch: tap (i, j) is the same flat
            # activation lane-shifted by i*row_pitch + j.  Destination stores
            # are whole-tile (sublane start multiple of 8, lane length a
            # multiple of 128, lane start 0).
            t = 0
            for i in range(kh):
                for j in range(kw):
                    off = i * row_pitch + j
                    patches_ref[t * cin_p:(t + 1) * cin_p, :m_out] = (
                        act[:, off:off + m_out])
                    t += 1
            # One MXU matmul per layer, f32 accumulate; bias + leaky_relu on
            # the VPU.  (NOTE: for bf16 act, channel pad of 8 is not the bf16
            # sublane tile of 16 -- acceptable, correctness unaffected.)
            y = jnp.dot(w_ref[...], patches_ref[:k_rows, :m_out],
                        preferred_element_type=jnp.float32)
            y = y + b_ref[...]
            y = jnp.where(y > 0, y, neg_slope * y)
            act = y.astype(act_dtype)

        o_ref[0] = act.astype(o_ref.dtype)      # lane-dense, unmasked store

    return kernel


# ---------------------------------------------------------------------------
# Forward wrapper
# ---------------------------------------------------------------------------

def convolutional_body_forward(x_nchw, prepped, *, neg_slope=0.01):
    """Forward pass matching ConvolutionalBody (stride=1, padding=0, no pool)."""
    if not prepped:                              # hidden_units == (): identity
        return x_nchw

    b, c_in, h, w = x_nchw.shape
    hw = h * w
    cin_p0 = prepped[0].w_t.shape[1] // (prepped[0].kh * prepped[0].kw)

    # Static per-layer geometry chain.
    geom = []                                    # (kh, kw, cin_pad, cout_pad)
    cur_cp, cur_h, cur_w = cin_p0, h, w
    for p in prepped:
        if p.stride != 1:
            # TODO(synk): stride > 1 should be expressed on the layout side.
            raise NotImplementedError("stride > 1 not implemented")
        assert p.w_t.shape[1] == p.kh * p.kw * cur_cp, "channel chain mismatch"
        geom.append((p.kh, p.kw, cur_cp, p.w_t.shape[0]))
        cur_cp = p.w_t.shape[0]
        cur_h -= p.kh - 1
        cur_w -= p.kw - 1
    ho_f, wo_f = cur_h, cur_w
    assert ho_f > 0 and wo_f > 0, "image smaller than receptive field"
    cout_p_f = cur_cp
    cout_f = prepped[-1].cout

    kind = _device_kind()
    vmem_limit = _vmem_limit_bytes(kind)
    num_tc = 2 if _is_v7(kind) else 1
    # bf16 inter-layer activations only when the input is bf16 on v6e/v7x;
    # v5e has no bf16 VPU/EUP path, keep f32 there.  Output dtype == input.
    if x_nchw.dtype == jnp.bfloat16 and not _is_v5e(kind):
        act_dtype = jnp.bfloat16
    else:
        act_dtype = jnp.float32

    k_max = max(kh * kw * cp_in for kh, kw, cp_in, _ in geom)

    def plan(bt):
        """Backward-chained lane lengths (multiples of 128) per layer + input."""
        need_f = (bt - 1) * hw + (ho_f - 1) * w + wo_f
        m_outs = [0] * len(geom)
        m_next = _round_up(need_f, _LANE)
        for li in range(len(geom) - 1, -1, -1):
            m_outs[li] = m_next
            kh, kw = geom[li][0], geom[li][1]
            m_next = _round_up(m_next + (kh - 1) * w + (kw - 1), _LANE)
        return m_next, m_outs                    # (input length, per-layer)

    x_isz = jnp.dtype(x_nchw.dtype).itemsize
    act_isz = jnp.dtype(act_dtype).itemsize
    w_bytes = sum(p.w_t.size * act_isz + p.b.size * 4 for p in prepped)

    def vmem_est(bt):
        m_in, m_outs = plan(bt)
        est = 2 * bt * cin_p0 * hw * x_isz                 # input block (x2 buf)
        est += 2 * cout_p_f * m_outs[-1] * x_isz           # output block (x2 buf)
        est += k_max * max(m_outs) * act_isz               # patches scratch
        est += cin_p0 * m_in * act_isz                     # packed input value
        for (_, _, _, cp_out), m in zip(geom, m_outs):     # f32 accum + act
            est += cp_out * m * (4 + act_isz)
        return est + w_bytes

    # Batch packing: amortize per-grid-step overhead and grow the MXU lane dim,
    # while keeping >= num_tc grid steps so v7x's two TensorCores both work.
    bt = max(1, b // max(1, num_tc))
    while bt > 1 and (b % bt != 0 or vmem_est(bt) > vmem_limit // 2):
        bt -= 1
    n_steps = b // bt
    m_in, m_outs = plan(bt)
    m_f = m_outs[-1]
    m_scratch = max(m_outs)

    # XLA-side prep: NCHW -> (B, Cin_pad, H*W); pure reshape + cheap zero pad.
    x_flat = x_nchw.reshape(b, c_in, hw)
    if cin_p0 != c_in:
        x_flat = jnp.pad(x_flat, ((0, 0), (0, cin_p0 - c_in), (0, 0)))

    args = [x_flat]
    for p in prepped:
        w_t = p.w_t if p.w_t.dtype == act_dtype else p.w_t.astype(act_dtype)
        b_p = p.b if p.b.dtype == jnp.float32 else p.b.astype(jnp.float32)
        args.extend([w_t, b_p])

    layer_cfg = tuple((kh, kw, cp_in, m)
                      for (kh, kw, cp_in, _), m in zip(geom, m_outs))
    kernel = _make_fused_kernel(layer_cfg, row_pitch=w, neg_slope=neg_slope,
                                bt=bt, hw=hw, m_in=m_in, act_dtype=act_dtype)

    def _call(single_buffer_weights):
        in_specs = [pl.BlockSpec((bt, cin_p0, hw), lambda g: (g, 0, 0))]
        for p in prepped:
            if single_buffer_weights:
                # Constant block index across the grid -> a single buffer is
                # enough; halves weight/bias VMEM.
                wspec = pl.BlockSpec(p.w_t.shape, lambda g: (0, 0),
                                     pipeline_mode=pl.Buffered(1))
                bspec = pl.BlockSpec(p.b.shape, lambda g: (0, 0),
                                     pipeline_mode=pl.Buffered(1))
            else:
                wspec = pl.BlockSpec(p.w_t.shape, lambda g: (0, 0))
                bspec = pl.BlockSpec(p.b.shape, lambda g: (0, 0))
            in_specs.extend([wspec, bspec])
        return pl.pallas_call(
            kernel,
            out_shape=jax.ShapeDtypeStruct((n_steps, cout_p_f, m_f),
                                           x_nchw.dtype),
            grid=(n_steps,),
            in_specs=in_specs,
            out_specs=pl.BlockSpec((1, cout_p_f, m_f), lambda g: (g, 0, 0)),
            scratch_shapes=[pltpu.VMEM((k_max, m_scratch), act_dtype)],
            compiler_params=pltpu.CompilerParams(
                dimension_semantics=("parallel",),
                vmem_limit_bytes=vmem_limit),
        )(*args)

    try:
        out_flat = _call(True)
    except Exception:
        # TODO(synk): pipeline_mode=pl.Buffered(1) not supported on this jax
        # version; fall back to default double-buffered weight blocks.
        out_flat = _call(False)

    # Un-flatten: for grid step g, local image i, channel c, pixel (y, x) the
    # kernel wrote flat lane index i*H*W + y*W + x.  Pad/truncate the lane dim
    # to bt*H*W, fold back to (h, w), split the packed batch, then drop the
    # wrap-around columns/rows and channel padding.  All cheap XLA ops; no
    # in-kernel transposes (output is already channel-major).
    if m_f < bt * hw:
        out_full = jnp.pad(out_flat, ((0, 0), (0, 0), (0, bt * hw - m_f)))
    else:
        out_full = out_flat[:, :, :bt * hw]
    out_full = out_full.reshape(n_steps, cout_p_f, bt, h, w)
    out_full = jnp.transpose(out_full, (0, 2, 1, 3, 4)).reshape(
        b, cout_p_f, h, w)
    return out_full[:, :cout_f, :ho_f, :wo_f]


# ---------------------------------------------------------------------------
# Pure-JAX reference + synthetic params
# ---------------------------------------------------------------------------

def _reference_forward(x_nchw, params):
    """Mirrors PyTorch Conv2d + F.leaky_relu semantics."""
    x = x_nchw
    for w_oihw, bias, stride in params:
        y = lax.conv_general_dilated(
            x, w_oihw, window_strides=(stride, stride), padding="VALID",
            dimension_numbers=("NCHW", "OIHW", "NCHW"))
        y = y + bias.reshape(1, -1, 1, 1)
        x = jnp.where(y > 0, y, 0.01 * y)
    return x


def make_params(key, state_dim, hidden_units, kernels, strides):
    """Deterministic synthetic Conv2d parameters (shapes match nn.Conv2d)."""
    params = []
    dims = (state_dim,) + tuple(hidden_units)
    for dim_in, dim_out, k, s in zip(dims[:-1], dims[1:], kernels, strides):
        key, kw_key, kb_key = jax.random.split(key, 3)
        fan_in = dim_in * k * k
        scale = 1.0 / jnp.sqrt(jnp.float32(fan_in))
        w = jax.random.uniform(kw_key, (dim_out, dim_in, k, k),
                               jnp.float32, -scale, scale)          # OIHW
        b = jax.random.uniform(kb_key, (dim_out,), jnp.float32, -scale, scale)
        params.append((w, b, s))
    return params


if __name__ == "__main__":
    # Small shapes consistent with the module: state_dim = input channels,
    # hidden_units = per-layer output channels, kernel 5, stride 1, padding 0.
    # TODO(synk): the module's literal default hidden_units=((64,64),(64,64))
    # (tuple-of-tuples) would crash nn.Conv2d; we use per-layer int channels.
    batch, state_dim, spatial = 2, 4, 16
    hidden_units = (8, 8)
    kernels = (5, 5)
    strides = (1, 1)

    key = jax.random.PRNGKey(0)
    key, xk = jax.random.split(key)
    x = jax.random.normal(xk, (batch, state_dim, spatial, spatial), jnp.float32)

    params = make_params(key, state_dim, hidden_units, kernels, strides)
    prepped = prepare_params(params)   # one-time prep, hoisted out of forward

    out = jax.block_until_ready(convolutional_body_forward(x, prepped))
    ref = jax.block_until_ready(_reference_forward(x, params))

    assert out.shape == (batch, hidden_units[-1], spatial - 8, spatial - 8), out.shape
    assert out.dtype == x.dtype, out.dtype
    assert jnp.allclose(out, ref, atol=1e-4, rtol=1e-4), \
        float(jnp.max(jnp.abs(out - ref)))

    print("KERNEL_OK")
</pallas_src>

<mosaic_0001>
module attributes {stable_mosaic.version = 11 : i64} {
  func.func @kernel(%arg0: i32, %arg1: memref<2x8x256xf32, #tpu.memory_space<vmem>>, %arg2: memref<8x200xf32, #tpu.memory_space<vmem>>, %arg3: memref<8x1xf32, #tpu.memory_space<vmem>>, %arg4: memref<8x200xf32, #tpu.memory_space<vmem>>, %arg5: memref<8x1xf32, #tpu.memory_space<vmem>>, %arg6: memref<1x8x384xf32, #tpu.memory_space<vmem>>, %arg7: memref<200x512xf32, #tpu.memory_space<vmem>>) attributes {dimension_semantics = [#tpu.dimension_semantics<parallel>], iteration_bounds = array<i64: 1>, scalar_prefetch = 0 : i64, scratch_operands = 1 : i64, tpu.core_type = #tpu.core_type<tc>, window_params = [{transform_indices = @transform_0, window_bounds = array<i64: 2, 8, 256>}, {pipeline_mode = #tpu.pipeline_mode<synchronous>, transform_indices = @transform_1, window_bounds = array<i64: 8, 200>}, {pipeline_mode = #tpu.pipeline_mode<synchronous>, transform_indices = @transform_2, window_bounds = array<i64: 8, 1>}, {pipeline_mode = #tpu.pipeline_mode<synchronous>, transform_indices = @transform_3, window_bounds = array<i64: 8, 200>}, {pipeline_mode = #tpu.pipeline_mode<synchronous>, transform_indices = @transform_4, window_bounds = array<i64: 8, 1>}, {transform_indices = @transform_5, window_bounds = array<i64: 1, 8, 384>}]} {
    %c0 = arith.constant 0 : index
    %c0_0 = arith.constant 0 : index
    %c0_1 = arith.constant 0 : index
    %0 = vector.load %arg1[%c0, %c0_0, %c0_1] : memref<2x8x256xf32, #tpu.memory_space<vmem>>, vector<1x8x256xf32>
    %1 = vector.shape_cast %0 : vector<1x8x256xf32> to vector<8x256xf32>
    %c1 = arith.constant 1 : index
    %c0_2 = arith.constant 0 : index
    %c0_3 = arith.constant 0 : index
    %2 = vector.load %arg1[%c1, %c0_2, %c0_3] : memref<2x8x256xf32, #tpu.memory_space<vmem>>, vector<1x8x256xf32>
    %3 = vector.shape_cast %2 : vector<1x8x256xf32> to vector<8x256xf32>
    %cst = arith.constant 0.000000e+00 : f32
    %4 = vector.broadcast %cst : f32 to vector<8x128xf32>
    %5 = tpu.concatenate %1, %3, %4 in 1 : vector<8x256xf32>, vector<8x256xf32>, vector<8x128xf32> -> vector<8x640xf32>
    %6 = vector.extract_strided_slice %5 {offsets = [0, 0], sizes = [8, 512], strides = [1, 1]} : vector<8x640xf32> to vector<8x512xf32>
    %c0_4 = arith.constant 0 : index
    %c0_5 = arith.constant 0 : index
    %7 = vector.load %arg7[%c0_4, %c0_5] : memref<200x512xf32, #tpu.memory_space<vmem>>, vector<8x512xf32>
    tpu.vector_store %arg7[%c0_4, %c0_5], %6 {strides = array<i32>} : memref<200x512xf32, #tpu.memory_space<vmem>>, vector<8x512xf32>,
    %8 = vector.extract_strided_slice %5 {offsets = [0, 1], sizes = [8, 512], strides = [1, 1]} : vector<8x640xf32> to vector<8x512xf32>
    %c8 = arith.constant 8 : index
    %c0_6 = arith.constant 0 : index
    %9 = vector.load %arg7[%c8, %c0_6] : memref<200x512xf32, #tpu.memory_space<vmem>>, vector<8x512xf32>
    tpu.vector_store %arg7[%c8, %c0_6], %8 {strides = array<i32>} : memref<200x512xf32, #tpu.memory_space<vmem>>, vector<8x512xf32>,
    %10 = vector.extract_strided_slice %5 {offsets = [0, 2], sizes = [8, 512], strides = [1, 1]} : vector<8x640xf32> to vector<8x512xf32>
    %c16 = arith.constant 16 : index
    %c0_7 = arith.constant 0 : index
    %11 = vector.load %arg7[%c16, %c0_7] : memref<200x512xf32, #tpu.memory_space<vmem>>, vector<8x512xf32>
    tpu.vector_store %arg7[%c16, %c0_7], %10 {strides = array<i32>} : memref<200x512xf32, #tpu.memory_space<vmem>>, vector<8x512xf32>,
    %12 = vector.extract_strided_slice %5 {offsets = [0, 3], sizes = [8, 512], strides = [1, 1]} : vector<8x640xf32> to vector<8x512xf32>
    %c24 = arith.constant 24 : index
    %c0_8 = arith.constant 0 : index
    %13 = vector.load %arg7[%c24, %c0_8] : memref<200x512xf32, #tpu.memory_space<vmem>>, vector<8x512xf32>
    tpu.vector_store %arg7[%c24, %c0_8], %12 {strides = array<i32>} : memref<200x512xf32, #tpu.memory_space<vmem>>, vector<8x512xf32>,
    %14 = vector.extract_strided_slice %5 {offsets = [0, 4], sizes = [8, 512], strides = [1, 1]} : vector<8x640xf32> to vector<8x512xf32>
    %c32 = arith.constant 32 : index
    %c0_9 = arith.constant 0 : index
    %15 = vector.load %arg7[%c32, %c0_9] : memref<200x512xf32, #tpu.memory_space<vmem>>, vector<8x512xf32>
    tpu.vector_store %arg7[%c32, %c0_9], %14 {strides = array<i32>} : memref<200x512xf32, #tpu.memory_space<vmem>>, vector<8x512xf32>,
    %16 = vector.extract_strided_slice %5 {offsets = [0, 16], sizes = [8, 512], strides = [1, 1]} : vector<8x640xf32> to vector<8x512xf32>
    %c40 = arith.constant 40 : index
    %c0_10 = arith.constant 0 : index
    %17 = vector.load %arg7[%c40, %c0_10] : memref<200x512xf32, #tpu.memory_space<vmem>>, vector<8x512xf32>
    tpu.vector_store %arg7[%c40, %c0_10], %16 {strides = array<i32>} : memref<200x512xf32, #tpu.memory_space<vmem>>, vector<8x512xf32>,
    %18 = vector.extract_strided_slice %5 {offsets = [0, 17], sizes = [8, 512], strides = [1, 1]} : vector<8x640xf32> to vector<8x512xf32>
    %c48 = arith.constant 48 : index
    %c0_11 = arith.constant 0 : index
    %19 = vector.load %arg7[%c48, %c0_11] : memref<200x512xf32, #tpu.memory_space<vmem>>, vector<8x512xf32>
    tpu.vector_store %arg7[%c48, %c0_11], %18 {strides = array<i32>} : memref<200x512xf32, #tpu.memory_space<vmem>>, vector<8x512xf32>,
    %20 = vector.extract_strided_slice %5 {offsets = [0, 18], sizes = [8, 512], strides = [1, 1]} : vector<8x640xf32> to vector<8x512xf32>
    %c56 = arith.constant 56 : index
    %c0_12 = arith.constant 0 : index
    %21 = vector.load %arg7[%c56, %c0_12] : memref<200x512xf32, #tpu.memory_space<vmem>>, vector<8x512xf32>
    tpu.vector_store %arg7[%c56, %c0_12], %20 {strides = array<i32>} : memref<200x512xf32, #tpu.memory_space<vmem>>, vector<8x512xf32>,
    %22 = vector.extract_strided_slice %5 {offsets = [0, 19], sizes = [8, 512], strides = [1, 1]} : vector<8x640xf32> to vector<8x512xf32>
    %c64 = arith.constant 64 : index
    %c0_13 = arith.constant 0 : index
    %23 = vector.load %arg7[%c64, %c0_13] : memref<200x512xf32, #tpu.memory_space<vmem>>, vector<8x512xf32>
    tpu.vector_store %arg7[%c64, %c0_13], %22 {strides = array<i32>} : memref<200x512xf32, #tpu.memory_space<vmem>>, vector<8x512xf32>,
    %24 = vector.extract_strided_slice %5 {offsets = [0, 20], sizes = [8, 512], strides = [1, 1]} : vector<8x640xf32> to vector<8x512xf32>
    %c72 = arith.constant 72 : index
    %c0_14 = arith.constant 0 : index
    %25 = vector.load %arg7[%c72, %c0_14] : memref<200x512xf32, #tpu.memory_space<vmem>>, vector<8x512xf32>
    tpu.vector_store %arg7[%c72, %c0_14], %24 {strides = array<i32>} : memref<200x512xf32, #tpu.memory_space<vmem>>, vector<8x512xf32>,
    %26 = vector.extract_strided_slice %5 {offsets = [0, 32], sizes = [8, 512], strides = [1, 1]} : vector<8x640xf32> to vector<8x512xf32>
    %c80 = arith.constant 80 : index
    %c0_15 = arith.constant 0 : index
    %27 = vector.load %arg7[%c80, %c0_15] : memref<200x512xf32, #tpu.memory_space<vmem>>, vector<8x512xf32>
    tpu.vector_store %arg7[%c80, %c0_15], %26 {strides = array<i32>} : memref<200x512xf32, #tpu.memory_space<vmem>>, vector<8x512xf32>,
    %28 = vector.extract_strided_slice %5 {offsets = [0, 33], sizes = [8, 512], strides = [1, 1]} : vector<8x640xf32> to vector<8x512xf32>
    %c88 = arith.constant 88 : index
    %c0_16 = arith.constant 0 : index
    %29 = vector.load %arg7[%c88, %c0_16] : memref<200x512xf32, #tpu.memory_space<vmem>>, vector<8x512xf32>
    tpu.vector_store %arg7[%c88, %c0_16], %28 {strides = array<i32>} : memref<200x512xf32, #tpu.memory_space<vmem>>, vector<8x512xf32>,
    %30 = vector.extract_strided_slice %5 {offsets = [0, 34], sizes = [8, 512], strides = [1, 1]} : vector<8x640xf32> to vector<8x512xf32>
    %c96 = arith.constant 96 : index
    %c0_17 = arith.constant 0 : index
    %31 = vector.load %arg7[%c96, %c0_17] : memref<200x512xf32, #tpu.memory_space<vmem>>, vector<8x512xf32>
    tpu.vector_store %arg7[%c96, %c0_17], %30 {strides = array<i32>} : memref<200x512xf32, #tpu.memory_space<vmem>>, vector<8x512xf32>,
    %32 = vector.extract_strided_slice %5 {offsets = [0, 35], sizes = [8, 512], strides = [1, 1]} : vector<8x640xf32> to vector<8x512xf32>
    %c104 = arith.constant 104 : index
    %c0_18 = arith.constant 0 : index
    %33 = vector.load %arg7[%c104, %c0_18] : memref<200x512xf32, #tpu.memory_space<vmem>>, vector<8x512xf32>
    tpu.vector_store %arg7[%c104, %c0_18], %32 {strides = array<i32>} : memref<200x512xf32, #tpu.memory_space<vmem>>, vector<8x512xf32>,
    %34 = vector.extract_strided_slice %5 {offsets = [0, 36], sizes = [8, 512], strides = [1, 1]} : vector<8x640xf32> to vector<8x512xf32>
    %c112 = arith.constant 112 : index
    %c0_19 = arith.constant 0 : index
    %35 = vector.load %arg7[%c112, %c0_19] : memref<200x512xf32, #tpu.memory_space<vmem>>, vector<8x512xf32>
    tpu.vector_store %arg7[%c112, %c0_19], %34 {strides = array<i32>} : memref<200x512xf32, #tpu.memory_space<vmem>>, vector<8x512xf32>,
    %36 = vector.extract_strided_slice %5 {offsets = [0, 48], sizes = [8, 512], strides = [1, 1]} : vector<8x640xf32> to vector<8x512xf32>
    %c120 = arith.constant 120 : index
    %c0_20 = arith.constant 0 : index
    %37 = vector.load %arg7[%c120, %c0_20] : memref<200x512xf32, #tpu.memory_space<vmem>>, vector<8x512xf32>
    tpu.vector_store %arg7[%c120, %c0_20], %36 {strides = array<i32>} : memref<200x512xf32, #tpu.memory_space<vmem>>, vector<8x512xf32>,
    %38 = vector.extract_strided_slice %5 {offsets = [0, 49], sizes = [8, 512], strides = [1, 1]} : vector<8x640xf32> to vector<8x512xf32>
    %c128 = arith.constant 128 : index
    %c0_21 = arith.constant 0 : index
    %39 = vector.load %arg7[%c128, %c0_21] : memref<200x512xf32, #tpu.memory_space<vmem>>, vector<8x512xf32>
    tpu.vector_store %arg7[%c128, %c0_21], %38 {strides = array<i32>} : memref<200x512xf32, #tpu.memory_space<vmem>>, vector<8x512xf32>,
    %40 = vector.extract_strided_slice %5 {offsets = [0, 50], sizes = [8, 512], strides = [1, 1]} : vector<8x640xf32> to vector<8x512xf32>
    %c136 = arith.constant 136 : index
    %c0_22 = arith.constant 0 : index
    %41 = vector.load %arg7[%c136, %c0_22] : memref<200x512xf32, #tpu.memory_space<vmem>>, vector<8x512xf32>
    tpu.vector_store %arg7[%c136, %c0_22], %40 {strides = array<i32>} : memref<200x512xf32, #tpu.memory_space<vmem>>, vector<8x512xf32>,
    %42 = vector.extract_strided_slice %5 {offsets = [0, 51], sizes = [8, 512], strides = [1, 1]} : vector<8x640xf32> to vector<8x512xf32>
    %c144 = arith.constant 144 : index
    %c0_23 = arith.constant 0 : index
    %43 = vector.load %arg7[%c144, %c0_23] : memref<200x512xf32, #tpu.memory_space<vmem>>, vector<8x512xf32>
    tpu.vector_store %arg7[%c144, %c0_23], %42 {strides = array<i32>} : memref<200x512xf32, #tpu.memory_space<vmem>>, vector<8x512xf32>,
    %44 = vector.extract_strided_slice %5 {offsets = [0, 52], sizes = [8, 512], strides = [1, 1]} : vector<8x640xf32> to vector<8x512xf32>
    %c152 = arith.constant 152 : index
    %c0_24 = arith.constant 0 : index
    %45 = vector.load %arg7[%c152, %c0_24] : memref<200x512xf32, #tpu.memory_space<vmem>>, vector<8x512xf32>
    tpu.vector_store %arg7[%c152, %c0_24], %44 {strides = array<i32>} : memref<200x512xf32, #tpu.memory_space<vmem>>, vector<8x512xf32>,
    %46 = vector.extract_strided_slice %5 {offsets = [0, 64], sizes = [8, 512], strides = [1, 1]} : vector<8x640xf32> to vector<8x512xf32>
    %c160 = arith.constant 160 : index
    %c0_25 = arith.constant 0 : index
    %47 = vector.load %arg7[%c160, %c0_25] : memref<200x512xf32, #tpu.memory_space<vmem>>, vector<8x512xf32>
    tpu.vector_store %arg7[%c160, %c0_25], %46 {strides = array<i32>} : memref<200x512xf32, #tpu.memory_space<vmem>>, vector<8x512xf32>,
    %48 = vector.extract_strided_slice %5 {offsets = [0, 65], sizes = [8, 512], strides = [1, 1]} : vector<8x640xf32> to vector<8x512xf32>
    %c168 = arith.constant 168 : index
    %c0_26 = arith.constant 0 : index
    %49 = vector.load %arg7[%c168, %c0_26] : memref<200x512xf32, #tpu.memory_space<vmem>>, vector<8x512xf32>
    tpu.vector_store %arg7[%c168, %c0_26], %48 {strides = array<i32>} : memref<200x512xf32, #tpu.memory_space<vmem>>, vector<8x512xf32>,
    %50 = vector.extract_strided_slice %5 {offsets = [0, 66], sizes = [8, 512], strides = [1, 1]} : vector<8x640xf32> to vector<8x512xf32>
    %c176 = arith.constant 176 : index
    %c0_27 = arith.constant 0 : index
    %51 = vector.load %arg7[%c176, %c0_27] : memref<200x512xf32, #tpu.memory_space<vmem>>, vector<8x512xf32>
    tpu.vector_store %arg7[%c176, %c0_27], %50 {strides = array<i32>} : memref<200x512xf32, #tpu.memory_space<vmem>>, vector<8x512xf32>,
    %52 = vector.extract_strided_slice %5 {offsets = [0, 67], sizes = [8, 512], strides = [1, 1]} : vector<8x640xf32> to vector<8x512xf32>
    %c184 = arith.constant 184 : index
    %c0_28 = arith.constant 0 : index
    %53 = vector.load %arg7[%c184, %c0_28] : memref<200x512xf32, #tpu.memory_space<vmem>>, vector<8x512xf32>
    tpu.vector_store %arg7[%c184, %c0_28], %52 {strides = array<i32>} : memref<200x512xf32, #tpu.memory_space<vmem>>, vector<8x512xf32>,
    %54 = vector.extract_strided_slice %5 {offsets = [0, 68], sizes = [8, 512], strides = [1, 1]} : vector<8x640xf32> to vector<8x512xf32>
    %c192 = arith.constant 192 : index
    %c0_29 = arith.constant 0 : index
    %55 = vector.load %arg7[%c192, %c0_29] : memref<200x512xf32, #tpu.memory_space<vmem>>, vector<8x512xf32>
    tpu.vector_store %arg7[%c192, %c0_29], %54 {strides = array<i32>} : memref<200x512xf32, #tpu.memory_space<vmem>>, vector<8x512xf32>,
    %c0_30 = arith.constant 0 : index
    %c0_31 = arith.constant 0 : index
    %56 = vector.load %arg2[%c0_30, %c0_31] : memref<8x200xf32, #tpu.memory_space<vmem>>, vector<8x200xf32>
    %c0_32 = arith.constant 0 : index
    %c0_33 = arith.constant 0 : index
    %57 = vector.load %arg7[%c0_32, %c0_33] : memref<200x512xf32, #tpu.memory_space<vmem>>, vector<200x512xf32>
    %cst_34 = arith.constant dense<0.000000e+00> : vector<8x512xf32>
    %58 = tpu.matmul %56, %57, %cst_34 {dimension_numbers = #tpu.dot_dimension_numbers<[1], [0], [0], [1], [0, 0, 1, 1], [], []>} : vector<8x200xf32>, vector<200x512xf32>, vector<8x512xf32> -> vector<8x512xf32>
    %c0_35 = arith.constant 0 : index
    %c0_36 = arith.constant 0 : index
    %59 = vector.load %arg3[%c0_35, %c0_36] : memref<8x1xf32, #tpu.memory_space<vmem>>, vector<8x1xf32>
    %60 = vector.broadcast %59 : vector<8x1xf32> to vector<8x512xf32>
    %61 = arith.addf %58, %60 : vector<8x512xf32>
    %cst_37 = arith.constant 0.000000e+00 : f32
    %62 = vector.broadcast %cst_37 : f32 to vector<8x512xf32>
    %63 = arith.cmpf ogt, %61, %62 : vector<8x512xf32>
    %cst_38 = arith.constant 0.00999999977 : f32
    %64 = vector.broadcast %cst_38 : f32 to vector<8x512xf32>
    %65 = arith.mulf %64, %61 : vector<8x512xf32>
    %66 = arith.select %63, %61, %65 : vector<8x512xi1>, vector<8x512xf32>
    %67 = vector.extract_strided_slice %66 {offsets = [0, 0], sizes = [8, 384], strides = [1, 1]} : vector<8x512xf32> to vector<8x384xf32>
    %c0_39 = arith.constant 0 : index
    %c0_40 = arith.constant 0 : index
    %68 = vector.load %arg7[%c0_39, %c0_40] : memref<200x512xf32, #tpu.memory_space<vmem>>, vector<8x384xf32>
    tpu.vector_store %arg7[%c0_39, %c0_40], %67 {strides = array<i32>} : memref<200x512xf32, #tpu.memory_space<vmem>>, vector<8x384xf32>,
    %69 = vector.extract_strided_slice %66 {offsets = [0, 1], sizes = [8, 384], strides = [1, 1]} : vector<8x512xf32> to vector<8x384xf32>
    %c8_41 = arith.constant 8 : index
    %c0_42 = arith.constant 0 : index
    %70 = vector.load %arg7[%c8_41, %c0_42] : memref<200x512xf32, #tpu.memory_space<vmem>>, vector<8x384xf32>
    tpu.vector_store %arg7[%c8_41, %c0_42], %69 {strides = array<i32>} : memref<200x512xf32, #tpu.memory_space<vmem>>, vector<8x384xf32>,
    %71 = vector.extract_strided_slice %66 {offsets = [0, 2], sizes = [8, 384], strides = [1, 1]} : vector<8x512xf32> to vector<8x384xf32>
    %c16_43 = arith.constant 16 : index
    %c0_44 = arith.constant 0 : index
    %72 = vector.load %arg7[%c16_43, %c0_44] : memref<200x512xf32, #tpu.memory_space<vmem>>, vector<8x384xf32>
    tpu.vector_store %arg7[%c16_43, %c0_44], %71 {strides = array<i32>} : memref<200x512xf32, #tpu.memory_space<vmem>>, vector<8x384xf32>,
    %73 = vector.extract_strided_slice %66 {offsets = [0, 3], sizes = [8, 384], strides = [1, 1]} : vector<8x512xf32> to vector<8x384xf32>
    %c24_45 = arith.constant 24 : index
    %c0_46 = arith.constant 0 : index
    %74 = vector.load %arg7[%c24_45, %c0_46] : memref<200x512xf32, #tpu.memory_space<vmem>>, vector<8x384xf32>
    tpu.vector_store %arg7[%c24_45, %c0_46], %73 {strides = array<i32>} : memref<200x512xf32, #tpu.memory_space<vmem>>, vector<8x384xf32>,
    %75 = vector.extract_strided_slice %66 {offsets = [0, 4], sizes = [8, 384], strides = [1, 1]} : vector<8x512xf32> to vector<8x384xf32>
    %c32_47 = arith.constant 32 : index
    %c0_48 = arith.constant 0 : index
    %76 = vector.load %arg7[%c32_47, %c0_48] : memref<200x512xf32, #tpu.memory_space<vmem>>, vector<8x384xf32>
    tpu.vector_store %arg7[%c32_47, %c0_48], %75 {strides = array<i32>} : memref<200x512xf32, #tpu.memory_space<vmem>>, vector<8x384xf32>,
    %77 = vector.extract_strided_slice %66 {offsets = [0, 16], sizes = [8, 384], strides = [1, 1]} : vector<8x512xf32> to vector<8x384xf32>
    %c40_49 = arith.constant 40 : index
    %c0_50 = arith.constant 0 : index
    %78 = vector.load %arg7[%c40_49, %c0_50] : memref<200x512xf32, #tpu.memory_space<vmem>>, vector<8x384xf32>
    tpu.vector_store %arg7[%c40_49, %c0_50], %77 {strides = array<i32>} : memref<200x512xf32, #tpu.memory_space<vmem>>, vector<8x384xf32>,
    %79 = vector.extract_strided_slice %66 {offsets = [0, 17], sizes = [8, 384], strides = [1, 1]} : vector<8x512xf32> to vector<8x384xf32>
    %c48_51 = arith.constant 48 : index
    %c0_52 = arith.constant 0 : index
    %80 = vector.load %arg7[%c48_51, %c0_52] : memref<200x512xf32, #tpu.memory_space<vmem>>, vector<8x384xf32>
    tpu.vector_store %arg7[%c48_51, %c0_52], %79 {strides = array<i32>} : memref<200x512xf32, #tpu.memory_space<vmem>>, vector<8x384xf32>,
    %81 = vector.extract_strided_slice %66 {offsets = [0, 18], sizes = [8, 384], strides = [1, 1]} : vector<8x512xf32> to vector<8x384xf32>
    %c56_53 = arith.constant 56 : index
    %c0_54 = arith.constant 0 : index
    %82 = vector.load %arg7[%c56_53, %c0_54] : memref<200x512xf32, #tpu.memory_space<vmem>>, vector<8x384xf32>
    tpu.vector_store %arg7[%c56_53, %c0_54], %81 {strides = array<i32>} : memref<200x512xf32, #tpu.memory_space<vmem>>, vector<8x384xf32>,
    %83 = vector.extract_strided_slice %66 {offsets = [0, 19], sizes = [8, 384], strides = [1, 1]} : vector<8x512xf32> to vector<8x384xf32>
    %c64_55 = arith.constant 64 : index
    %c0_56 = arith.constant 0 : index
    %84 = vector.load %arg7[%c64_55, %c0_56] : memref<200x512xf32, #tpu.memory_space<vmem>>, vector<8x384xf32>
    tpu.vector_store %arg7[%c64_55, %c0_56], %83 {strides = array<i32>} : memref<200x512xf32, #tpu.memory_space<vmem>>, vector<8x384xf32>,
    %85 = vector.extract_strided_slice %66 {offsets = [0, 20], sizes = [8, 384], strides = [1, 1]} : vector<8x512xf32> to vector<8x384xf32>
    %c72_57 = arith.constant 72 : index
    %c0_58 = arith.constant 0 : index
    %86 = vector.load %arg7[%c72_57, %c0_58] : memref<200x512xf32, #tpu.memory_space<vmem>>, vector<8x384xf32>
    tpu.vector_store %arg7[%c72_57, %c0_58], %85 {strides = array<i32>} : memref<200x512xf32, #tpu.memory_space<vmem>>, vector<8x384xf32>,
    %87 = vector.extract_strided_slice %66 {offsets = [0, 32], sizes = [8, 384], strides = [1, 1]} : vector<8x512xf32> to vector<8x384xf32>
    %c80_59 = arith.constant 80 : index
    %c0_60 = arith.constant 0 : index
    %88 = vector.load %arg7[%c80_59, %c0_60] : memref<200x512xf32, #tpu.memory_space<vmem>>, vector<8x384xf32>
    tpu.vector_store %arg7[%c80_59, %c0_60], %87 {strides = array<i32>} : memref<200x512xf32, #tpu.memory_space<vmem>>, vector<8x384xf32>,
    %89 = vector.extract_strided_slice %66 {offsets = [0, 33], sizes = [8, 384], strides = [1, 1]} : vector<8x512xf32> to vector<8x384xf32>
    %c88_61 = arith.constant 88 : index
    %c0_62 = arith.constant 0 : index
    %90 = vector.load %arg7[%c88_61, %c0_62] : memref<200x512xf32, #tpu.memory_space<vmem>>, vector<8x384xf32>
    tpu.vector_store %arg7[%c88_61, %c0_62], %89 {strides = array<i32>} : memref<200x512xf32, #tpu.memory_space<vmem>>, vector<8x384xf32>,
    %91 = vector.extract_strided_slice %66 {offsets = [0, 34], sizes = [8, 384], strides = [1, 1]} : vector<8x512xf32> to vector<8x384xf32>
    %c96_63 = arith.constant 96 : index
    %c0_64 = arith.constant 0 : index
    %92 = vector.load %arg7[%c96_63, %c0_64] : memref<200x512xf32, #tpu.memory_space<vmem>>, vector<8x384xf32>
    tpu.vector_store %arg7[%c96_63, %c0_64], %91 {strides = array<i32>} : memref<200x512xf32, #tpu.memory_space<vmem>>, vector<8x384xf32>,
    %93 = vector.extract_strided_slice %66 {offsets = [0, 35], sizes = [8, 384], strides = [1, 1]} : vector<8x512xf32> to vector<8x384xf32>
    %c104_65 = arith.constant 104 : index
    %c0_66 = arith.constant 0 : index
    %94 = vector.load %arg7[%c104_65, %c0_66] : memref<200x512xf32, #tpu.memory_space<vmem>>, vector<8x384xf32>
    tpu.vector_store %arg7[%c104_65, %c0_66], %93 {strides = array<i32>} : memref<200x512xf32, #tpu.memory_space<vmem>>, vector<8x384xf32>,
    %95 = vector.extract_strided_slice %66 {offsets = [0, 36], sizes = [8, 384], strides = [1, 1]} : vector<8x512xf32> to vector<8x384xf32>
    %c112_67 = arith.constant 112 : index
    %c0_68 = arith.constant 0 : index
    %96 = vector.load %arg7[%c112_67, %c0_68] : memref<200x512xf32, #tpu.memory_space<vmem>>, vector<8x384xf32>
    tpu.vector_store %arg7[%c112_67, %c0_68], %95 {strides = array<i32>} : memref<200x512xf32, #tpu.memory_space<vmem>>, vector<8x384xf32>,
    %97 = vector.extract_strided_slice %66 {offsets = [0, 48], sizes = [8, 384], strides = [1, 1]} : vector<8x512xf32> to vector<8x384xf32>
    %c120_69 = arith.constant 120 : index
    %c0_70 = arith.constant 0 : index
    %98 = vector.load %arg7[%c120_69, %c0_70] : memref<200x512xf32, #tpu.memory_space<vmem>>, vector<8x384xf32>
    tpu.vector_store %arg7[%c120_69, %c0_70], %97 {strides = array<i32>} : memref<200x512xf32, #tpu.memory_space<vmem>>, vector<8x384xf32>,
    %99 = vector.extract_strided_slice %66 {offsets = [0, 49], sizes = [8, 384], strides = [1, 1]} : vector<8x512xf32> to vector<8x384xf32>
    %c128_71 = arith.constant 128 : index
    %c0_72 = arith.constant 0 : index
    %100 = vector.load %arg7[%c128_71, %c0_72] : memref<200x512xf32, #tpu.memory_space<vmem>>, vector<8x384xf32>
    tpu.vector_store %arg7[%c128_71, %c0_72], %99 {strides = array<i32>} : memref<200x512xf32, #tpu.memory_space<vmem>>, vector<8x384xf32>,
    %101 = vector.extract_strided_slice %66 {offsets = [0, 50], sizes = [8, 384], strides = [1, 1]} : vector<8x512xf32> to vector<8x384xf32>
    %c136_73 = arith.constant 136 : index
    %c0_74 = arith.constant 0 : index
    %102 = vector.load %arg7[%c136_73, %c0_74] : memref<200x512xf32, #tpu.memory_space<vmem>>, vector<8x384xf32>
    tpu.vector_store %arg7[%c136_73, %c0_74], %101 {strides = array<i32>} : memref<200x512xf32, #tpu.memory_space<vmem>>, vector<8x384xf32>,
    %103 = vector.extract_strided_slice %66 {offsets = [0, 51], sizes = [8, 384], strides = [1, 1]} : vector<8x512xf32> to vector<8x384xf32>
    %c144_75 = arith.constant 144 : index
    %c0_76 = arith.constant 0 : index
    %104 = vector.load %arg7[%c144_75, %c0_76] : memref<200x512xf32, #tpu.memory_space<vmem>>, vector<8x384xf32>
    tpu.vector_store %arg7[%c144_75, %c0_76], %103 {strides = array<i32>} : memref<200x512xf32, #tpu.memory_space<vmem>>, vector<8x384xf32>,
    %105 = vector.extract_strided_slice %66 {offsets = [0, 52], sizes = [8, 384], strides = [1, 1]} : vector<8x512xf32> to vector<8x384xf32>
    %c152_77 = arith.constant 152 : index
    %c0_78 = arith.constant 0 : index
    %106 = vector.load %arg7[%c152_77, %c0_78] : memref<200x512xf32, #tpu.memory_space<vmem>>, vector<8x384xf32>
    tpu.vector_store %arg7[%c152_77, %c0_78], %105 {strides = array<i32>} : memref<200x512xf32, #tpu.memory_space<vmem>>, vector<8x384xf32>,
    %107 = vector.extract_strided_slice %66 {offsets = [0, 64], sizes = [8, 384], strides = [1, 1]} : vector<8x512xf32> to vector<8x384xf32>
    %c160_79 = arith.constant 160 : index
    %c0_80 = arith.constant 0 : index
    %108 = vector.load %arg7[%c160_79, %c0_80] : memref<200x512xf32, #tpu.memory_space<vmem>>, vector<8x384xf32>
    tpu.vector_store %arg7[%c160_79, %c0_80], %107 {strides = array<i32>} : memref<200x512xf32, #tpu.memory_space<vmem>>, vector<8x384xf32>,
    %109 = vector.extract_strided_slice %66 {offsets = [0, 65], sizes = [8, 384], strides = [1, 1]} : vector<8x512xf32> to vector<8x384xf32>
    %c168_81 = arith.constant 168 : index
    %c0_82 = arith.constant 0 : index
    %110 = vector.load %arg7[%c168_81, %c0_82] : memref<200x512xf32, #tpu.memory_space<vmem>>, vector<8x384xf32>
    tpu.vector_store %arg7[%c168_81, %c0_82], %109 {strides = array<i32>} : memref<200x512xf32, #tpu.memory_space<vmem>>, vector<8x384xf32>,
    %111 = vector.extract_strided_slice %66 {offsets = [0, 66], sizes = [8, 384], strides = [1, 1]} : vector<8x512xf32> to vector<8x384xf32>
    %c176_83 = arith.constant 176 : index
    %c0_84 = arith.constant 0 : index
    %112 = vector.load %arg7[%c176_83, %c0_84] : memref<200x512xf32, #tpu.memory_space<vmem>>, vector<8x384xf32>
    tpu.vector_store %arg7[%c176_83, %c0_84], %111 {strides = array<i32>} : memref<200x512xf32, #tpu.memory_space<vmem>>, vector<8x384xf32>,
    %113 = vector.extract_strided_slice %66 {offsets = [0, 67], sizes = [8, 384], strides = [1, 1]} : vector<8x512xf32> to vector<8x384xf32>
    %c184_85 = arith.constant 184 : index
    %c0_86 = arith.constant 0 : index
    %114 = vector.load %arg7[%c184_85, %c0_86] : memref<200x512xf32, #tpu.memory_space<vmem>>, vector<8x384xf32>
    tpu.vector_store %arg7[%c184_85, %c0_86], %113 {strides = array<i32>} : memref<200x512xf32, #tpu.memory_space<vmem>>, vector<8x384xf32>,
    %115 = vector.extract_strided_slice %66 {offsets = [0, 68], sizes = [8, 384], strides = [1, 1]} : vector<8x512xf32> to vector<8x384xf32>
    %c192_87 = arith.constant 192 : index
    %c0_88 = arith.constant 0 : index
    %116 = vector.load %arg7[%c192_87, %c0_88] : memref<200x512xf32, #tpu.memory_space<vmem>>, vector<8x384xf32>
    tpu.vector_store %arg7[%c192_87, %c0_88], %115 {strides = array<i32>} : memref<200x512xf32, #tpu.memory_space<vmem>>, vector<8x384xf32>,
    %c0_89 = arith.constant 0 : index
    %c0_90 = arith.constant 0 : index
    %117 = vector.load %arg4[%c0_89, %c0_90] : memref<8x200xf32, #tpu.memory_space<vmem>>, vector<8x200xf32>
    %c0_91 = arith.constant 0 : index
    %c0_92 = arith.constant 0 : index
    %118 = vector.load %arg7[%c0_91, %c0_92] : memref<200x512xf32, #tpu.memory_space<vmem>>, vector<200x384xf32>
    %cst_93 = arith.constant dense<0.000000e+00> : vector<8x384xf32>
    %119 = tpu.matmul %117, %118, %cst_93 {dimension_numbers = #tpu.dot_dimension_numbers<[1], [0], [0], [1], [0, 0, 1, 1], [], []>} : vector<8x200xf32>, vector<200x384xf32>, vector<8x384xf32> -> vector<8x384xf32>
    %c0_94 = arith.constant 0 : index
    %c0_95 = arith.constant 0 : index
    %120 = vector.load %arg5[%c0_94, %c0_95] : memref<8x1xf32, #tpu.memory_space<vmem>>, vector<8x1xf32>
    %121 = vector.broadcast %120 : vector<8x1xf32> to vector<8x384xf32>
    %122 = arith.addf %119, %121 : vector<8x384xf32>
    %cst_96 = arith.constant 0.000000e+00 : f32
    %123 = vector.broadcast %cst_96 : f32 to vector<8x384xf32>
    %124 = arith.cmpf ogt, %122, %123 : vector<8x384xf32>
    %cst_97 = arith.constant 0.00999999977 : f32
    %125 = vector.broadcast %cst_97 : f32 to vector<8x384xf32>
    %126 = arith.mulf %125, %122 : vector<8x384xf32>
    %127 = arith.select %124, %122, %126 : vector<8x384xi1>, vector<8x384xf32>
    %c0_98 = arith.constant 0 : index
    %c0_99 = arith.constant 0 : index
    %c0_100 = arith.constant 0 : index
    %128 = vector.load %arg6[%c0_98, %c0_99, %c0_100] : memref<1x8x384xf32, #tpu.memory_space<vmem>>, vector<1x8x384xf32>
    %129 = vector.shape_cast %128 : vector<1x8x384xf32> to vector<8x384xf32>
    %130 = vector.shape_cast %127 : vector<8x384xf32> to vector<1x8x384xf32>
    tpu.vector_store %arg6[%c0_98, %c0_99, %c0_100], %130 {strides = array<i32>} : memref<1x8x384xf32, #tpu.memory_space<vmem>>, vector<1x8x384xf32>,
    return
  }
  func.func @transform_0(%arg0: i32) -> (i32, i32, i32) {
    %c0_i32 = arith.constant 0 : i32
    %c0_i32_0 = arith.constant 0 : i32
    %c0_i32_1 = arith.constant 0 : i32
    return %arg0, %c0_i32, %c0_i32_0 : i32, i32, i32
  }
  func.func @transform_1(%arg0: i32) -> (i32, i32) {
    %c0_i32 = arith.constant 0 : i32
    %c0_i32_0 = arith.constant 0 : i32
    %c0_i32_1 = arith.constant 0 : i32
    return %c0_i32, %c0_i32_0 : i32, i32
  }
  func.func @transform_2(%arg0: i32) -> (i32, i32) {
    %c0_i32 = arith.constant 0 : i32
    %c0_i32_0 = arith.constant 0 : i32
    %c0_i32_1 = arith.constant 0 : i32
    return %c0_i32, %c0_i32_0 : i32, i32
  }
  func.func @transform_3(%arg0: i32) -> (i32, i32) {
    %c0_i32 = arith.constant 0 : i32
    %c0_i32_0 = arith.constant 0 : i32
    %c0_i32_1 = arith.constant 0 : i32
    return %c0_i32, %c0_i32_0 : i32, i32
  }
  func.func @transform_4(%arg0: i32) -> (i32, i32) {
    %c0_i32 = arith.constant 0 : i32
    %c0_i32_0 = arith.constant 0 : i32
    %c0_i32_1 = arith.constant 0 : i32
    return %c0_i32, %c0_i32_0 : i32, i32
  }
  func.func @transform_5(%arg0: i32) -> (i32, i32, i32) {
    %c0_i32 = arith.constant 0 : i32
    %c0_i32_0 = arith.constant 0 : i32
    %c0_i32_1 = arith.constant 0 : i32
    return %arg0, %c0_i32, %c0_i32_0 : i32, i32, i32
  }
}

module attributes {stable_mosaic.version = 11 : i64} {
  func.func @kernel(%arg0: i32, %arg1: memref<2x8x256xf32, #tpu.memory_space<vmem>>, %arg2: memref<8x200xf32, #tpu.memory_space<vmem>>, %arg3: memref<8x1xf32, #tpu.memory_space<vmem>>, %arg4: memref<8x200xf32, #tpu.memory_space<vmem>>, %arg5: memref<8x1xf32, #tpu.memory_space<vmem>>, %arg6: memref<1x8x384xf32, #tpu.memory_space<vmem>>, %arg7: memref<200x512xf32, #tpu.memory_space<vmem>>) attributes {dimension_semantics = [#tpu.dimension_semantics<parallel>], iteration_bounds = array<i64: 1>, scalar_prefetch = 0 : i64, scratch_operands = 1 : i64, tpu.core_type = #tpu.core_type<tc>, window_params = [{transform_indices = @transform_0, window_bounds = array<i64: 2, 8, 256>}, {pipeline_mode = #tpu.pipeline_mode<synchronous>, transform_indices = @transform_1, window_bounds = array<i64: 8, 200>}, {pipeline_mode = #tpu.pipeline_mode<synchronous>, transform_indices = @transform_2, window_bounds = array<i64: 8, 1>}, {pipeline_mode = #tpu.pipeline_mode<synchronous>, transform_indices = @transform_3, window_bounds = array<i64: 8, 200>}, {pipeline_mode = #tpu.pipeline_mode<synchronous>, transform_indices = @transform_4, window_bounds = array<i64: 8, 1>}, {transform_indices = @transform_5, window_bounds = array<i64: 1, 8, 384>}]} {
    %c0 = arith.constant 0 : index
    %c0_0 = arith.constant 0 : index
    %c0_1 = arith.constant 0 : index
    %0 = vector.load %arg1[%c0, %c0_0, %c0_1] : memref<2x8x256xf32, #tpu.memory_space<vmem>>, vector<1x8x256xf32>
    %1 = vector.shape_cast %0 : vector<1x8x256xf32> to vector<8x256xf32>
    %c1 = arith.constant 1 : index
    %c0_2 = arith.constant 0 : index
    %c0_3 = arith.constant 0 : index
    %2 = vector.load %arg1[%c1, %c0_2, %c0_3] : memref<2x8x256xf32, #tpu.memory_space<vmem>>, vector<1x8x256xf32>
    %3 = vector.shape_cast %2 : vector<1x8x256xf32> to vector<8x256xf32>
    %cst = arith.constant 0.000000e+00 : f32
    %4 = vector.broadcast %cst : f32 to vector<8x128xf32>
    %5 = tpu.concatenate %1, %3, %4 in 1 : vector<8x256xf32>, vector<8x256xf32>, vector<8x128xf32> -> vector<8x640xf32>
    %6 = vector.extract_strided_slice %5 {offsets = [0, 0], sizes = [8, 512], strides = [1, 1]} : vector<8x640xf32> to vector<8x512xf32>
    %c0_4 = arith.constant 0 : index
    %c0_5 = arith.constant 0 : index
    %7 = vector.load %arg7[%c0_4, %c0_5] : memref<200x512xf32, #tpu.memory_space<vmem>>, vector<8x512xf32>
    tpu.vector_store %arg7[%c0_4, %c0_5], %6 {strides = array<i32>} : memref<200x512xf32, #tpu.memory_space<vmem>>, vector<8x512xf32>,
    %8 = vector.extract_strided_slice %5 {offsets = [0, 1], sizes = [8, 512], strides = [1, 1]} : vector<8x640xf32> to vector<8x512xf32>
    %c8 = arith.constant 8 : index
    %c0_6 = arith.constant 0 : index
    %9 = vector.load %arg7[%c8, %c0_6] : memref<200x512xf32, #tpu.memory_space<vmem>>, vector<8x512xf32>
    tpu.vector_store %arg7[%c8, %c0_6], %8 {strides = array<i32>} : memref<200x512xf32, #tpu.memory_space<vmem>>, vector<8x512xf32>,
    %10 = vector.extract_strided_slice %5 {offsets = [0, 2], sizes = [8, 512], strides = [1, 1]} : vector<8x640xf32> to vector<8x512xf32>
    %c16 = arith.constant 16 : index
    %c0_7 = arith.constant 0 : index
    %11 = vector.load %arg7[%c16, %c0_7] : memref<200x512xf32, #tpu.memory_space<vmem>>, vector<8x512xf32>
    tpu.vector_store %arg7[%c16, %c0_7], %10 {strides = array<i32>} : memref<200x512xf32, #tpu.memory_space<vmem>>, vector<8x512xf32>,
    %12 = vector.extract_strided_slice %5 {offsets = [0, 3], sizes = [8, 512], strides = [1, 1]} : vector<8x640xf32> to vector<8x512xf32>
    %c24 = arith.constant 24 : index
    %c0_8 = arith.constant 0 : index
    %13 = vector.load %arg7[%c24, %c0_8] : memref<200x512xf32, #tpu.memory_space<vmem>>, vector<8x512xf32>
    tpu.vector_store %arg7[%c24, %c0_8], %12 {strides = array<i32>} : memref<200x512xf32, #tpu.memory_space<vmem>>, vector<8x512xf32>,
    %14 = vector.extract_strided_slice %5 {offsets = [0, 4], sizes = [8, 512], strides = [1, 1]} : vector<8x640xf32> to vector<8x512xf32>
    %c32 = arith.constant 32 : index
    %c0_9 = arith.constant 0 : index
    %15 = vector.load %arg7[%c32, %c0_9] : memref<200x512xf32, #tpu.memory_space<vmem>>, vector<8x512xf32>
    tpu.vector_store %arg7[%c32, %c0_9], %14 {strides = array<i32>} : memref<200x512xf32, #tpu.memory_space<vmem>>, vector<8x512xf32>,
    %16 = vector.extract_strided_slice %5 {offsets = [0, 16], sizes = [8, 512], strides = [1, 1]} : vector<8x640xf32> to vector<8x512xf32>
    %c40 = arith.constant 40 : index
    %c0_10 = arith.constant 0 : index
    %17 = vector.load %arg7[%c40, %c0_10] : memref<200x512xf32, #tpu.memory_space<vmem>>, vector<8x512xf32>
    tpu.vector_store %arg7[%c40, %c0_10], %16 {strides = array<i32>} : memref<200x512xf32, #tpu.memory_space<vmem>>, vector<8x512xf32>,
    %18 = vector.extract_strided_slice %5 {offsets = [0, 17], sizes = [8, 512], strides = [1, 1]} : vector<8x640xf32> to vector<8x512xf32>
    %c48 = arith.constant 48 : index
    %c0_11 = arith.constant 0 : index
    %19 = vector.load %arg7[%c48, %c0_11] : memref<200x512xf32, #tpu.memory_space<vmem>>, vector<8x512xf32>
    tpu.vector_store %arg7[%c48, %c0_11], %18 {strides = array<i32>} : memref<200x512xf32, #tpu.memory_space<vmem>>, vector<8x512xf32>,
    %20 = vector.extract_strided_slice %5 {offsets = [0, 18], sizes = [8, 512], strides = [1, 1]} : vector<8x640xf32> to vector<8x512xf32>
    %c56 = arith.constant 56 : index
    %c0_12 = arith.constant 0 : index
    %21 = vector.load %arg7[%c56, %c0_12] : memref<200x512xf32, #tpu.memory_space<vmem>>, vector<8x512xf32>
    tpu.vector_store %arg7[%c56, %c0_12], %20 {strides = array<i32>} : memref<200x512xf32, #tpu.memory_space<vmem>>, vector<8x512xf32>,
    %22 = vector.extract_strided_slice %5 {offsets = [0, 19], sizes = [8, 512], strides = [1, 1]} : vector<8x640xf32> to vector<8x512xf32>
    %c64 = arith.constant 64 : index
    %c0_13 = arith.constant 0 : index
    %23 = vector.load %arg7[%c64, %c0_13] : memref<200x512xf32, #tpu.memory_space<vmem>>, vector<8x512xf32>
    tpu.vector_store %arg7[%c64, %c0_13], %22 {strides = array<i32>} : memref<200x512xf32, #tpu.memory_space<vmem>>, vector<8x512xf32>,
    %24 = vector.extract_strided_slice %5 {offsets = [0, 20], sizes = [8, 512], strides = [1, 1]} : vector<8x640xf32> to vector<8x512xf32>
    %c72 = arith.constant 72 : index
    %c0_14 = arith.constant 0 : index
    %25 = vector.load %arg7[%c72, %c0_14] : memref<200x512xf32, #tpu.memory_space<vmem>>, vector<8x512xf32>
    tpu.vector_store %arg7[%c72, %c0_14], %24 {strides = array<i32>} : memref<200x512xf32, #tpu.memory_space<vmem>>, vector<8x512xf32>,
    %26 = vector.extract_strided_slice %5 {offsets = [0, 32], sizes = [8, 512], strides = [1, 1]} : vector<8x640xf32> to vector<8x512xf32>
    %c80 = arith.constant 80 : index
    %c0_15 = arith.constant 0 : index
    %27 = vector.load %arg7[%c80, %c0_15] : memref<200x512xf32, #tpu.memory_space<vmem>>, vector<8x512xf32>
    tpu.vector_store %arg7[%c80, %c0_15], %26 {strides = array<i32>} : memref<200x512xf32, #tpu.memory_space<vmem>>, vector<8x512xf32>,
    %28 = vector.extract_strided_slice %5 {offsets = [0, 33], sizes = [8, 512], strides = [1, 1]} : vector<8x640xf32> to vector<8x512xf32>
    %c88 = arith.constant 88 : index
    %c0_16 = arith.constant 0 : index
    %29 = vector.load %arg7[%c88, %c0_16] : memref<200x512xf32, #tpu.memory_space<vmem>>, vector<8x512xf32>
    tpu.vector_store %arg7[%c88, %c0_16], %28 {strides = array<i32>} : memref<200x512xf32, #tpu.memory_space<vmem>>, vector<8x512xf32>,
    %30 = vector.extract_strided_slice %5 {offsets = [0, 34], sizes = [8, 512], strides = [1, 1]} : vector<8x640xf32> to vector<8x512xf32>
    %c96 = arith.constant 96 : index
    %c0_17 = arith.constant 0 : index
    %31 = vector.load %arg7[%c96, %c0_17] : memref<200x512xf32, #tpu.memory_space<vmem>>, vector<8x512xf32>
    tpu.vector_store %arg7[%c96, %c0_17], %30 {strides = array<i32>} : memref<200x512xf32, #tpu.memory_space<vmem>>, vector<8x512xf32>,
    %32 = vector.extract_strided_slice %5 {offsets = [0, 35], sizes = [8, 512], strides = [1, 1]} : vector<8x640xf32> to vector<8x512xf32>
    %c104 = arith.constant 104 : index
    %c0_18 = arith.constant 0 : index
    %33 = vector.load %arg7[%c104, %c0_18] : memref<200x512xf32, #tpu.memory_space<vmem>>, vector<8x512xf32>
    tpu.vector_store %arg7[%c104, %c0_18], %32 {strides = array<i32>} : memref<200x512xf32, #tpu.memory_space<vmem>>, vector<8x512xf32>,
    %34 = vector.extract_strided_slice %5 {offsets = [0, 36], sizes = [8, 512], strides = [1, 1]} : vector<8x640xf32> to vector<8x512xf32>
    %c112 = arith.constant 112 : index
    %c0_19 = arith.constant 0 : index
    %35 = vector.load %arg7[%c112, %c0_19] : memref<200x512xf32, #tpu.memory_space<vmem>>, vector<8x512xf32>
    tpu.vector_store %arg7[%c112, %c0_19], %34 {strides = array<i32>} : memref<200x512xf32, #tpu.memory_space<vmem>>, vector<8x512xf32>,
    %36 = vector.extract_strided_slice %5 {offsets = [0, 48], sizes = [8, 512], strides = [1, 1]} : vector<8x640xf32> to vector<8x512xf32>
    %c120 = arith.constant 120 : index
    %c0_20 = arith.constant 0 : index
    %37 = vector.load %arg7[%c120, %c0_20] : memref<200x512xf32, #tpu.memory_space<vmem>>, vector<8x512xf32>
    tpu.vector_store %arg7[%c120, %c0_20], %36 {strides = array<i32>} : memref<200x512xf32, #tpu.memory_space<vmem>>, vector<8x512xf32>,
    %38 = vector.extract_strided_slice %5 {offsets = [0, 49], sizes = [8, 512], strides = [1, 1]} : vector<8x640xf32> to vector<8x512xf32>
    %c128 = arith.constant 128 : index
    %c0_21 = arith.constant 0 : index
    %39 = vector.load %arg7[%c128, %c0_21] : memref<200x512xf32, #tpu.memory_space<vmem>>, vector<8x512xf32>
    tpu.vector_store %arg7[%c128, %c0_21], %38 {strides = array<i32>} : memref<200x512xf32, #tpu.memory_space<vmem>>, vector<8x512xf32>,
    %40 = vector.extract_strided_slice %5 {offsets = [0, 50], sizes = [8, 512], strides = [1, 1]} : vector<8x640xf32> to vector<8x512xf32>
    %c136 = arith.constant 136 : index
    %c0_22 = arith.constant 0 : index
    %41 = vector.load %arg7[%c136, %c0_22] : memref<200x512xf32, #tpu.memory_space<vmem>>, vector<8x512xf32>
    tpu.vector_store %arg7[%c136, %c0_22], %40 {strides = array<i32>} : memref<200x512xf32, #tpu.memory_space<vmem>>, vector<8x512xf32>,
    %42 = vector.extract_strided_slice %5 {offsets = [0, 51], sizes = [8, 512], strides = [1, 1]} : vector<8x640xf32> to vector<8x512xf32>
    %c144 = arith.constant 144 : index
    %c0_23 = arith.constant 0 : index
    %43 = vector.load %arg7[%c144, %c0_23] : memref<200x512xf32, #tpu.memory_space<vmem>>, vector<8x512xf32>
    tpu.vector_store %arg7[%c144, %c0_23], %42 {strides = array<i32>} : memref<200x512xf32, #tpu.memory_space<vmem>>, vector<8x512xf32>,
    %44 = vector.extract_strided_slice %5 {offsets = [0, 52], sizes = [8, 512], strides = [1, 1]} : vector<8x640xf32> to vector<8x512xf32>
    %c152 = arith.constant 152 : index
    %c0_24 = arith.constant 0 : index
    %45 = vector.load %arg7[%c152, %c0_24] : memref<200x512xf32, #tpu.memory_space<vmem>>, vector<8x512xf32>
    tpu.vector_store %arg7[%c152, %c0_24], %44 {strides = array<i32>} : memref<200x512xf32, #tpu.memory_space<vmem>>, vector<8x512xf32>,
    %46 = vector.extract_strided_slice %5 {offsets = [0, 64], sizes = [8, 512], strides = [1, 1]} : vector<8x640xf32> to vector<8x512xf32>
    %c160 = arith.constant 160 : index
    %c0_25 = arith.constant 0 : index
    %47 = vector.load %arg7[%c160, %c0_25] : memref<200x512xf32, #tpu.memory_space<vmem>>, vector<8x512xf32>
    tpu.vector_store %arg7[%c160, %c0_25], %46 {strides = array<i32>} : memref<200x512xf32, #tpu.memory_space<vmem>>, vector<8x512xf32>,
    %48 = vector.extract_strided_slice %5 {offsets = [0, 65], sizes = [8, 512], strides = [1, 1]} : vector<8x640xf32> to vector<8x512xf32>
    %c168 = arith.constant 168 : index
    %c0_26 = arith.constant 0 : index
    %49 = vector.load %arg7[%c168, %c0_26] : memref<200x512xf32, #tpu.memory_space<vmem>>, vector<8x512xf32>
    tpu.vector_store %arg7[%c168, %c0_26], %48 {strides = array<i32>} : memref<200x512xf32, #tpu.memory_space<vmem>>, vector<8x512xf32>,
    %50 = vector.extract_strided_slice %5 {offsets = [0, 66], sizes = [8, 512], strides = [1, 1]} : vector<8x640xf32> to vector<8x512xf32>
    %c176 = arith.constant 176 : index
    %c0_27 = arith.constant 0 : index
    %51 = vector.load %arg7[%c176, %c0_27] : memref<200x512xf32, #tpu.memory_space<vmem>>, vector<8x512xf32>
    tpu.vector_store %arg7[%c176, %c0_27], %50 {strides = array<i32>} : memref<200x512xf32, #tpu.memory_space<vmem>>, vector<8x512xf32>,
    %52 = vector.extract_strided_slice %5 {offsets = [0, 67], sizes = [8, 512], strides = [1, 1]} : vector<8x640xf32> to vector<8x512xf32>
    %c184 = arith.constant 184 : index
    %c0_28 = arith.constant 0 : index
    %53 = vector.load %arg7[%c184, %c0_28] : memref<200x512xf32, #tpu.memory_space<vmem>>, vector<8x512xf32>
    tpu.vector_store %arg7[%c184, %c0_28], %52 {strides = array<i32>} : memref<200x512xf32, #tpu.memory_space<vmem>>, vector<8x512xf32>,
    %54 = vector.extract_strided_slice %5 {offsets = [0, 68], sizes = [8, 512], strides = [1, 1]} : vector<8x640xf32> to vector<8x512xf32>
    %c192 = arith.constant 192 : index
    %c0_29 = arith.constant 0 : index
    %55 = vector.load %arg7[%c192, %c0_29] : memref<200x512xf32, #tpu.memory_space<vmem>>, vector<8x512xf32>
    tpu.vector_store %arg7[%c192, %c0_29], %54 {strides = array<i32>} : memref<200x512xf32, #tpu.memory_space<vmem>>, vector<8x512xf32>,
    %c0_30 = arith.constant 0 : index
    %c0_31 = arith.constant 0 : index
    %56 = vector.load %arg2[%c0_30, %c0_31] : memref<8x200xf32, #tpu.memory_space<vmem>>, vector<8x200xf32>
    %c0_32 = arith.constant 0 : index
    %c0_33 = arith.constant 0 : index
    %57 = vector.load %arg7[%c0_32, %c0_33] : memref<200x512xf32, #tpu.memory_space<vmem>>, vector<200x512xf32>
    %cst_34 = arith.constant dense<0.000000e+00> : vector<8x512xf32>
    %58 = tpu.matmul %56, %57, %cst_34 {dimension_numbers = #tpu.dot_dimension_numbers<[1], [0], [0], [1], [0, 0, 1, 1], [], []>} : vector<8x200xf32>, vector<200x512xf32>, vector<8x512xf32> -> vector<8x512xf32>
    %c0_35 = arith.constant 0 : index
    %c0_36 = arith.constant 0 : index
    %59 = vector.load %arg3[%c0_35, %c0_36] : memref<8x1xf32, #tpu.memory_space<vmem>>, vector<8x1xf32>
    %60 = vector.broadcast %59 : vector<8x1xf32> to vector<8x512xf32>
    %61 = arith.addf %58, %60 : vector<8x512xf32>
    %cst_37 = arith.constant 0.000000e+00 : f32
    %62 = vector.broadcast %cst_37 : f32 to vector<8x512xf32>
    %63 = arith.cmpf ogt, %61, %62 : vector<8x512xf32>
    %cst_38 = arith.constant 0.00999999977 : f32
    %64 = vector.broadcast %cst_38 : f32 to vector<8x512xf32>
    %65 = arith.mulf %64, %61 : vector<8x512xf32>
    %66 = arith.select %63, %61, %65 : vector<8x512xi1>, vector<8x512xf32>
    %67 = vector.extract_strided_slice %66 {offsets = [0, 0], sizes = [8, 384], strides = [1, 1]} : vector<8x512xf32> to vector<8x384xf32>
    %c0_39 = arith.constant 0 : index
    %c0_40 = arith.constant 0 : index
    %68 = vector.load %arg7[%c0_39, %c0_40] : memref<200x512xf32, #tpu.memory_space<vmem>>, vector<8x384xf32>
    tpu.vector_store %arg7[%c0_39, %c0_40], %67 {strides = array<i32>} : memref<200x512xf32, #tpu.memory_space<vmem>>, vector<8x384xf32>,
    %69 = vector.extract_strided_slice %66 {offsets = [0, 1], sizes = [8, 384], strides = [1, 1]} : vector<8x512xf32> to vector<8x384xf32>
    %c8_41 = arith.constant 8 : index
    %c0_42 = arith.constant 0 : index
    %70 = vector.load %arg7[%c8_41, %c0_42] : memref<200x512xf32, #tpu.memory_space<vmem>>, vector<8x384xf32>
    tpu.vector_store %arg7[%c8_41, %c0_42], %69 {strides = array<i32>} : memref<200x512xf32, #tpu.memory_space<vmem>>, vector<8x384xf32>,
    %71 = vector.extract_strided_slice %66 {offsets = [0, 2], sizes = [8, 384], strides = [1, 1]} : vector<8x512xf32> to vector<8x384xf32>
    %c16_43 = arith.constant 16 : index
    %c0_44 = arith.constant 0 : index
    %72 = vector.load %arg7[%c16_43, %c0_44] : memref<200x512xf32, #tpu.memory_space<vmem>>, vector<8x384xf32>
    tpu.vector_store %arg7[%c16_43, %c0_44], %71 {strides = array<i32>} : memref<200x512xf32, #tpu.memory_space<vmem>>, vector<8x384xf32>,
    %73 = vector.extract_strided_slice %66 {offsets = [0, 3], sizes = [8, 384], strides = [1, 1]} : vector<8x512xf32> to vector<8x384xf32>
    %c24_45 = arith.constant 24 : index
    %c0_46 = arith.constant 0 : index
    %74 = vector.load %arg7[%c24_45, %c0_46] : memref<200x512xf32, #tpu.memory_space<vmem>>, vector<8x384xf32>
    tpu.vector_store %arg7[%c24_45, %c0_46], %73 {strides = array<i32>} : memref<200x512xf32, #tpu.memory_space<vmem>>, vector<8x384xf32>,
    %75 = vector.extract_strided_slice %66 {offsets = [0, 4], sizes = [8, 384], strides = [1, 1]} : vector<8x512xf32> to vector<8x384xf32>
    %c32_47 = arith.constant 32 : index
    %c0_48 = arith.constant 0 : index
    %76 = vector.load %arg7[%c32_47, %c0_48] : memref<200x512xf32, #tpu.memory_space<vmem>>, vector<8x384xf32>
    tpu.vector_store %arg7[%c32_47, %c0_48], %75 {strides = array<i32>} : memref<200x512xf32, #tpu.memory_space<vmem>>, vector<8x384xf32>,
    %77 = vector.extract_strided_slice %66 {offsets = [0, 16], sizes = [8, 384], strides = [1, 1]} : vector<8x512xf32> to vector<8x384xf32>
    %c40_49 = arith.constant 40 : index
    %c0_50 = arith.constant 0 : index
    %78 = vector.load %arg7[%c40_49, %c0_50] : memref<200x512xf32, #tpu.memory_space<vmem>>, vector<8x384xf32>
    tpu.vector_store %arg7[%c40_49, %c0_50], %77 {strides = array<i32>} : memref<200x512xf32, #tpu.memory_space<vmem>>, vector<8x384xf32>,
    %79 = vector.extract_strided_slice %66 {offsets = [0, 17], sizes = [8, 384], strides = [1, 1]} : vector<8x512xf32> to vector<8x384xf32>
    %c48_51 = arith.constant 48 : index
    %c0_52 = arith.constant 0 : index
    %80 = vector.load %arg7[%c48_51, %c0_52] : memref<200x512xf32, #tpu.memory_space<vmem>>, vector<8x384xf32>
    tpu.vector_store %arg7[%c48_51, %c0_52], %79 {strides = array<i32>} : memref<200x512xf32, #tpu.memory_space<vmem>>, vector<8x384xf32>,
    %81 = vector.extract_strided_slice %66 {offsets = [0, 18], sizes = [8, 384], strides = [1, 1]} : vector<8x512xf32> to vector<8x384xf32>
    %c56_53 = arith.constant 56 : index
    %c0_54 = arith.constant 0 : index
    %82 = vector.load %arg7[%c56_53, %c0_54] : memref<200x512xf32, #tpu.memory_space<vmem>>, vector<8x384xf32>
    tpu.vector_store %arg7[%c56_53, %c0_54], %81 {strides = array<i32>} : memref<200x512xf32, #tpu.memory_space<vmem>>, vector<8x384xf32>,
    %83 = vector.extract_strided_slice %66 {offsets = [0, 19], sizes = [8, 384], strides = [1, 1]} : vector<8x512xf32> to vector<8x384xf32>
    %c64_55 = arith.constant 64 : index
    %c0_56 = arith.constant 0 : index
    %84 = vector.load %arg7[%c64_55, %c0_56] : memref<200x512xf32, #tpu.memory_space<vmem>>, vector<8x384xf32>
    tpu.vector_store %arg7[%c64_55, %c0_56], %83 {strides = array<i32>} : memref<200x512xf32, #tpu.memory_space<vmem>>, vector<8x384xf32>,
    %85 = vector.extract_strided_slice %66 {offsets = [0, 20], sizes = [8, 384], strides = [1, 1]} : vector<8x512xf32> to vector<8x384xf32>
    %c72_57 = arith.constant 72 : index
    %c0_58 = arith.constant 0 : index
    %86 = vector.load %arg7[%c72_57, %c0_58] : memref<200x512xf32, #tpu.memory_space<vmem>>, vector<8x384xf32>
    tpu.vector_store %arg7[%c72_57, %c0_58], %85 {strides = array<i32>} : memref<200x512xf32, #tpu.memory_space<vmem>>, vector<8x384xf32>,
    %87 = vector.extract_strided_slice %66 {offsets = [0, 32], sizes = [8, 384], strides = [1, 1]} : vector<8x512xf32> to vector<8x384xf32>
    %c80_59 = arith.constant 80 : index
    %c0_60 = arith.constant 0 : index
    %88 = vector.load %arg7[%c80_59, %c0_60] : memref<200x512xf32, #tpu.memory_space<vmem>>, vector<8x384xf32>
    tpu.vector_store %arg7[%c80_59, %c0_60], %87 {strides = array<i32>} : memref<200x512xf32, #tpu.memory_space<vmem>>, vector<8x384xf32>,
    %89 = vector.extract_strided_slice %66 {offsets = [0, 33], sizes = [8, 384], strides = [1, 1]} : vector<8x512xf32> to vector<8x384xf32>
    %c88_61 = arith.constant 88 : index
    %c0_62 = arith.constant 0 : index
    %90 = vector.load %arg7[%c88_61, %c0_62] : memref<200x512xf32, #tpu.memory_space<vmem>>, vector<8x384xf32>
    tpu.vector_store %arg7[%c88_61, %c0_62], %89 {strides = array<i32>} : memref<200x512xf32, #tpu.memory_space<vmem>>, vector<8x384xf32>,
    %91 = vector.extract_strided_slice %66 {offsets = [0, 34], sizes = [8, 384], strides = [1, 1]} : vector<8x512xf32> to vector<8x384xf32>
    %c96_63 = arith.constant 96 : index
    %c0_64 = arith.constant 0 : index
    %92 = vector.load %arg7[%c96_63, %c0_64] : memref<200x512xf32, #tpu.memory_space<vmem>>, vector<8x384xf32>
    tpu.vector_store %arg7[%c96_63, %c0_64], %91 {strides = array<i32>} : memref<200x512xf32, #tpu.memory_space<vmem>>, vector<8x384xf32>,
    %93 = vector.extract_strided_slice %66 {offsets = [0, 35], sizes = [8, 384], strides = [1, 1]} : vector<8x512xf32> to vector<8x384xf32>
    %c104_65 = arith.constant 104 : index
    %c0_66 = arith.constant 0 : index
    %94 = vector.load %arg7[%c104_65, %c0_66] : memref<200x512xf32, #tpu.memory_space<vmem>>, vector<8x384xf32>
    tpu.vector_store %arg7[%c104_65, %c0_66], %93 {strides = array<i32>} : memref<200x512xf32, #tpu.memory_space<vmem>>, vector<8x384xf32>,
    %95 = vector.extract_strided_slice %66 {offsets = [0, 36], sizes = [8, 384], strides = [1, 1]} : vector<8x512xf32> to vector<8x384xf32>
    %c112_67 = arith.constant 112 : index
    %c0_68 = arith.constant 0 : index
    %96 = vector.load %arg7[%c112_67, %c0_68] : memref<200x512xf32, #tpu.memory_space<vmem>>, vector<8x384xf32>
    tpu.vector_store %arg7[%c112_67, %c0_68], %95 {strides = array<i32>} : memref<200x512xf32, #tpu.memory_space<vmem>>, vector<8x384xf32>,
    %97 = vector.extract_strided_slice %66 {offsets = [0, 48], sizes = [8, 384], strides = [1, 1]} : vector<8x512xf32> to vector<8x384xf32>
    %c120_69 = arith.constant 120 : index
    %c0_70 = arith.constant 0 : index
    %98 = vector.load %arg7[%c120_69, %c0_70] : memref<200x512xf32, #tpu.memory_space<vmem>>, vector<8x384xf32>
    tpu.vector_store %arg7[%c120_69, %c0_70], %97 {strides = array<i32>} : memref<200x512xf32, #tpu.memory_space<vmem>>, vector<8x384xf32>,
    %99 = vector.extract_strided_slice %66 {offsets = [0, 49], sizes = [8, 384], strides = [1, 1]} : vector<8x512xf32> to vector<8x384xf32>
    %c128_71 = arith.constant 128 : index
    %c0_72 = arith.constant 0 : index
    %100 = vector.load %arg7[%c128_71, %c0_72] : memref<200x512xf32, #tpu.memory_space<vmem>>, vector<8x384xf32>
    tpu.vector_store %arg7[%c128_71, %c0_72], %99 {strides = array<i32>} : memref<200x512xf32, #tpu.memory_space<vmem>>, vector<8x384xf32>,
    %101 = vector.extract_strided_slice %66 {offsets = [0, 50], sizes = [8, 384], strides = [1, 1]} : vector<8x512xf32> to vector<8x384xf32>
    %c136_73 = arith.constant 136 : index
    %c0_74 = arith.constant 0 : index
    %102 = vector.load %arg7[%c136_73, %c0_74] : memref<200x512xf32, #tpu.memory_space<vmem>>, vector<8x384xf32>
    tpu.vector_store %arg7[%c136_73, %c0_74], %101 {strides = array<i32>} : memref<200x512xf32, #tpu.memory_space<vmem>>, vector<8x384xf32>,
    %103 = vector.extract_strided_slice %66 {offsets = [0, 51], sizes = [8, 384], strides = [1, 1]} : vector<8x512xf32> to vector<8x384xf32>
    %c144_75 = arith.constant 144 : index
    %c0_76 = arith.constant 0 : index
    %104 = vector.load %arg7[%c144_75, %c0_76] : memref<200x512xf32, #tpu.memory_space<vmem>>, vector<8x384xf32>
    tpu.vector_store %arg7[%c144_75, %c0_76], %103 {strides = array<i32>} : memref<200x512xf32, #tpu.memory_space<vmem>>, vector<8x384xf32>,
    %105 = vector.extract_strided_slice %66 {offsets = [0, 52], sizes = [8, 384], strides = [1, 1]} : vector<8x512xf32> to vector<8x384xf32>
    %c152_77 = arith.constant 152 : index
    %c0_78 = arith.constant 0 : index
    %106 = vector.load %arg7[%c152_77, %c0_78] : memref<200x512xf32, #tpu.memory_space<vmem>>, vector<8x384xf32>
    tpu.vector_store %arg7[%c152_77, %c0_78], %105 {strides = array<i32>} : memref<200x512xf32, #tpu.memory_space<vmem>>, vector<8x384xf32>,
    %107 = vector.extract_strided_slice %66 {offsets = [0, 64], sizes = [8, 384], strides = [1, 1]} : vector<8x512xf32> to vector<8x384xf32>
    %c160_79 = arith.constant 160 : index
    %c0_80 = arith.constant 0 : index
    %108 = vector.load %arg7[%c160_79, %c0_80] : memref<200x512xf32, #tpu.memory_space<vmem>>, vector<8x384xf32>
    tpu.vector_store %arg7[%c160_79, %c0_80], %107 {strides = array<i32>} : memref<200x512xf32, #tpu.memory_space<vmem>>, vector<8x384xf32>,
    %109 = vector.extract_strided_slice %66 {offsets = [0, 65], sizes = [8, 384], strides = [1, 1]} : vector<8x512xf32> to vector<8x384xf32>
    %c168_81 = arith.constant 168 : index
    %c0_82 = arith.constant 0 : index
    %110 = vector.load %arg7[%c168_81, %c0_82] : memref<200x512xf32, #tpu.memory_space<vmem>>, vector<8x384xf32>
    tpu.vector_store %arg7[%c168_81, %c0_82], %109 {strides = array<i32>} : memref<200x512xf32, #tpu.memory_space<vmem>>, vector<8x384xf32>,
    %111 = vector.extract_strided_slice %66 {offsets = [0, 66], sizes = [8, 384], strides = [1, 1]} : vector<8x512xf32> to vector<8x384xf32>
    %c176_83 = arith.constant 176 : index
    %c0_84 = arith.constant 0 : index
    %112 = vector.load %arg7[%c176_83, %c0_84] : memref<200x512xf32, #tpu.memory_space<vmem>>, vector<8x384xf32>
    tpu.vector_store %arg7[%c176_83, %c0_84], %111 {strides = array<i32>} : memref<200x512xf32, #tpu.memory_space<vmem>>, vector<8x384xf32>,
    %113 = vector.extract_strided_slice %66 {offsets = [0, 67], sizes = [8, 384], strides = [1, 1]} : vector<8x512xf32> to vector<8x384xf32>
    %c184_85 = arith.constant 184 : index
    %c0_86 = arith.constant 0 : index
    %114 = vector.load %arg7[%c184_85, %c0_86] : memref<200x512xf32, #tpu.memory_space<vmem>>, vector<8x384xf32>
    tpu.vector_store %arg7[%c184_85, %c0_86], %113 {strides = array<i32>} : memref<200x512xf32, #tpu.memory_space<vmem>>, vector<8x384xf32>,
    %115 = vector.extract_strided_slice %66 {offsets = [0, 68], sizes = [8, 384], strides = [1, 1]} : vector<8x512xf32> to vector<8x384xf32>
    %c192_87 = arith.constant 192 : index
    %c0_88 = arith.constant 0 : index
    %116 = vector.load %arg7[%c192_87, %c0_88] : memref<200x512xf32, #tpu.memory_space<vmem>>, vector<8x384xf32>
    tpu.vector_store %arg7[%c192_87, %c0_88], %115 {strides = array<i32>} : memref<200x512xf32, #tpu.memory_space<vmem>>, vector<8x384xf32>,
    %c0_89 = arith.constant 0 : index
    %c0_90 = arith.constant 0 : index
    %117 = vector.load %arg4[%c0_89, %c0_90] : memref<8x200xf32, #tpu.memory_space<vmem>>, vector<8x200xf32>
    %c0_91 = arith.constant 0 : index
    %c0_92 = arith.constant 0 : index
    %118 = vector.load %arg7[%c0_91, %c0_92] : memref<200x512xf32, #tpu.memory_space<vmem>>, vector<200x384xf32>
    %cst_93 = arith.constant dense<0.000000e+00> : vector<8x384xf32>
    %119 = tpu.matmul %117, %118, %cst_93 {dimension_numbers = #tpu.dot_dimension_numbers<[1], [0], [0], [1], [0, 0, 1, 1], [], []>} : vector<8x200xf32>, vector<200x384xf32>, vector<8x384xf32> -> vector<8x384xf32>
    %c0_94 = arith.constant 0 : index
    %c0_95 = arith.constant 0 : index
    %120 = vector.load %arg5[%c0_94, %c0_95] : memref<8x1xf32, #tpu.memory_space<vmem>>, vector<8x1xf32>
    %121 = vector.broadcast %120 : vector<8x1xf32> to vector<8x384xf32>
    %122 = arith.addf %119, %121 : vector<8x384xf32>
    %cst_96 = arith.constant 0.000000e+00 : f32
    %123 = vector.broadcast %cst_96 : f32 to vector<8x384xf32>
    %124 = arith.cmpf ogt, %122, %123 : vector<8x384xf32>
    %cst_97 = arith.constant 0.00999999977 : f32
    %125 = vector.broadcast %cst_97 : f32 to vector<8x384xf32>
    %126 = arith.mulf %125, %122 : vector<8x384xf32>
    %127 = arith.select %124, %122, %126 : vector<8x384xi1>, vector<8x384xf32>
    %c0_98 = arith.constant 0 : index
    %c0_99 = arith.constant 0 : index
    %c0_100 = arith.constant 0 : index
    %128 = vector.load %arg6[%c0_98, %c0_99, %c0_100] : memref<1x8x384xf32, #tpu.memory_space<vmem>>, vector<1x8x384xf32>
    %129 = vector.shape_cast %128 : vector<1x8x384xf32> to vector<8x384xf32>
    %130 = vector.shape_cast %127 : vector<8x384xf32> to vector<1x8x384xf32>
    tpu.vector_store %arg6[%c0_98, %c0_99, %c0_100], %130 {strides = array<i32>} : memref<1x8x384xf32, #tpu.memory_space<vmem>>, vector<1x8x384xf32>,
    return
  }
  func.func @transform_0(%arg0: i32) -> (i32, i32, i32) {
    %c0_i32 = arith.constant 0 : i32
    %c0_i32_0 = arith.constant 0 : i32
    %c0_i32_1 = arith.constant 0 : i32
    return %arg0, %c0_i32, %c0_i32_0 : i32, i32, i32
  }
  func.func @transform_1(%arg0: i32) -> (i32, i32) {
    %c0_i32 = arith.constant 0 : i32
    %c0_i32_0 = arith.constant 0 : i32
    %c0_i32_1 = arith.constant 0 : i32
    return %c0_i32, %c0_i32_0 : i32, i32
  }
  func.func @transform_2(%arg0: i32) -> (i32, i32) {
    %c0_i32 = arith.constant 0 : i32
    %c0_i32_0 = arith.constant 0 : i32
    %c0_i32_1 = arith.constant 0 : i32
    return %c0_i32, %c0_i32_0 : i32, i32
  }
  func.func @transform_3(%arg0: i32) -> (i32, i32) {
    %c0_i32 = arith.constant 0 : i32
    %c0_i32_0 = arith.constant 0 : i32
    %c0_i32_1 = arith.constant 0 : i32
    return %c0_i32, %c0_i32_0 : i32, i32
  }
  func.func @transform_4(%arg0: i32) -> (i32, i32) {
    %c0_i32 = arith.constant 0 : i32
    %c0_i32_0 = arith.constant 0 : i32
    %c0_i32_1 = arith.constant 0 : i32
    return %c0_i32, %c0_i32_0 : i32, i32
  }
  func.func @transform_5(%arg0: i32) -> (i32, i32, i32) {
    %c0_i32 = arith.constant 0 : i32
    %c0_i32_0 = arith.constant 0 : i32
    %c0_i32_1 = arith.constant 0 : i32
    return %arg0, %c0_i32, %c0_i32_0 : i32, i32, i32
  }
}

</mosaic_0001>

<llo_original>
// kernel: tpu_custom_call.1
$region0: #{tpu_custom_call.1}
  #allocation0 [shape = 'u32[]', space=smem, size = 0x4, offset = 0x4, fixed_abs, tag = 'smem constant byte address 0x4 - core index']
  #allocation1 [shape = 'u32[144,128]{1,0:T(1,128)}', space=vmem, size = 0x12000, scoped, tag = 'internal scratch']
  #allocation2 [shape = 'f32[200,512]{1,0:T(8,128)}', space=vmem, size = 0x64000, scoped, tag = 'scratch operand']
  %s0 = inlined_call_operand.hbm [shape: f32[2,8,256], index: 0, kind: input, shape index: {}]
  %s1 = inlined_call_operand.hbm [shape: f32[8,200], index: 1, kind: input, shape index: {}]
  %s2 = inlined_call_operand.hbm [shape: f32[8,1], index: 2, kind: input, shape index: {}]
  %s3 = inlined_call_operand.hbm [shape: f32[8,200], index: 3, kind: input, shape index: {}]
  %s4 = inlined_call_operand.hbm [shape: f32[8,1], index: 4, kind: input, shape index: {}]
  %s5 = inlined_call_operand.hbm [shape: f32[1,8,384], index: 5, kind: output, shape index: {}]
  %s6 = sld [smem:[#allocation0]]
  $region50: #{tpu_custom_call.1} parent=0
    _
  %s8 = ssub.s32 1, %s6
  %s9 = scalar_select 0, %s8, %s6
  $region1: #{tpu_custom_call.1} parent=0
    #allocation3 [shape = 'u8[16384]{0}', space=vmem, size = 0x4000, scoped, tag = 'input window, operand 0, single buffered']
    #allocation4 [shape = 's32[1]{0}', space=sflag, size = 0x4, scoped, tag = 'scoped memory for tpu_custom_call.1']
    #allocation5 [shape = 's32[1]{0}', space=sflag, size = 0x4, scoped, tag = 'scoped memory for tpu_custom_call.1']
    #allocation6 [shape = 'u8[8192]{0}', space=vmem, size = 0x2000, scoped, tag = 'input window, operand 1, single buffered']
    #allocation7 [shape = 's32[1]{0}', space=sflag, size = 0x4, scoped, tag = 'scoped memory for tpu_custom_call.1']
    #allocation8 [shape = 'u8[4096]{0}', space=vmem, size = 0x1000, scoped, tag = 'input window, operand 2, single buffered']
    #allocation9 [shape = 'u8[8192]{0}', space=vmem, size = 0x2000, scoped, tag = 'input window, operand 3, single buffered']
    #allocation10 [shape = 's32[1]{0}', space=sflag, size = 0x4, scoped, tag = 'scoped memory for tpu_custom_call.1']
    #allocation11 [shape = 'u8[4096]{0}', space=vmem, size = 0x1000, scoped, tag = 'input window, operand 4, single buffered']
    #allocation12 [shape = 'u8[12288]{0}', space=vmem, size = 0x3000, scoped, tag = 'output window, operand 0, single buffered']
    %10 = vsyncpa [#allocation4], 0
    %11 = vsyncpa [#allocation7], 0
    %12 = vsyncpa [#allocation10], 0
    %13 = vsyncpa [#allocation5], 0
    // Predicated region
    $region2: #{tpu_custom_call.1} parent=1 // pred_check
      _
    $region3: #{tpu_custom_call.1} parent=1 // pred_check_branch
      %15 = sbr.rel (0) target = $region5
    $region4: #{tpu_custom_call.1} parent=1 // pred_region
      %s17 = ssub.s32 512, 512
      %18 = vsyncadd [#allocation4], %s17
      %s19 = sshll.u32 [#allocation3], 4
      %s20 = int_to_ptr.vmem [resolvable:$true] %s19
      %25 = dma.hbm_to_vmem [thread:$0]  %s0, 512, %s20, [#allocation4], 256, 256, 16
    $region5: #{tpu_custom_call.1} parent=1 // pred_fallthru
      _
    // Predicated region
    $region6: #{tpu_custom_call.1} parent=1 // pred_check
      _
    $region7: #{tpu_custom_call.1} parent=1 // pred_check_branch
      %27 = sbr.rel (0) target = $region9
    $region8: #{tpu_custom_call.1} parent=1 // pred_region
      %s29 = ssub.s32 256, 256
      %30 = vsyncadd [#allocation7], %s29
      %s32 = sshll.u32 [#allocation6], 4
      %s33 = int_to_ptr.vmem [resolvable:$true] %s32
      %35 = dma.hbm_to_vmem [thread:$0]  %s1, 256, %s33, [#allocation7]
    $region9: #{tpu_custom_call.1} parent=1 // pred_fallthru
      _
    // Predicated region
    $region10: #{tpu_custom_call.1} parent=1 // pred_check
      _
    $region11: #{tpu_custom_call.1} parent=1 // pred_check_branch
      %37 = sbr.rel (0) target = $region13
    $region12: #{tpu_custom_call.1} parent=1 // pred_region
      %s39 = ssub.s32 128, 128
      %40 = vsyncadd [#allocation7], %s39
      %s42 = sshll.u32 [#allocation8], 4
      %s43 = int_to_ptr.vmem [resolvable:$true] %s42
      %45 = dma.hbm_to_vmem [thread:$0]  %s2, 128, %s43, [#allocation7]
    $region13: #{tpu_custom_call.1} parent=1 // pred_fallthru
      _
    // Predicated region
    $region14: #{tpu_custom_call.1} parent=1 // pred_check
      _
    $region15: #{tpu_custom_call.1} parent=1 // pred_check_branch
      %47 = sbr.rel (0) target = $region17
    $region16: #{tpu_custom_call.1} parent=1 // pred_region
      %s49 = ssub.s32 256, 256
      %50 = vsyncadd [#allocation10], %s49
      %s52 = sshll.u32 [#allocation9], 4
      %s53 = int_to_ptr.vmem [resolvable:$true] %s52
      %55 = dma.hbm_to_vmem [thread:$0]  %s3, 256, %s53, [#allocation10]
    $region17: #{tpu_custom_call.1} parent=1 // pred_fallthru
      _
    // Predicated region
    $region18: #{tpu_custom_call.1} parent=1 // pred_check
      _
    $region19: #{tpu_custom_call.1} parent=1 // pred_check_branch
      %57 = sbr.rel (0) target = $region21
    $region20: #{tpu_custom_call.1} parent=1 // pred_region
      %s59 = ssub.s32 128, 128
      %60 = vsyncadd [#allocation10], %s59
      %s62 = sshll.u32 [#allocation11], 4
      %s63 = int_to_ptr.vmem [resolvable:$true] %s62
      %65 = dma.hbm_to_vmem [thread:$0]  %s4, 128, %s63, [#allocation10]
    $region21: #{tpu_custom_call.1} parent=1 // pred_fallthru
      _
    // Predicated region
    $region22: #{tpu_custom_call.1} parent=1 // pred_check
      _
    $region23: #{tpu_custom_call.1} parent=1 // pred_check_branch
      %67 = sbr.rel (0) target = $region25
    $region24: #{tpu_custom_call.1} parent=1 // pred_region
      %68 = dma.done [#allocation4], 512
    $region25: #{tpu_custom_call.1} parent=1 // pred_fallthru
      _
    // Predicated region
    $region26: #{tpu_custom_call.1} parent=1 // pred_check
      _
    $region27: #{tpu_custom_call.1} parent=1 // pred_check_branch
      %70 = sbr.rel (0) target = $region29
    $region28: #{tpu_custom_call.1} parent=1 // pred_region
      %71 = dma.done [#allocation7], 256
    $region29: #{tpu_custom_call.1} parent=1 // pred_fallthru
      _
    // Predicated region
    $region30: #{tpu_custom_call.1} parent=1 // pred_check
      _
    $region31: #{tpu_custom_call.1} parent=1 // pred_check_branch
      %73 = sbr.rel (0) target = $region33
    $region32: #{tpu_custom_call.1} parent=1 // pred_region
      %74 = dma.done [#allocation7], 128
    $region33: #{tpu_custom_call.1} parent=1 // pred_fallthru
      _
    // Predicated region
    $region34: #{tpu_custom_call.1} parent=1 // pred_check
      _
    $region35: #{tpu_custom_call.1} parent=1 // pred_check_branch
      %76 = sbr.rel (0) target = $region37
    $region36: #{tpu_custom_call.1} parent=1 // pred_region
      %77 = dma.done [#allocation10], 256
    $region37: #{tpu_custom_call.1} parent=1 // pred_fallthru
      _
    // Predicated region
    $region38: #{tpu_custom_call.1} parent=1 // pred_check
      _
    $region39: #{tpu_custom_call.1} parent=1 // pred_check_branch
      %79 = sbr.rel (0) target = $region41
    $region40: #{tpu_custom_call.1} parent=1 // pred_region
      %80 = dma.done [#allocation10], 128
    $region41: #{tpu_custom_call.1} parent=1 // pred_fallthru
      _
    %v81 = vld [vmem:[#allocation3] sm:$0xff]
    %v82 = vld [vmem:[#allocation3 + $0x8] sm:$0xff]
    %s83 = scalar_lea.vmem [#allocation3], 16
    %v84 = vld [vmem:[%s83] sm:$0xff]
    %v85 = vld [vmem:[%s83 + $0x8] sm:$0xff]
    %86 = vst [vmem:[#allocation2] sm:$0xff] %v81
    %87 = vst [vmem:[#allocation2 + $0x8] sm:$0xff] %v82
    %88 = vst [vmem:[#allocation2 + $0x10] sm:$0xff] %v84
    %89 = vst [vmem:[#allocation2 + $0x18] sm:$0xff] %v85
    %95 = vrot.lane.b32.xlu0 %v81, 127
    %v96 = vpop.permute.xlu0 %95
    %97 = vrot.lane.b32.xlu0 %v82, 127
    %v98 = vpop.permute.xlu0 %97
    %99 = vrot.lane.b32.xlu0 %v84, 127
    %v100 = vpop.permute.xlu0 %99
    %101 = vrot.lane.b32.xlu0 %v85, 127
    %v102 = vpop.permute.xlu0 %101
    %103 = vrot.lane.b32.xlu0 0.0, 127
    %v104 = vpop.permute.xlu0 %103
    %vm105 = vcmask 1039360
    %v106 = vsel %vm105, %v96, %v98
    %v107 = vsel %vm105, %v98, %v100
    %v108 = vsel %vm105, %v100, %v102
    %v109 = vsel %vm105, %v102, %v104
    %114 = vst [vmem:[#allocation2 + $0x20] sm:$0xff] %v106
    %115 = vst [vmem:[#allocation2 + $0x28] sm:$0xff] %v107
    %116 = vst [vmem:[#allocation2 + $0x30] sm:$0xff] %v108
    %117 = vst [vmem:[#allocation2 + $0x38] sm:$0xff] %v109
    %118 = vrot.lane.b32.xlu0 %v81, 126
    %v119 = vpop.permute.xlu0 %118
    %120 = vrot.lane.b32.xlu0 %v82, 126
    %v121 = vpop.permute.xlu0 %120
    %122 = vrot.lane.b32.xlu0 %v84, 126
    %v123 = vpop.permute.xlu0 %122
    %124 = vrot.lane.b32.xlu0 %v85, 126
    %v125 = vpop.permute.xlu0 %124
    %126 = vrot.lane.b32.xlu0 0.0, 126
    %v127 = vpop.permute.xlu0 %126
    %vm128 = vcmask 1031168
    %v129 = vsel %vm128, %v119, %v121
    %v130 = vsel %vm128, %v121, %v123
    %v131 = vsel %vm128, %v123, %v125
    %v132 = vsel %vm128, %v125, %v127
    %137 = vst [vmem:[#allocation2 + $0x40] sm:$0xff] %v129
    %138 = vst [vmem:[#allocation2 + $0x48] sm:$0xff] %v130
    %139 = vst [vmem:[#allocation2 + $0x50] sm:$0xff] %v131
    %140 = vst [vmem:[#allocation2 + $0x58] sm:$0xff] %v132
    %141 = vrot.lane.b32.xlu0 %v81, 125
    %v142 = vpop.permute.xlu0 %141
    %143 = vrot.lane.b32.xlu0 %v82, 125
    %v144 = vpop.permute.xlu0 %143
    %145 = vrot.lane.b32.xlu0 %v84, 125
    %v146 = vpop.permute.xlu0 %145
    %147 = vrot.lane.b32.xlu0 %v85, 125
    %v148 = vpop.permute.xlu0 %147
    %149 = vrot.lane.b32.xlu0 0.0, 125
    %v150 = vpop.permute.xlu0 %149
    %vm151 = vcmask 1022976
    %v152 = vsel %vm151, %v142, %v144
    %v153 = vsel %vm151, %v144, %v146
    %v154 = vsel %vm151, %v146, %v148
    %v155 = vsel %vm151, %v148, %v150
    %160 = vst [vmem:[#allocation2 + $0x60] sm:$0xff] %v152
    %161 = vst [vmem:[#allocation2 + $0x68] sm:$0xff] %v153
    %162 = vst [vmem:[#allocation2 + $0x70] sm:$0xff] %v154
    %163 = vst [vmem:[#allocation2 + $0x78] sm:$0xff] %v155
    %164 = vrot.lane.b32.xlu0 %v81, 124
    %v165 = vpop.permute.xlu0 %164
    %166 = vrot.lane.b32.xlu0 %v82, 124
    %v167 = vpop.permute.xlu0 %166
    %168 = vrot.lane.b32.xlu0 %v84, 124
    %v169 = vpop.permute.xlu0 %168
    %170 = vrot.lane.b32.xlu0 %v85, 124
    %v171 = vpop.permute.xlu0 %170
    %172 = vrot.lane.b32.xlu0 0.0, 124
    %v173 = vpop.permute.xlu0 %172
    %vm174 = vcmask 1014784
    %v175 = vsel %vm174, %v165, %v167
    %v176 = vsel %vm174, %v167, %v169
    %v177 = vsel %vm174, %v169, %v171
    %v178 = vsel %vm174, %v171, %v173
    %183 = vst [vmem:[#allocation2 + $0x80] sm:$0xff] %v175
    %184 = vst [vmem:[#allocation2 + $0x88] sm:$0xff] %v176
    %185 = vst [vmem:[#allocation2 + $0x90] sm:$0xff] %v177
    %186 = vst [vmem:[#allocation2 + $0x98] sm:$0xff] %v178
    %187 = vrot.lane.b32.xlu0 %v81, 112
    %v188 = vpop.permute.xlu0 %187
    %189 = vrot.lane.b32.xlu0 %v82, 112
    %v190 = vpop.permute.xlu0 %189
    %191 = vrot.lane.b32.xlu0 %v84, 112
    %v192 = vpop.permute.xlu0 %191
    %193 = vrot.lane.b32.xlu0 %v85, 112
    %v194 = vpop.permute.xlu0 %193
    %195 = vrot.lane.b32.xlu0 0.0, 112
    %v196 = vpop.permute.xlu0 %195
    %vm197 = vcmask 916480
    %v198 = vsel %vm197, %v188, %v190
    %v199 = vsel %vm197, %v190, %v192
    %v200 = vsel %vm197, %v192, %v194
    %v201 = vsel %vm197, %v194, %v196
    %206 = vst [vmem:[#allocation2 + $0xa0] sm:$0xff] %v198
    %207 = vst [vmem:[#allocation2 + $0xa8] sm:$0xff] %v199
    %208 = vst [vmem:[#allocation2 + $0xb0] sm:$0xff] %v200
    %209 = vst [vmem:[#allocation2 + $0xb8] sm:$0xff] %v201
    %210 = vrot.lane.b32.xlu0 %v81, 111
    %v211 = vpop.permute.xlu0 %210
    %212 = vrot.lane.b32.xlu0 %v82, 111
    %v213 = vpop.permute.xlu0 %212
    %214 = vrot.lane.b32.xlu0 %v84, 111
    %v215 = vpop.permute.xlu0 %214
    %216 = vrot.lane.b32.xlu0 %v85, 111
    %v217 = vpop.permute.xlu0 %216
    %218 = vrot.lane.b32.xlu0 0.0, 111
    %v219 = vpop.permute.xlu0 %218
    %vm220 = vcmask 908288
    %v221 = vsel %vm220, %v211, %v213
    %v222 = vsel %vm220, %v213, %v215
    %v223 = vsel %vm220, %v215, %v217
    %v224 = vsel %vm220, %v217, %v219
    %229 = vst [vmem:[#allocation2 + $0xc0] sm:$0xff] %v221
    %230 = vst [vmem:[#allocation2 + $0xc8] sm:$0xff] %v222
    %231 = vst [vmem:[#allocation2 + $0xd0] sm:$0xff] %v223
    %232 = vst [vmem:[#allocation2 + $0xd8] sm:$0xff] %v224
    %233 = vrot.lane.b32.xlu0 %v81, 110
    %v234 = vpop.permute.xlu0 %233
    %235 = vrot.lane.b32.xlu0 %v82, 110
    %v236 = vpop.permute.xlu0 %235
    %237 = vrot.lane.b32.xlu0 %v84, 110
    %v238 = vpop.permute.xlu0 %237
    %239 = vrot.lane.b32.xlu0 %v85, 110
    %v240 = vpop.permute.xlu0 %239
    %241 = vrot.lane.b32.xlu0 0.0, 110
    %v242 = vpop.permute.xlu0 %241
    %vm243 = vcmask 900096
    %v244 = vsel %vm243, %v234, %v236
    %v245 = vsel %vm243, %v236, %v238
    %v246 = vsel %vm243, %v238, %v240
    %v247 = vsel %vm243, %v240, %v242
    %252 = vst [vmem:[#allocation2 + $0xe0] sm:$0xff] %v244
    %253 = vst [vmem:[#allocation2 + $0xe8] sm:$0xff] %v245
    %254 = vst [vmem:[#allocation2 + $0xf0] sm:$0xff] %v246
    %255 = vst [vmem:[#allocation2 + $0xf8] sm:$0xff] %v247
    %256 = vrot.lane.b32.xlu0 %v81, 109
    %v257 = vpop.permute.xlu0 %256
    %258 = vrot.lane.b32.xlu0 %v82, 109
    %v259 = vpop.permute.xlu0 %258
    %260 = vrot.lane.b32.xlu0 %v84, 109
    %v261 = vpop.permute.xlu0 %260
    %262 = vrot.lane.b32.xlu0 %v85, 109
    %v263 = vpop.permute.xlu0 %262
    %264 = vrot.lane.b32.xlu0 0.0, 109
    %v265 = vpop.permute.xlu0 %264
    %vm266 = vcmask 891904
    %v267 = vsel %vm266, %v257, %v259
    %v268 = vsel %vm266, %v259, %v261
    %v269 = vsel %vm266, %v261, %v263
    %v270 = vsel %vm266, %v263, %v265
    %275 = vst [vmem:[#allocation2 + $0x100] sm:$0xff] %v267
    %276 = vst [vmem:[#allocation2 + $0x108] sm:$0xff] %v268
    %277 = vst [vmem:[#allocation2 + $0x110] sm:$0xff] %v269
    %278 = vst [vmem:[#allocation2 + $0x118] sm:$0xff] %v270
    %279 = vrot.lane.b32.xlu0 %v81, 108
    %v280 = vpop.permute.xlu0 %279
    %281 = vrot.lane.b32.xlu0 %v82, 108
    %v282 = vpop.permute.xlu0 %281
    %283 = vrot.lane.b32.xlu0 %v84, 108
    %v284 = vpop.permute.xlu0 %283
    %285 = vrot.lane.b32.xlu0 %v85, 108
    %v286 = vpop.permute.xlu0 %285
    %287 = vrot.lane.b32.xlu0 0.0, 108
    %v288 = vpop.permute.xlu0 %287
    %vm289 = vcmask 883712
    %v290 = vsel %vm289, %v280, %v282
    %v291 = vsel %vm289, %v282, %v284
    %v292 = vsel %vm289, %v284, %v286
    %v293 = vsel %vm289, %v286, %v288
    %298 = vst [vmem:[#allocation2 + $0x120] sm:$0xff] %v290
    %299 = vst [vmem:[#allocation2 + $0x128] sm:$0xff] %v291
    %300 = vst [vmem:[#allocation2 + $0x130] sm:$0xff] %v292
    %301 = vst [vmem:[#allocation2 + $0x138] sm:$0xff] %v293
    %302 = vrot.lane.b32.xlu0 %v81, 96
    %v303 = vpop.permute.xlu0 %302
    %304 = vrot.lane.b32.xlu0 %v82, 96
    %v305 = vpop.permute.xlu0 %304
    %306 = vrot.lane.b32.xlu0 %v84, 96
    %v307 = vpop.permute.xlu0 %306
    %308 = vrot.lane.b32.xlu0 %v85, 96
    %v309 = vpop.permute.xlu0 %308
    %310 = vrot.lane.b32.xlu0 0.0, 96
    %v311 = vpop.permute.xlu0 %310
    %vm312 = vcmask 785408
    %v313 = vsel %vm312, %v303, %v305
    %v314 = vsel %vm312, %v305, %v307
    %v315 = vsel %vm312, %v307, %v309
    %v316 = vsel %vm312, %v309, %v311
    %321 = vst [vmem:[#allocation2 + $0x140] sm:$0xff] %v313
    %322 = vst [vmem:[#allocation2 + $0x148] sm:$0xff] %v314
    %323 = vst [vmem:[#allocation2 + $0x150] sm:$0xff] %v315
    %324 = vst [vmem:[#allocation2 + $0x158] sm:$0xff] %v316
    %325 = vrot.lane.b32.xlu0 %v81, 95
    %v326 = vpop.permute.xlu0 %325
    %327 = vrot.lane.b32.xlu0 %v82, 95
    %v328 = vpop.permute.xlu0 %327
    %329 = vrot.lane.b32.xlu0 %v84, 95
    %v330 = vpop.permute.xlu0 %329
    %331 = vrot.lane.b32.xlu0 %v85, 95
    %v332 = vpop.permute.xlu0 %331
    %333 = vrot.lane.b32.xlu0 0.0, 95
    %v334 = vpop.permute.xlu0 %333
    %vm335 = vcmask 777216
    %v336 = vsel %vm335, %v326, %v328
    %v337 = vsel %vm335, %v328, %v330
    %v338 = vsel %vm335, %v330, %v332
    %v339 = vsel %vm335, %v332, %v334
    %344 = vst [vmem:[#allocation2 + $0x160] sm:$0xff] %v336
    %345 = vst [vmem:[#allocation2 + $0x168] sm:$0xff] %v337
    %346 = vst [vmem:[#allocation2 + $0x170] sm:$0xff] %v338
    %347 = vst [vmem:[#allocation2 + $0x178] sm:$0xff] %v339
    %348 = vrot.lane.b32.xlu0 %v81, 94
    %v349 = vpop.permute.xlu0 %348
    %350 = vrot.lane.b32.xlu0 %v82, 94
    %v351 = vpop.permute.xlu0 %350
    %352 = vrot.lane.b32.xlu0 %v84, 94
    %v353 = vpop.permute.xlu0 %352
    %354 = vrot.lane.b32.xlu0 %v85, 94
    %v355 = vpop.permute.xlu0 %354
    %356 = vrot.lane.b32.xlu0 0.0, 94
    %v357 = vpop.permute.xlu0 %356
    %vm358 = vcmask 769024
    %v359 = vsel %vm358, %v349, %v351
    %v360 = vsel %vm358, %v351, %v353
    %v361 = vsel %vm358, %v353, %v355
    %v362 = vsel %vm358, %v355, %v357
    %367 = vst [vmem:[#allocation2 + $0x180] sm:$0xff] %v359
    %368 = vst [vmem:[#allocation2 + $0x188] sm:$0xff] %v360
    %369 = vst [vmem:[#allocation2 + $0x190] sm:$0xff] %v361
    %370 = vst [vmem:[#allocation2 + $0x198] sm:$0xff] %v362
    %371 = vrot.lane.b32.xlu0 %v81, 93
    %v372 = vpop.permute.xlu0 %371
    %373 = vrot.lane.b32.xlu0 %v82, 93
    %v374 = vpop.permute.xlu0 %373
    %375 = vrot.lane.b32.xlu0 %v84, 93
    %v376 = vpop.permute.xlu0 %375
    %377 = vrot.lane.b32.xlu0 %v85, 93
    %v378 = vpop.permute.xlu0 %377
    %379 = vrot.lane.b32.xlu0 0.0, 93
    %v380 = vpop.permute.xlu0 %379
    %vm381 = vcmask 760832
    %v382 = vsel %vm381, %v372, %v374
    %v383 = vsel %vm381, %v374, %v376
    %v384 = vsel %vm381, %v376, %v378
    %v385 = vsel %vm381, %v378, %v380
    %390 = vst [vmem:[#allocation2 + $0x1a0] sm:$0xff] %v382
    %391 = vst [vmem:[#allocation2 + $0x1a8] sm:$0xff] %v383
    %392 = vst [vmem:[#allocation2 + $0x1b0] sm:$0xff] %v384
    %393 = vst [vmem:[#allocation2 + $0x1b8] sm:$0xff] %v385
    %394 = vrot.lane.b32.xlu0 %v81, 92
    %v395 = vpop.permute.xlu0 %394
    %396 = vrot.lane.b32.xlu0 %v82, 92
    %v397 = vpop.permute.xlu0 %396
    %398 = vrot.lane.b32.xlu0 %v84, 92
    %v399 = vpop.permute.xlu0 %398
    %400 = vrot.lane.b32.xlu0 %v85, 92
    %v401 = vpop.permute.xlu0 %400
    %402 = vrot.lane.b32.xlu0 0.0, 92
    %v403 = vpop.permute.xlu0 %402
    %vm404 = vcmask 752640
    %v405 = vsel %vm404, %v395, %v397
    %v406 = vsel %vm404, %v397, %v399
    %v407 = vsel %vm404, %v399, %v401
    %v408 = vsel %vm404, %v401, %v403
    %413 = vst [vmem:[#allocation2 + $0x1c0] sm:$0xff] %v405
    %414 = vst [vmem:[#allocation2 + $0x1c8] sm:$0xff] %v406
    %415 = vst [vmem:[#allocation2 + $0x1d0] sm:$0xff] %v407
    %416 = vst [vmem:[#allocation2 + $0x1d8] sm:$0xff] %v408
    %417 = vrot.lane.b32.xlu0 %v81, 80
    %v418 = vpop.permute.xlu0 %417
    %419 = vrot.lane.b32.xlu0 %v82, 80
    %v420 = vpop.permute.xlu0 %419
    %421 = vrot.lane.b32.xlu0 %v84, 80
    %v422 = vpop.permute.xlu0 %421
    %423 = vrot.lane.b32.xlu0 %v85, 80
    %v424 = vpop.permute.xlu0 %423
    %425 = vrot.lane.b32.xlu0 0.0, 80
    %v426 = vpop.permute.xlu0 %425
    %vm427 = vcmask 654336
    %v428 = vsel %vm427, %v418, %v420
    %v429 = vsel %vm427, %v420, %v422
    %v430 = vsel %vm427, %v422, %v424
    %v431 = vsel %vm427, %v424, %v426
    %436 = vst [vmem:[#allocation2 + $0x1e0] sm:$0xff] %v428
    %437 = vst [vmem:[#allocation2 + $0x1e8] sm:$0xff] %v429
    %438 = vst [vmem:[#allocation2 + $0x1f0] sm:$0xff] %v430
    %439 = vst [vmem:[#allocation2 + $0x1f8] sm:$0xff] %v431
    %440 = vrot.lane.b32.xlu0 %v81, 79
    %v441 = vpop.permute.xlu0 %440
    %442 = vrot.lane.b32.xlu0 %v82, 79
    %v443 = vpop.permute.xlu0 %442
    %444 = vrot.lane.b32.xlu0 %v84, 79
    %v445 = vpop.permute.xlu0 %444
    %446 = vrot.lane.b32.xlu0 %v85, 79
    %v447 = vpop.permute.xlu0 %446
    %448 = vrot.lane.b32.xlu0 0.0, 79
    %v449 = vpop.permute.xlu0 %448
    %vm450 = vcmask 646144
    %v451 = vsel %vm450, %v441, %v443
    %v452 = vsel %vm450, %v443, %v445
    %v453 = vsel %vm450, %v445, %v447
    %v454 = vsel %vm450, %v447, %v449
    %459 = vst [vmem:[#allocation2 + $0x200] sm:$0xff] %v451
    %460 = vst [vmem:[#allocation2 + $0x208] sm:$0xff] %v452
    %461 = vst [vmem:[#allocation2 + $0x210] sm:$0xff] %v453
    %462 = vst [vmem:[#allocation2 + $0x218] sm:$0xff] %v454
    %463 = vrot.lane.b32.xlu0 %v81, 78
    %v464 = vpop.permute.xlu0 %463
    %465 = vrot.lane.b32.xlu0 %v82, 78
    %v466 = vpop.permute.xlu0 %465
    %467 = vrot.lane.b32.xlu0 %v84, 78
    %v468 = vpop.permute.xlu0 %467
    %469 = vrot.lane.b32.xlu0 %v85, 78
    %v470 = vpop.permute.xlu0 %469
    %471 = vrot.lane.b32.xlu0 0.0, 78
    %v472 = vpop.permute.xlu0 %471
    %vm473 = vcmask 637952
    %v474 = vsel %vm473, %v464, %v466
    %v475 = vsel %vm473, %v466, %v468
    %v476 = vsel %vm473, %v468, %v470
    %v477 = vsel %vm473, %v470, %v472
    %482 = vst [vmem:[#allocation2 + $0x220] sm:$0xff] %v474
    %483 = vst [vmem:[#allocation2 + $0x228] sm:$0xff] %v475
    %484 = vst [vmem:[#allocation2 + $0x230] sm:$0xff] %v476
    %485 = vst [vmem:[#allocation2 + $0x238] sm:$0xff] %v477
    %486 = vrot.lane.b32.xlu0 %v81, 77
    %v487 = vpop.permute.xlu0 %486
    %488 = vrot.lane.b32.xlu0 %v82, 77
    %v489 = vpop.permute.xlu0 %488
    %490 = vrot.lane.b32.xlu0 %v84, 77
    %v491 = vpop.permute.xlu0 %490
    %492 = vrot.lane.b32.xlu0 %v85, 77
    %v493 = vpop.permute.xlu0 %492
    %494 = vrot.lane.b32.xlu0 0.0, 77
    %v495 = vpop.permute.xlu0 %494
    %vm496 = vcmask 629760
    %v497 = vsel %vm496, %v487, %v489
    %v498 = vsel %vm496, %v489, %v491
    %v499 = vsel %vm496, %v491, %v493
    %v500 = vsel %vm496, %v493, %v495
    %505 = vst [vmem:[#allocation2 + $0x240] sm:$0xff] %v497
    %506 = vst [vmem:[#allocation2 + $0x248] sm:$0xff] %v498
    %507 = vst [vmem:[#allocation2 + $0x250] sm:$0xff] %v499
    %508 = vst [vmem:[#allocation2 + $0x258] sm:$0xff] %v500
    %509 = vrot.lane.b32.xlu0 %v81, 76
    %v510 = vpop.permute.xlu0 %509
    %511 = vrot.lane.b32.xlu0 %v82, 76
    %v512 = vpop.permute.xlu0 %511
    %513 = vrot.lane.b32.xlu0 %v84, 76
    %v514 = vpop.permute.xlu0 %513
    %515 = vrot.lane.b32.xlu0 %v85, 76
    %v516 = vpop.permute.xlu0 %515
    %517 = vrot.lane.b32.xlu0 0.0, 76
    %v518 = vpop.permute.xlu0 %517
    %vm519 = vcmask 621568
    %v520 = vsel %vm519, %v510, %v512
    %v521 = vsel %vm519, %v512, %v514
    %v522 = vsel %vm519, %v514, %v516
    %v523 = vsel %vm519, %v516, %v518
    %528 = vst [vmem:[#allocation2 + $0x260] sm:$0xff] %v520
    %529 = vst [vmem:[#allocation2 + $0x268] sm:$0xff] %v521
    %530 = vst [vmem:[#allocation2 + $0x270] sm:$0xff] %v522
    %531 = vst [vmem:[#allocation2 + $0x278] sm:$0xff] %v523
    %532 = vrot.lane.b32.xlu0 %v81, 64
    %v533 = vpop.permute.xlu0 %532
    %534 = vrot.lane.b32.xlu0 %v82, 64
    %v535 = vpop.permute.xlu0 %534
    %536 = vrot.lane.b32.xlu0 %v84, 64
    %v537 = vpop.permute.xlu0 %536
    %538 = vrot.lane.b32.xlu0 %v85, 64
    %v539 = vpop.permute.xlu0 %538
    %540 = vrot.lane.b32.xlu0 0.0, 64
    %v541 = vpop.permute.xlu0 %540
    %vm542 = vcmask 523264
    %v543 = vsel %vm542, %v533, %v535
    %v544 = vsel %vm542, %v535, %v537
    %v545 = vsel %vm542, %v537, %v539
    %v546 = vsel %vm542, %v539, %v541
    %551 = vst [vmem:[#allocation2 + $0x280] sm:$0xff] %v543
    %552 = vst [vmem:[#allocation2 + $0x288] sm:$0xff] %v544
    %553 = vst [vmem:[#allocation2 + $0x290] sm:$0xff] %v545
    %554 = vst [vmem:[#allocation2 + $0x298] sm:$0xff] %v546
    %555 = vrot.lane.b32.xlu0 %v81, 63
    %v556 = vpop.permute.xlu0 %555
    %557 = vrot.lane.b32.xlu0 %v82, 63
    %v558 = vpop.permute.xlu0 %557
    %559 = vrot.lane.b32.xlu0 %v84, 63
    %v560 = vpop.permute.xlu0 %559
    %561 = vrot.lane.b32.xlu0 %v85, 63
    %v562 = vpop.permute.xlu0 %561
    %563 = vrot.lane.b32.xlu0 0.0, 63
    %v564 = vpop.permute.xlu0 %563
    %vm565 = vcmask 515072
    %v566 = vsel %vm565, %v556, %v558
    %v567 = vsel %vm565, %v558, %v560
    %v568 = vsel %vm565, %v560, %v562
    %v569 = vsel %vm565, %v562, %v564
    %574 = vst [vmem:[#allocation2 + $0x2a0] sm:$0xff] %v566
    %575 = vst [vmem:[#allocation2 + $0x2a8] sm:$0xff] %v567
    %576 = vst [vmem:[#allocation2 + $0x2b0] sm:$0xff] %v568
    %577 = vst [vmem:[#allocation2 + $0x2b8] sm:$0xff] %v569
    %578 = vrot.lane.b32.xlu0 %v81, 62
    %v579 = vpop.permute.xlu0 %578
    %580 = vrot.lane.b32.xlu0 %v82, 62
    %v581 = vpop.permute.xlu0 %580
    %582 = vrot.lane.b32.xlu0 %v84, 62
    %v583 = vpop.permute.xlu0 %582
    %584 = vrot.lane.b32.xlu0 %v85, 62
    %v585 = vpop.permute.xlu0 %584
    %586 = vrot.lane.b32.xlu0 0.0, 62
    %v587 = vpop.permute.xlu0 %586
    %vm588 = vcmask 506880
    %v589 = vsel %vm588, %v579, %v581
    %v590 = vsel %vm588, %v581, %v583
    %v591 = vsel %vm588, %v583, %v585
    %v592 = vsel %vm588, %v585, %v587
    %597 = vst [vmem:[#allocation2 + $0x2c0] sm:$0xff] %v589
    %598 = vst [vmem:[#allocation2 + $0x2c8] sm:$0xff] %v590
    %599 = vst [vmem:[#allocation2 + $0x2d0] sm:$0xff] %v591
    %600 = vst [vmem:[#allocation2 + $0x2d8] sm:$0xff] %v592
    %601 = vrot.lane.b32.xlu0 %v81, 61
    %v602 = vpop.permute.xlu0 %601
    %603 = vrot.lane.b32.xlu0 %v82, 61
    %v604 = vpop.permute.xlu0 %603
    %605 = vrot.lane.b32.xlu0 %v84, 61
    %v606 = vpop.permute.xlu0 %605
    %607 = vrot.lane.b32.xlu0 %v85, 61
    %v608 = vpop.permute.xlu0 %607
    %609 = vrot.lane.b32.xlu0 0.0, 61
    %v610 = vpop.permute.xlu0 %609
    %vm611 = vcmask 498688
    %v612 = vsel %vm611, %v602, %v604
    %v613 = vsel %vm611, %v604, %v606
    %v614 = vsel %vm611, %v606, %v608
    %v615 = vsel %vm611, %v608, %v610
    %620 = vst [vmem:[#allocation2 + $0x2e0] sm:$0xff] %v612
    %621 = vst [vmem:[#allocation2 + $0x2e8] sm:$0xff] %v613
    %622 = vst [vmem:[#allocation2 + $0x2f0] sm:$0xff] %v614
    %623 = vst [vmem:[#allocation2 + $0x2f8] sm:$0xff] %v615
    %624 = vrot.lane.b32.xlu0 %v81, 60
    %v625 = vpop.permute.xlu0 %624
    %626 = vrot.lane.b32.xlu0 %v82, 60
    %v627 = vpop.permute.xlu0 %626
    %628 = vrot.lane.b32.xlu0 %v84, 60
    %v629 = vpop.permute.xlu0 %628
    %630 = vrot.lane.b32.xlu0 %v85, 60
    %v631 = vpop.permute.xlu0 %630
    %632 = vrot.lane.b32.xlu0 0.0, 60
    %v633 = vpop.permute.xlu0 %632
    %vm634 = vcmask 490496
    %v635 = vsel %vm634, %v625, %v627
    %v636 = vsel %vm634, %v627, %v629
    %v637 = vsel %vm634, %v629, %v631
    %v638 = vsel %vm634, %v631, %v633
    %643 = vst [vmem:[#allocation2 + $0x300] sm:$0xff] %v635
    %644 = vst [vmem:[#allocation2 + $0x308] sm:$0xff] %v636
    %645 = vst [vmem:[#allocation2 + $0x310] sm:$0xff] %v637
    %646 = vst [vmem:[#allocation2 + $0x318] sm:$0xff] %v638
    %v647 = vld [vmem:[#allocation6] sm:$0xff]
    %v648 = vld [vmem:[#allocation6 + $0x8] sm:$0xff]
    %v649 = vld [vmem:[#allocation2] sm:$0xff]
    %v650 = vld [vmem:[#allocation2 + $0x8] sm:$0xff]
    %v651 = vld [vmem:[#allocation2 + $0x10] sm:$0xff]
    %v652 = vld [vmem:[#allocation2 + $0x18] sm:$0xff]
    %v653 = vld [vmem:[#allocation2 + $0x20] sm:$0xff]
    %v654 = vld [vmem:[#allocation2 + $0x28] sm:$0xff]
    %v655 = vld [vmem:[#allocation2 + $0x30] sm:$0xff]
    %v656 = vld [vmem:[#allocation2 + $0x38] sm:$0xff]
    %v657 = vld [vmem:[#allocation2 + $0x40] sm:$0xff]
    %v658 = vld [vmem:[#allocation2 + $0x48] sm:$0xff]
    %v659 = vld [vmem:[#allocation2 + $0x50] sm:$0xff]
    %v660 = vld [vmem:[#allocation2 + $0x58] sm:$0xff]
    %v661 = vld [vmem:[#allocation2 + $0x60] sm:$0xff]
    %v662 = vld [vmem:[#allocation2 + $0x68] sm:$0xff]
    %v663 = vld [vmem:[#allocation2 + $0x70] sm:$0xff]
    %v664 = vld [vmem:[#allocation2 + $0x78] sm:$0xff]
    %v665 = vld [vmem:[#allocation2 + $0x80] sm:$0xff]
    %v666 = vld [vmem:[#allocation2 + $0x88] sm:$0xff]
    %v667 = vld [vmem:[#allocation2 + $0x90] sm:$0xff]
    %v668 = vld [vmem:[#allocation2 + $0x98] sm:$0xff]
    %v669 = vld [vmem:[#allocation2 + $0xa0] sm:$0xff]
    %v670 = vld [vmem:[#allocation2 + $0xa8] sm:$0xff]
    %v671 = vld [vmem:[#allocation2 + $0xb0] sm:$0xff]
    %v672 = vld [vmem:[#allocation2 + $0xb8] sm:$0xff]
    %v673 = vld [vmem:[#allocation2 + $0xc0] sm:$0xff]
    %v674 = vld [vmem:[#allocation2 + $0xc8] sm:$0xff]
    %v675 = vld [vmem:[#allocation2 + $0xd0] sm:$0xff]
    %v676 = vld [vmem:[#allocation2 + $0xd8] sm:$0xff]
    %v677 = vld [vmem:[#allocation2 + $0xe0] sm:$0xff]
    %v678 = vld [vmem:[#allocation2 + $0xe8] sm:$0xff]
    %v679 = vld [vmem:[#allocation2 + $0xf0] sm:$0xff]
    %v680 = vld [vmem:[#allocation2 + $0xf8] sm:$0xff]
    %v681 = vld [vmem:[#allocation2 + $0x100] sm:$0xff]
    %v682 = vld [vmem:[#allocation2 + $0x108] sm:$0xff]
    %v683 = vld [vmem:[#allocation2 + $0x110] sm:$0xff]
    %v684 = vld [vmem:[#allocation2 + $0x118] sm:$0xff]
    %v685 = vld [vmem:[#allocation2 + $0x120] sm:$0xff]
    %v686 = vld [vmem:[#allocation2 + $0x128] sm:$0xff]
    %v687 = vld [vmem:[#allocation2 + $0x130] sm:$0xff]
    %v688 = vld [vmem:[#allocation2 + $0x138] sm:$0xff]
    %v689 = vld [vmem:[#allocation2 + $0x140] sm:$0xff]
    %v690 = vld [vmem:[#allocation2 + $0x148] sm:$0xff]
    %v691 = vld [vmem:[#allocation2 + $0x150] sm:$0xff]
    %v692 = vld [vmem:[#allocation2 + $0x158] sm:$0xff]
    %v693 = vld [vmem:[#allocation2 + $0x160] sm:$0xff]
    %v694 = vld [vmem:[#allocation2 + $0x168] sm:$0xff]
    %v695 = vld [vmem:[#allocation2 + $0x170] sm:$0xff]
    %v696 = vld [vmem:[#allocation2 + $0x178] sm:$0xff]
    %v697 = vld [vmem:[#allocation2 + $0x180] sm:$0xff]
    %v698 = vld [vmem:[#allocation2 + $0x188] sm:$0xff]
    %v699 = vld [vmem:[#allocation2 + $0x190] sm:$0xff]
    %v700 = vld [vmem:[#allocation2 + $0x198] sm:$0xff]
    %v701 = vld [vmem:[#allocation2 + $0x1a0] sm:$0xff]
    %v702 = vld [vmem:[#allocation2 + $0x1a8] sm:$0xff]
    %v703 = vld [vmem:[#allocation2 + $0x1b0] sm:$0xff]
    %v704 = vld [vmem:[#allocation2 + $0x1b8] sm:$0xff]
    %v705 = vld [vmem:[#allocation2 + $0x1c0] sm:$0xff]
    %v706 = vld [vmem:[#allocation2 + $0x1c8] sm:$0xff]
    %v707 = vld [vmem:[#allocation2 + $0x1d0] sm:$0xff]
    %v708 = vld [vmem:[#allocation2 + $0x1d8] sm:$0xff]
    %v709 = vld [vmem:[#allocation2 + $0x1e0] sm:$0xff]
    %v710 = vld [vmem:[#allocation2 + $0x1e8] sm:$0xff]
    %v711 = vld [vmem:[#allocation2 + $0x1f0] sm:$0xff]
    %v712 = vld [vmem:[#allocation2 + $0x1f8] sm:$0xff]
    %v713 = vld [vmem:[#allocation2 + $0x200] sm:$0xff]
    %v714 = vld [vmem:[#allocation2 + $0x208] sm:$0xff]
    %v715 = vld [vmem:[#allocation2 + $0x210] sm:$0xff]
    %v716 = vld [vmem:[#allocation2 + $0x218] sm:$0xff]
    %v717 = vld [vmem:[#allocation2 + $0x220] sm:$0xff]
    %v718 = vld [vmem:[#allocation2 + $0x228] sm:$0xff]
    %v719 = vld [vmem:[#allocation2 + $0x230] sm:$0xff]
    %v720 = vld [vmem:[#allocation2 + $0x238] sm:$0xff]
    %v721 = vld [vmem:[#allocation2 + $0x240] sm:$0xff]
    %v722 = vld [vmem:[#allocation2 + $0x248] sm:$0xff]
    %v723 = vld [vmem:[#allocation2 + $0x250] sm:$0xff]
    %v724 = vld [vmem:[#allocation2 + $0x258] sm:$0xff]
    %v725 = vld [vmem:[#allocation2 + $0x260] sm:$0xff]
    %v726 = vld [vmem:[#allocation2 + $0x268] sm:$0xff]
    %v727 = vld [vmem:[#allocation2 + $0x270] sm:$0xff]
    %v728 = vld [vmem:[#allocation2 + $0x278] sm:$0xff]
    %v729 = vld [vmem:[#allocation2 + $0x280] sm:$0xff]
    %v730 = vld [vmem:[#allocation2 + $0x288] sm:$0xff]
    %v731 = vld [vmem:[#allocation2 + $0x290] sm:$0xff]
    %v732 = vld [vmem:[#allocation2 + $0x298] sm:$0xff]
    %v733 = vld [vmem:[#allocation2 + $0x2a0] sm:$0xff]
    %v734 = vld [vmem:[#allocation2 + $0x2a8] sm:$0xff]
    %v735 = vld [vmem:[#allocation2 + $0x2b0] sm:$0xff]
    %v736 = vld [vmem:[#allocation2 + $0x2b8] sm:$0xff]
    %v737 = vld [vmem:[#allocation2 + $0x2c0] sm:$0xff]
    %v738 = vld [vmem:[#allocation2 + $0x2c8] sm:$0xff]
    %v739 = vld [vmem:[#allocation2 + $0x2d0] sm:$0xff]
    %v740 = vld [vmem:[#allocation2 + $0x2d8] sm:$0xff]
    %v741 = vld [vmem:[#allocation2 + $0x2e0] sm:$0xff]
    %v742 = vld [vmem:[#allocation2 + $0x2e8] sm:$0xff]
    %v743 = vld [vmem:[#allocation2 + $0x2f0] sm:$0xff]
    %v744 = vld [vmem:[#allocation2 + $0x2f8] sm:$0xff]
    %v745 = vld [vmem:[#allocation2 + $0x300] sm:$0xff]
    %v746 = vld [vmem:[#allocation2 + $0x308] sm:$0xff]
    %v747 = vld [vmem:[#allocation2 + $0x310] sm:$0xff]
    %v748 = vld [vmem:[#allocation2 + $0x318] sm:$0xff]
    %v749 = vld [vmem:[#allocation8] sm:$0xff]
    %751 = vset.pattern.permute.xlu0 0
    %752 = vperm.xlu0 %751, %v749
    %v753 = vpop.permute.xlu0 %752
    %vm755 = vcmask 588800
    %v757 = vsel %vm755, %v648, 0
    %759 = vmatprep.subr.mxu0 %v650
    %760 = vmatpush1.msra.mxu0 %v649
    %761 = vmatprep.subr.mxu0 %v654
    %762 = vmatpush1.msra.mxu0 %v653
    %763 = vmatprep.subr.mxu0 %v658
    %764 = vmatpush1.msra.mxu0 %v657
    %765 = vmatprep.subr.mxu0 %v662
    %766 = vmatpush1.msra.mxu0 %v661
    %767 = vmatprep.subr.mxu0 %v666
    %768 = vmatpush1.msra.mxu0 %v665
    %769 = vmatprep.subr.mxu0 %v670
    %770 = vmatpush1.msra.mxu0 %v669
    %771 = vmatprep.subr.mxu0 %v674
    %772 = vmatpush1.msra.mxu0 %v673
    %773 = vmatprep.subr.mxu0 %v678
    %774 = vmatpush1.msra.mxu0 %v677
    %775 = vmatprep.subr.mxu0 %v682
    %776 = vmatpush1.msra.mxu0 %v681
    %777 = vmatprep.subr.mxu0 %v686
    %778 = vmatpush1.msra.mxu0 %v685
    %779 = vmatprep.subr.mxu0 %v690
    %780 = vmatpush1.msra.mxu0 %v689
    %781 = vmatprep.subr.mxu0 %v694
    %782 = vmatpush1.msra.mxu0 %v693
    %783 = vmatprep.subr.mxu0 %v698
    %784 = vmatpush1.msra.mxu0 %v697
    %785 = vmatprep.subr.mxu0 %v702
    %786 = vmatpush1.msra.mxu0 %v701
    %787 = vmatprep.subr.mxu0 %v706
    %788 = vmatpush1.msra.mxu0 %v705
    %789 = vmatprep.subr.mxu0 %v710
    %790 = vmatpush1.msra.mxu0 %v709
    %791 = vmatprep.subr.mxu0 %v714
    %792 = vmatpush1.msra.mxu0 %v713
    %793 = vmatprep.subr.mxu0 %v718
    %794 = vmatpush1.msra.mxu0 %v717
    %795 = vmatprep.subr.mxu0 %v722
    %796 = vmatpush1.msra.mxu0 %v721
    %797 = vmatprep.subr.mxu0 %v726
    %798 = vmatpush1.msra.mxu0 %v725
    %799 = vmatprep.subr.mxu0 %v730
    %800 = vmatpush1.msra.mxu0 %v729
    %801 = vmatprep.subr.mxu0 %v734
    %802 = vmatpush1.msra.mxu0 %v733
    %803 = vmatprep.subr.mxu0 %v738
    %804 = vmatpush1.msra.mxu0 %v737
    %805 = vmatprep.subr.mxu0 %v742
    %806 = vmatpush1.msra.mxu0 %v741
    %807 = vmatprep.subr.mxu0 %v746
    %808 = vmatpush1.msra.mxu0 %v745
    %809 = vmatprep.subr.mxu0 0.0
    %810 = vmatpush1.msra.mxu0 0.0
    %811 = vmatprep.subr.mxu0 0.0
    %812 = vmatpush1.msra.mxu0 0.0
    %813 = vmatprep.subr.mxu0 0.0
    %814 = vmatpush1.msra.mxu0 0.0
    %815 = vmatprep.subr.mxu0 0.0
    %816 = vmatpush1.msra.mxu0 0.0
    %817 = vmatprep.subr.mxu0 0.0
    %818 = vmatpush1.msra.mxu0 0.0
    %819 = vmatprep.subr.mxu0 0.0
    %820 = vmatpush1.msra.mxu0 0.0
    %821 = vmatprep.subr.mxu0 0.0
    %822 = vmatpush1.msra.mxu0 0.0
    %823 = vmatprep.mubr.f32.mxu0 %v757
    %824 = vmatmul.mubr.f32.gmra.mrb[0].mxu0 %v647
    %v825 = vpop.f32.mrb[0].mxu0
    %v826 = vadd.f32 %v753, %v825
    %v827 = vpop.f32.mrb[0].mxu0
    %v828 = vadd.f32 %v753, %v827
    %829 = vdwg.mxu0
    %830 = vmatprep.subr.mxu0 %v652
    %831 = vmatpush1.msra.mxu0 %v651
    %832 = vmatprep.subr.mxu0 %v656
    %833 = vmatpush1.msra.mxu0 %v655
    %834 = vmatprep.subr.mxu0 %v660
    %835 = vmatpush1.msra.mxu0 %v659
    %836 = vmatprep.subr.mxu0 %v664
    %837 = vmatpush1.msra.mxu0 %v663
    %838 = vmatprep.subr.mxu0 %v668
    %839 = vmatpush1.msra.mxu0 %v667
    %840 = vmatprep.subr.mxu0 %v672
    %841 = vmatpush1.msra.mxu0 %v671
    %842 = vmatprep.subr.mxu0 %v676
    %843 = vmatpush1.msra.mxu0 %v675
    %844 = vmatprep.subr.mxu0 %v680
    %845 = vmatpush1.msra.mxu0 %v679
    %846 = vmatprep.subr.mxu0 %v684
    %847 = vmatpush1.msra.mxu0 %v683
    %848 = vmatprep.subr.mxu0 %v688
    %849 = vmatpush1.msra.mxu0 %v687
    %850 = vmatprep.subr.mxu0 %v692
    %851 = vmatpush1.msra.mxu0 %v691
    %852 = vmatprep.subr.mxu0 %v696
    %853 = vmatpush1.msra.mxu0 %v695
    %854 = vmatprep.subr.mxu0 %v700
    %855 = vmatpush1.msra.mxu0 %v699
    %856 = vmatprep.subr.mxu0 %v704
    %857 = vmatpush1.msra.mxu0 %v703
    %858 = vmatprep.subr.mxu0 %v708
    %859 = vmatpush1.msra.mxu0 %v707
    %860 = vmatprep.subr.mxu0 %v712
    %861 = vmatpush1.msra.mxu0 %v711
    %862 = vmatprep.subr.mxu0 %v716
    %863 = vmatpush1.msra.mxu0 %v715
    %864 = vmatprep.subr.mxu0 %v720
    %865 = vmatpush1.msra.mxu0 %v719
    %866 = vmatprep.subr.mxu0 %v724
    %867 = vmatpush1.msra.mxu0 %v723
    %868 = vmatprep.subr.mxu0 %v728
    %869 = vmatpush1.msra.mxu0 %v727
    %870 = vmatprep.subr.mxu0 %v732
    %871 = vmatpush1.msra.mxu0 %v731
    %872 = vmatprep.subr.mxu0 %v736
    %873 = vmatpush1.msra.mxu0 %v735
    %874 = vmatprep.subr.mxu0 %v740
    %875 = vmatpush1.msra.mxu0 %v739
    %876 = vmatprep.subr.mxu0 %v744
    %877 = vmatpush1.msra.mxu0 %v743
    %878 = vmatprep.subr.mxu0 %v748
    %879 = vmatpush1.msra.mxu0 %v747
    %880 = vmatprep.subr.mxu0 0.0
    %881 = vmatpush1.msra.mxu0 0.0
    %882 = vmatprep.subr.mxu0 0.0
    %883 = vmatpush1.msra.mxu0 0.0
    %884 = vmatprep.subr.mxu0 0.0
    %885 = vmatpush1.msra.mxu0 0.0
    %886 = vmatprep.subr.mxu0 0.0
    %887 = vmatpush1.msra.mxu0 0.0
    %888 = vmatprep.subr.mxu0 0.0
    %889 = vmatpush1.msra.mxu0 0.0
    %890 = vmatprep.subr.mxu0 0.0
    %891 = vmatpush1.msra.mxu0 0.0
    %892 = vmatprep.subr.mxu0 0.0
    %893 = vmatpush1.msra.mxu0 0.0
    %894 = vmatprep.mubr.f32.mxu0 %v757
    %895 = vmatmul.mubr.f32.gmra.mrb[0].mxu0 %v647
    %v896 = vpop.f32.mrb[0].mxu0
    %v897 = vadd.f32 %v753, %v896
    %v898 = vpop.f32.mrb[0].mxu0
    %v899 = vadd.f32 %v753, %v898
    %900 = vdwg.mxu0
    %vm901 = vcmp.gt.f32.partialorder %v826, 0.0
    %vm902 = vcmp.gt.f32.partialorder %v828, 0.0
    %vm903 = vcmp.gt.f32.partialorder %v897, 0.0
    %vm904 = vcmp.gt.f32.partialorder %v899, 0.0
    %v905 = vmul.f32 %v826, 0.01
    %v906 = vmul.f32 %v828, 0.01
    %v907 = vmul.f32 %v897, 0.01
    %v908 = vmul.f32 %v899, 0.01
    %v909 = vsel %vm901, %v826, %v905
    %v910 = vsel %vm902, %v828, %v906
    %v911 = vsel %vm903, %v897, %v907
    %v912 = vsel %vm904, %v899, %v908
    %913 = vst [vmem:[#allocation2] sm:$0xff] %v909
    %914 = vst [vmem:[#allocation2 + $0x8] sm:$0xff] %v910
    %915 = vst [vmem:[#allocation2 + $0x10] sm:$0xff] %v911
    %920 = vrot.lane.b32.xlu0 %v909, 127
    %v921 = vpop.permute.xlu0 %920
    %922 = vrot.lane.b32.xlu0 %v910, 127
    %v923 = vpop.permute.xlu0 %922
    %924 = vrot.lane.b32.xlu0 %v911, 127
    %v925 = vpop.permute.xlu0 %924
    %926 = vrot.lane.b32.xlu0 %v912, 127
    %v927 = vpop.permute.xlu0 %926
    %v928 = vsel %vm105, %v921, %v923
    %v929 = vsel %vm105, %v923, %v925
    %v930 = vsel %vm105, %v925, %v927
    %934 = vst [vmem:[#allocation2 + $0x20] sm:$0xff] %v928
    %935 = vst [vmem:[#allocation2 + $0x28] sm:$0xff] %v929
    %936 = vst [vmem:[#allocation2 + $0x30] sm:$0xff] %v930
    %937 = vrot.lane.b32.xlu0 %v909, 126
    %v938 = vpop.permute.xlu0 %937
    %939 = vrot.lane.b32.xlu0 %v910, 126
    %v940 = vpop.permute.xlu0 %939
    %941 = vrot.lane.b32.xlu0 %v911, 126
    %v942 = vpop.permute.xlu0 %941
    %943 = vrot.lane.b32.xlu0 %v912, 126
    %v944 = vpop.permute.xlu0 %943
    %v945 = vsel %vm128, %v938, %v940
    %v946 = vsel %vm128, %v940, %v942
    %v947 = vsel %vm128, %v942, %v944
    %951 = vst [vmem:[#allocation2 + $0x40] sm:$0xff] %v945
    %952 = vst [vmem:[#allocation2 + $0x48] sm:$0xff] %v946
    %953 = vst [vmem:[#allocation2 + $0x50] sm:$0xff] %v947
    %954 = vrot.lane.b32.xlu0 %v909, 125
    %v955 = vpop.permute.xlu0 %954
    %956 = vrot.lane.b32.xlu0 %v910, 125
    %v957 = vpop.permute.xlu0 %956
    %958 = vrot.lane.b32.xlu0 %v911, 125
    %v959 = vpop.permute.xlu0 %958
    %960 = vrot.lane.b32.xlu0 %v912, 125
    %v961 = vpop.permute.xlu0 %960
    %v962 = vsel %vm151, %v955, %v957
    %v963 = vsel %vm151, %v957, %v959
    %v964 = vsel %vm151, %v959, %v961
    %968 = vst [vmem:[#allocation2 + $0x60] sm:$0xff] %v962
    %969 = vst [vmem:[#allocation2 + $0x68] sm:$0xff] %v963
    %970 = vst [vmem:[#allocation2 + $0x70] sm:$0xff] %v964
    %971 = vrot.lane.b32.xlu0 %v909, 124
    %v972 = vpop.permute.xlu0 %971
    %973 = vrot.lane.b32.xlu0 %v910, 124
    %v974 = vpop.permute.xlu0 %973
    %975 = vrot.lane.b32.xlu0 %v911, 124
    %v976 = vpop.permute.xlu0 %975
    %977 = vrot.lane.b32.xlu0 %v912, 124
    %v978 = vpop.permute.xlu0 %977
    %v979 = vsel %vm174, %v972, %v974
    %v980 = vsel %vm174, %v974, %v976
    %v981 = vsel %vm174, %v976, %v978
    %985 = vst [vmem:[#allocation2 + $0x80] sm:$0xff] %v979
    %986 = vst [vmem:[#allocation2 + $0x88] sm:$0xff] %v980
    %987 = vst [vmem:[#allocation2 + $0x90] sm:$0xff] %v981
    %988 = vrot.lane.b32.xlu0 %v909, 112
    %v989 = vpop.permute.xlu0 %988
    %990 = vrot.lane.b32.xlu0 %v910, 112
    %v991 = vpop.permute.xlu0 %990
    %992 = vrot.lane.b32.xlu0 %v911, 112
    %v993 = vpop.permute.xlu0 %992
    %994 = vrot.lane.b32.xlu0 %v912, 112
    %v995 = vpop.permute.xlu0 %994
    %v996 = vsel %vm197, %v989, %v991
    %v997 = vsel %vm197, %v991, %v993
    %v998 = vsel %vm197, %v993, %v995
    %1002 = vst [vmem:[#allocation2 + $0xa0] sm:$0xff] %v996
    %1003 = vst [vmem:[#allocation2 + $0xa8] sm:$0xff] %v997
    %1004 = vst [vmem:[#allocation2 + $0xb0] sm:$0xff] %v998
    %1005 = vrot.lane.b32.xlu0 %v909, 111
    %v1006 = vpop.permute.xlu0 %1005
    %1007 = vrot.lane.b32.xlu0 %v910, 111
    %v1008 = vpop.permute.xlu0 %1007
    %1009 = vrot.lane.b32.xlu0 %v911, 111
    %v1010 = vpop.permute.xlu0 %1009
    %1011 = vrot.lane.b32.xlu0 %v912, 111
    %v1012 = vpop.permute.xlu0 %1011
    %v1013 = vsel %vm220, %v1006, %v1008
    %v1014 = vsel %vm220, %v1008, %v1010
    %v1015 = vsel %vm220, %v1010, %v1012
    %1019 = vst [vmem:[#allocation2 + $0xc0] sm:$0xff] %v1013
    %1020 = vst [vmem:[#allocation2 + $0xc8] sm:$0xff] %v1014
    %1021 = vst [vmem:[#allocation2 + $0xd0] sm:$0xff] %v1015
    %1022 = vrot.lane.b32.xlu0 %v909, 110
    %v1023 = vpop.permute.xlu0 %1022
    %1024 = vrot.lane.b32.xlu0 %v910, 110
    %v1025 = vpop.permute.xlu0 %1024
    %1026 = vrot.lane.b32.xlu0 %v911, 110
    %v1027 = vpop.permute.xlu0 %1026
    %1028 = vrot.lane.b32.xlu0 %v912, 110
    %v1029 = vpop.permute.xlu0 %1028
    %v1030 = vsel %vm243, %v1023, %v1025
    %v1031 = vsel %vm243, %v1025, %v1027
    %v1032 = vsel %vm243, %v1027, %v1029
    %1036 = vst [vmem:[#allocation2 + $0xe0] sm:$0xff] %v1030
    %1037 = vst [vmem:[#allocation2 + $0xe8] sm:$0xff] %v1031
    %1038 = vst [vmem:[#allocation2 + $0xf0] sm:$0xff] %v1032
    %1039 = vrot.lane.b32.xlu0 %v909, 109
    %v1040 = vpop.permute.xlu0 %1039
    %1041 = vrot.lane.b32.xlu0 %v910, 109
    %v1042 = vpop.permute.xlu0 %1041
    %1043 = vrot.lane.b32.xlu0 %v911, 109
    %v1044 = vpop.permute.xlu0 %1043
    %1045 = vrot.lane.b32.xlu0 %v912, 109
    %v1046 = vpop.permute.xlu0 %1045
    %v1047 = vsel %vm266, %v1040, %v1042
    %v1048 = vsel %vm266, %v1042, %v1044
    %v1049 = vsel %vm266, %v1044, %v1046
    %1053 = vst [vmem:[#allocation2 + $0x100] sm:$0xff] %v1047
    %1054 = vst [vmem:[#allocation2 + $0x108] sm:$0xff] %v1048
    %1055 = vst [vmem:[#allocation2 + $0x110] sm:$0xff] %v1049
    %1056 = vrot.lane.b32.xlu0 %v909, 108
    %v1057 = vpop.permute.xlu0 %1056
    %1058 = vrot.lane.b32.xlu0 %v910, 108
    %v1059 = vpop.permute.xlu0 %1058
    %1060 = vrot.lane.b32.xlu0 %v911, 108
    %v1061 = vpop.permute.xlu0 %1060
    %1062 = vrot.lane.b32.xlu0 %v912, 108
    %v1063 = vpop.permute.xlu0 %1062
    %v1064 = vsel %vm289, %v1057, %v1059
    %v1065 = vsel %vm289, %v1059, %v1061
    %v1066 = vsel %vm289, %v1061, %v1063
    %1070 = vst [vmem:[#allocation2 + $0x120] sm:$0xff] %v1064
    %1071 = vst [vmem:[#allocation2 + $0x128] sm:$0xff] %v1065
    %1072 = vst [vmem:[#allocation2 + $0x130] sm:$0xff] %v1066
    %1073 = vrot.lane.b32.xlu0 %v909, 96
    %v1074 = vpop.permute.xlu0 %1073
    %1075 = vrot.lane.b32.xlu0 %v910, 96
    %v1076 = vpop.permute.xlu0 %1075
    %1077 = vrot.lane.b32.xlu0 %v911, 96
    %v1078 = vpop.permute.xlu0 %1077
    %1079 = vrot.lane.b32.xlu0 %v912, 96
    %v1080 = vpop.permute.xlu0 %1079
    %v1081 = vsel %vm312, %v1074, %v1076
    %v1082 = vsel %vm312, %v1076, %v1078
    %v1083 = vsel %vm312, %v1078, %v1080
    %1087 = vst [vmem:[#allocation2 + $0x140] sm:$0xff] %v1081
    %1088 = vst [vmem:[#allocation2 + $0x148] sm:$0xff] %v1082
    %1089 = vst [vmem:[#allocation2 + $0x150] sm:$0xff] %v1083
    %1090 = vrot.lane.b32.xlu0 %v909, 95
    %v1091 = vpop.permute.xlu0 %1090
    %1092 = vrot.lane.b32.xlu0 %v910, 95
    %v1093 = vpop.permute.xlu0 %1092
    %1094 = vrot.lane.b32.xlu0 %v911, 95
    %v1095 = vpop.permute.xlu0 %1094
    %1096 = vrot.lane.b32.xlu0 %v912, 95
    %v1097 = vpop.permute.xlu0 %1096
    %v1098 = vsel %vm335, %v1091, %v1093
    %v1099 = vsel %vm335, %v1093, %v1095
    %v1100 = vsel %vm335, %v1095, %v1097
    %1104 = vst [vmem:[#allocation2 + $0x160] sm:$0xff] %v1098
    %1105 = vst [vmem:[#allocation2 + $0x168] sm:$0xff] %v1099
    %1106 = vst [vmem:[#allocation2 + $0x170] sm:$0xff] %v1100
    %1107 = vrot.lane.b32.xlu0 %v909, 94
    %v1108 = vpop.permute.xlu0 %1107
    %1109 = vrot.lane.b32.xlu0 %v910, 94
    %v1110 = vpop.permute.xlu0 %1109
    %1111 = vrot.lane.b32.xlu0 %v911, 94
    %v1112 = vpop.permute.xlu0 %1111
    %1113 = vrot.lane.b32.xlu0 %v912, 94
    %v1114 = vpop.permute.xlu0 %1113
    %v1115 = vsel %vm358, %v1108, %v1110
    %v1116 = vsel %vm358, %v1110, %v1112
    %v1117 = vsel %vm358, %v1112, %v1114
    %1121 = vst [vmem:[#allocation2 + $0x180] sm:$0xff] %v1115
    %1122 = vst [vmem:[#allocation2 + $0x188] sm:$0xff] %v1116
    %1123 = vst [vmem:[#allocation2 + $0x190] sm:$0xff] %v1117
    %1124 = vrot.lane.b32.xlu0 %v909, 93
    %v1125 = vpop.permute.xlu0 %1124
    %1126 = vrot.lane.b32.xlu0 %v910, 93
    %v1127 = vpop.permute.xlu0 %1126
    %1128 = vrot.lane.b32.xlu0 %v911, 93
    %v1129 = vpop.permute.xlu0 %1128
    %1130 = vrot.lane.b32.xlu0 %v912, 93
    %v1131 = vpop.permute.xlu0 %1130
    %v1132 = vsel %vm381, %v1125, %v1127
    %v1133 = vsel %vm381, %v1127, %v1129
    %v1134 = vsel %vm381, %v1129, %v1131
    %1138 = vst [vmem:[#allocation2 + $0x1a0] sm:$0xff] %v1132
    %1139 = vst [vmem:[#allocation2 + $0x1a8] sm:$0xff] %v1133
    %1140 = vst [vmem:[#allocation2 + $0x1b0] sm:$0xff] %v1134
    %1141 = vrot.lane.b32.xlu0 %v909, 92
    %v1142 = vpop.permute.xlu0 %1141
    %1143 = vrot.lane.b32.xlu0 %v910, 92
    %v1144 = vpop.permute.xlu0 %1143
    %1145 = vrot.lane.b32.xlu0 %v911, 92
    %v1146 = vpop.permute.xlu0 %1145
    %1147 = vrot.lane.b32.xlu0 %v912, 92
    %v1148 = vpop.permute.xlu0 %1147
    %v1149 = vsel %vm404, %v1142, %v1144
    %v1150 = vsel %vm404, %v1144, %v1146
    %v1151 = vsel %vm404, %v1146, %v1148
    %1155 = vst [vmem:[#allocation2 + $0x1c0] sm:$0xff] %v1149
    %1156 = vst [vmem:[#allocation2 + $0x1c8] sm:$0xff] %v1150
    %1157 = vst [vmem:[#allocation2 + $0x1d0] sm:$0xff] %v1151
    %1158 = vrot.lane.b32.xlu0 %v909, 80
    %v1159 = vpop.permute.xlu0 %1158
    %1160 = vrot.lane.b32.xlu0 %v910, 80
    %v1161 = vpop.permute.xlu0 %1160
    %1162 = vrot.lane.b32.xlu0 %v911, 80
    %v1163 = vpop.permute.xlu0 %1162
    %1164 = vrot.lane.b32.xlu0 %v912, 80
    %v1165 = vpop.permute.xlu0 %1164
    %v1166 = vsel %vm427, %v1159, %v1161
    %v1167 = vsel %vm427, %v1161, %v1163
    %v1168 = vsel %vm427, %v1163, %v1165
    %1172 = vst [vmem:[#allocation2 + $0x1e0] sm:$0xff] %v1166
    %1173 = vst [vmem:[#allocation2 + $0x1e8] sm:$0xff] %v1167
    %1174 = vst [vmem:[#allocation2 + $0x1f0] sm:$0xff] %v1168
    %1175 = vrot.lane.b32.xlu0 %v909, 79
    %v1176 = vpop.permute.xlu0 %1175
    %1177 = vrot.lane.b32.xlu0 %v910, 79
    %v1178 = vpop.permute.xlu0 %1177
    %1179 = vrot.lane.b32.xlu0 %v911, 79
    %v1180 = vpop.permute.xlu0 %1179
    %1181 = vrot.lane.b32.xlu0 %v912, 79
    %v1182 = vpop.permute.xlu0 %1181
    %v1183 = vsel %vm450, %v1176, %v1178
    %v1184 = vsel %vm450, %v1178, %v1180
    %v1185 = vsel %vm450, %v1180, %v1182
    %1189 = vst [vmem:[#allocation2 + $0x200] sm:$0xff] %v1183
    %1190 = vst [vmem:[#allocation2 + $0x208] sm:$0xff] %v1184
    %1191 = vst [vmem:[#allocation2 + $0x210] sm:$0xff] %v1185
    %1192 = vrot.lane.b32.xlu0 %v909, 78
    %v1193 = vpop.permute.xlu0 %1192
    %1194 = vrot.lane.b32.xlu0 %v910, 78
    %v1195 = vpop.permute.xlu0 %1194
    %1196 = vrot.lane.b32.xlu0 %v911, 78
    %v1197 = vpop.permute.xlu0 %1196
    %1198 = vrot.lane.b32.xlu0 %v912, 78
    %v1199 = vpop.permute.xlu0 %1198
    %v1200 = vsel %vm473, %v1193, %v1195
    %v1201 = vsel %vm473, %v1195, %v1197
    %v1202 = vsel %vm473, %v1197, %v1199
    %1206 = vst [vmem:[#allocation2 + $0x220] sm:$0xff] %v1200
    %1207 = vst [vmem:[#allocation2 + $0x228] sm:$0xff] %v1201
    %1208 = vst [vmem:[#allocation2 + $0x230] sm:$0xff] %v1202
    %1209 = vrot.lane.b32.xlu0 %v909, 77
    %v1210 = vpop.permute.xlu0 %1209
    %1211 = vrot.lane.b32.xlu0 %v910, 77
    %v1212 = vpop.permute.xlu0 %1211
    %1213 = vrot.lane.b32.xlu0 %v911, 77
    %v1214 = vpop.permute.xlu0 %1213
    %1215 = vrot.lane.b32.xlu0 %v912, 77
    %v1216 = vpop.permute.xlu0 %1215
    %v1217 = vsel %vm496, %v1210, %v1212
    %v1218 = vsel %vm496, %v1212, %v1214
    %v1219 = vsel %vm496, %v1214, %v1216
    %1223 = vst [vmem:[#allocation2 + $0x240] sm:$0xff] %v1217
    %1224 = vst [vmem:[#allocation2 + $0x248] sm:$0xff] %v1218
    %1225 = vst [vmem:[#allocation2 + $0x250] sm:$0xff] %v1219
    %1226 = vrot.lane.b32.xlu0 %v909, 76
    %v1227 = vpop.permute.xlu0 %1226
    %1228 = vrot.lane.b32.xlu0 %v910, 76
    %v1229 = vpop.permute.xlu0 %1228
    %1230 = vrot.lane.b32.xlu0 %v911, 76
    %v1231 = vpop.permute.xlu0 %1230
    %1232 = vrot.lane.b32.xlu0 %v912, 76
    %v1233 = vpop.permute.xlu0 %1232
    %v1234 = vsel %vm519, %v1227, %v1229
    %v1235 = vsel %vm519, %v1229, %v1231
    %v1236 = vsel %vm519, %v1231, %v1233
    %1240 = vst [vmem:[#allocation2 + $0x260] sm:$0xff] %v1234
    %1241 = vst [vmem:[#allocation2 + $0x268] sm:$0xff] %v1235
    %1242 = vst [vmem:[#allocation2 + $0x270] sm:$0xff] %v1236
    %1243 = vrot.lane.b32.xlu0 %v909, 64
    %v1244 = vpop.permute.xlu0 %1243
    %1245 = vrot.lane.b32.xlu0 %v910, 64
    %v1246 = vpop.permute.xlu0 %1245
    %1247 = vrot.lane.b32.xlu0 %v911, 64
    %v1248 = vpop.permute.xlu0 %1247
    %1249 = vrot.lane.b32.xlu0 %v912, 64
    %v1250 = vpop.permute.xlu0 %1249
    %v1251 = vsel %vm542, %v1244, %v1246
    %v1252 = vsel %vm542, %v1246, %v1248
    %v1253 = vsel %vm542, %v1248, %v1250
    %1257 = vst [vmem:[#allocation2 + $0x280] sm:$0xff] %v1251
    %1258 = vst [vmem:[#allocation2 + $0x288] sm:$0xff] %v1252
    %1259 = vst [vmem:[#allocation2 + $0x290] sm:$0xff] %v1253
    %1260 = vrot.lane.b32.xlu0 %v909, 63
    %v1261 = vpop.permute.xlu0 %1260
    %1262 = vrot.lane.b32.xlu0 %v910, 63
    %v1263 = vpop.permute.xlu0 %1262
    %1264 = vrot.lane.b32.xlu0 %v911, 63
    %v1265 = vpop.permute.xlu0 %1264
    %1266 = vrot.lane.b32.xlu0 %v912, 63
    %v1267 = vpop.permute.xlu0 %1266
    %v1268 = vsel %vm565, %v1261, %v1263
    %v1269 = vsel %vm565, %v1263, %v1265
    %v1270 = vsel %vm565, %v1265, %v1267
    %1274 = vst [vmem:[#allocation2 + $0x2a0] sm:$0xff] %v1268
    %1275 = vst [vmem:[#allocation2 + $0x2a8] sm:$0xff] %v1269
    %1276 = vst [vmem:[#allocation2 + $0x2b0] sm:$0xff] %v1270
    %1277 = vrot.lane.b32.xlu0 %v909, 62
    %v1278 = vpop.permute.xlu0 %1277
    %1279 = vrot.lane.b32.xlu0 %v910, 62
    %v1280 = vpop.permute.xlu0 %1279
    %1281 = vrot.lane.b32.xlu0 %v911, 62
    %v1282 = vpop.permute.xlu0 %1281
    %1283 = vrot.lane.b32.xlu0 %v912, 62
    %v1284 = vpop.permute.xlu0 %1283
    %v1285 = vsel %vm588, %v1278, %v1280
    %v1286 = vsel %vm588, %v1280, %v1282
    %v1287 = vsel %vm588, %v1282, %v1284
    %1291 = vst [vmem:[#allocation2 + $0x2c0] sm:$0xff] %v1285
    %1292 = vst [vmem:[#allocation2 + $0x2c8] sm:$0xff] %v1286
    %1293 = vst [vmem:[#allocation2 + $0x2d0] sm:$0xff] %v1287
    %1294 = vrot.lane.b32.xlu0 %v909, 61
    %v1295 = vpop.permute.xlu0 %1294
    %1296 = vrot.lane.b32.xlu0 %v910, 61
    %v1297 = vpop.permute.xlu0 %1296
    %1298 = vrot.lane.b32.xlu0 %v911, 61
    %v1299 = vpop.permute.xlu0 %1298
    %1300 = vrot.lane.b32.xlu0 %v912, 61
    %v1301 = vpop.permute.xlu0 %1300
    %v1302 = vsel %vm611, %v1295, %v1297
    %v1303 = vsel %vm611, %v1297, %v1299
    %v1304 = vsel %vm611, %v1299, %v1301
    %1308 = vst [vmem:[#allocation2 + $0x2e0] sm:$0xff] %v1302
    %1309 = vst [vmem:[#allocation2 + $0x2e8] sm:$0xff] %v1303
    %1310 = vst [vmem:[#allocation2 + $0x2f0] sm:$0xff] %v1304
    %1311 = vrot.lane.b32.xlu0 %v909, 60
    %v1312 = vpop.permute.xlu0 %1311
    %1313 = vrot.lane.b32.xlu0 %v910, 60
    %v1314 = vpop.permute.xlu0 %1313
    %1315 = vrot.lane.b32.xlu0 %v911, 60
    %v1316 = vpop.permute.xlu0 %1315
    %1317 = vrot.lane.b32.xlu0 %v912, 60
    %v1318 = vpop.permute.xlu0 %1317
    %v1319 = vsel %vm634, %v1312, %v1314
    %v1320 = vsel %vm634, %v1314, %v1316
    %v1321 = vsel %vm634, %v1316, %v1318
    %1325 = vst [vmem:[#allocation2 + $0x300] sm:$0xff] %v1319
    %1326 = vst [vmem:[#allocation2 + $0x308] sm:$0xff] %v1320
    %1327 = vst [vmem:[#allocation2 + $0x310] sm:$0xff] %v1321
    %v1328 = vld [vmem:[#allocation9] sm:$0xff]
    %v1329 = vld [vmem:[#allocation9 + $0x8] sm:$0xff]
    %v1330 = vld [vmem:[#allocation2] sm:$0xff]
    %v1331 = vld [vmem:[#allocation2 + $0x8] sm:$0xff]
    %v1332 = vld [vmem:[#allocation2 + $0x10] sm:$0xff]
    %v1333 = vld [vmem:[#allocation2 + $0x20] sm:$0xff]
    %v1334 = vld [vmem:[#allocation2 + $0x28] sm:$0xff]
    %v1335 = vld [vmem:[#allocation2 + $0x30] sm:$0xff]
    %v1336 = vld [vmem:[#allocation2 + $0x40] sm:$0xff]
    %v1337 = vld [vmem:[#allocation2 + $0x48] sm:$0xff]
    %v1338 = vld [vmem:[#allocation2 + $0x50] sm:$0xff]
    %v1339 = vld [vmem:[#allocation2 + $0x60] sm:$0xff]
    %v1340 = vld [vmem:[#allocation2 + $0x68] sm:$0xff]
    %v1341 = vld [vmem:[#allocation2 + $0x70] sm:$0xff]
    %v1342 = vld [vmem:[#allocation2 + $0x80] sm:$0xff]
    %v1343 = vld [vmem:[#allocation2 + $0x88] sm:$0xff]
    %v1344 = vld [vmem:[#allocation2 + $0x90] sm:$0xff]
    %v1345 = vld [vmem:[#allocation2 + $0xa0] sm:$0xff]
    %v1346 = vld [vmem:[#allocation2 + $0xa8] sm:$0xff]
    %v1347 = vld [vmem:[#allocation2 + $0xb0] sm:$0xff]
    %v1348 = vld [vmem:[#allocation2 + $0xc0] sm:$0xff]
    %v1349 = vld [vmem:[#allocation2 + $0xc8] sm:$0xff]
    %v1350 = vld [vmem:[#allocation2 + $0xd0] sm:$0xff]
    %v1351 = vld [vmem:[#allocation2 + $0xe0] sm:$0xff]
    %v1352 = vld [vmem:[#allocation2 + $0xe8] sm:$0xff]
    %v1353 = vld [vmem:[#allocation2 + $0xf0] sm:$0xff]
    %v1354 = vld [vmem:[#allocation2 + $0x100] sm:$0xff]
    %v1355 = vld [vmem:[#allocation2 + $0x108] sm:$0xff]
    %v1356 = vld [vmem:[#allocation2 + $0x110] sm:$0xff]
    %v1357 = vld [vmem:[#allocation2 + $0x120] sm:$0xff]
    %v1358 = vld [vmem:[#allocation2 + $0x128] sm:$0xff]
    %v1359 = vld [vmem:[#allocation2 + $0x130] sm:$0xff]
    %v1360 = vld [vmem:[#allocation2 + $0x140] sm:$0xff]
    %v1361 = vld [vmem:[#allocation2 + $0x148] sm:$0xff]
    %v1362 = vld [vmem:[#allocation2 + $0x150] sm:$0xff]
    %v1363 = vld [vmem:[#allocation2 + $0x160] sm:$0xff]
    %v1364 = vld [vmem:[#allocation2 + $0x168] sm:$0xff]
    %v1365 = vld [vmem:[#allocation2 + $0x170] sm:$0xff]
    %v1366 = vld [vmem:[#allocation2 + $0x180] sm:$0xff]
    %v1367 = vld [vmem:[#allocation2 + $0x188] sm:$0xff]
    %v1368 = vld [vmem:[#allocation2 + $0x190] sm:$0xff]
    %v1369 = vld [vmem:[#allocation2 + $0x1a0] sm:$0xff]
    %v1370 = vld [vmem:[#allocation2 + $0x1a8] sm:$0xff]
    %v1371 = vld [vmem:[#allocation2 + $0x1b0] sm:$0xff]
    %v1372 = vld [vmem:[#allocation2 + $0x1c0] sm:$0xff]
    %v1373 = vld [vmem:[#allocation2 + $0x1c8] sm:$0xff]
    %v1374 = vld [vmem:[#allocation2 + $0x1d0] sm:$0xff]
    %v1375 = vld [vmem:[#allocation2 + $0x1e0] sm:$0xff]
    %v1376 = vld [vmem:[#allocation2 + $0x1e8] sm:$0xff]
    %v1377 = vld [vmem:[#allocation2 + $0x1f0] sm:$0xff]
    %v1378 = vld [vmem:[#allocation2 + $0x200] sm:$0xff]
    %v1379 = vld [vmem:[#allocation2 + $0x208] sm:$0xff]
    %v1380 = vld [vmem:[#allocation2 + $0x210] sm:$0xff]
    %v1381 = vld [vmem:[#allocation2 + $0x220] sm:$0xff]
    %v1382 = vld [vmem:[#allocation2 + $0x228] sm:$0xff]
    %v1383 = vld [vmem:[#allocation2 + $0x230] sm:$0xff]
    %v1384 = vld [vmem:[#allocation2 + $0x240] sm:$0xff]
    %v1385 = vld [vmem:[#allocation2 + $0x248] sm:$0xff]
    %v1386 = vld [vmem:[#allocation2 + $0x250] sm:$0xff]
    %v1387 = vld [vmem:[#allocation2 + $0x260] sm:$0xff]
    %v1388 = vld [vmem:[#allocation2 + $0x268] sm:$0xff]
    %v1389 = vld [vmem:[#allocation2 + $0x270] sm:$0xff]
    %v1390 = vld [vmem:[#allocation2 + $0x280] sm:$0xff]
    %v1391 = vld [vmem:[#allocation2 + $0x288] sm:$0xff]
    %v1392 = vld [vmem:[#allocation2 + $0x290] sm:$0xff]
    %v1393 = vld [vmem:[#allocation2 + $0x2a0] sm:$0xff]
    %v1394 = vld [vmem:[#allocation2 + $0x2a8] sm:$0xff]
    %v1395 = vld [vmem:[#allocation2 + $0x2b0] sm:$0xff]
    %v1396 = vld [vmem:[#allocation2 + $0x2c0] sm:$0xff]
    %v1397 = vld [vmem:[#allocation2 + $0x2c8] sm:$0xff]
    %v1398 = vld [vmem:[#allocation2 + $0x2d0] sm:$0xff]
    %v1399 = vld [vmem:[#allocation2 + $0x2e0] sm:$0xff]
    %v1400 = vld [vmem:[#allocation2 + $0x2e8] sm:$0xff]
    %v1401 = vld [vmem:[#allocation2 + $0x2f0] sm:$0xff]
    %v1402 = vld [vmem:[#allocation2 + $0x300] sm:$0xff]
    %v1403 = vld [vmem:[#allocation2 + $0x308] sm:$0xff]
    %v1404 = vld [vmem:[#allocation2 + $0x310] sm:$0xff]
    %v1405 = vld [vmem:[#allocation11] sm:$0xff]
    %1407 = vset.pattern.permute.xlu0 0
    %1408 = vperm.xlu0 %1407, %v1405
    %v1409 = vpop.permute.xlu0 %1408
    %v1412 = vsel %vm755, %v1329, 0
    %1414 = vmatprep.subr.mxu0 %v1331
    %1415 = vmatpush1.msra.mxu0 %v1330
    %1416 = vmatprep.subr.mxu0 %v1334
    %1417 = vmatpush1.msra.mxu0 %v1333
    %1418 = vmatprep.subr.mxu0 %v1337
    %1419 = vmatpush1.msra.mxu0 %v1336
    %1420 = vmatprep.subr.mxu0 %v1340
    %1421 = vmatpush1.msra.mxu0 %v1339
    %1422 = vmatprep.subr.mxu0 %v1343
    %1423 = vmatpush1.msra.mxu0 %v1342
    %1424 = vmatprep.subr.mxu0 %v1346
    %1425 = vmatpush1.msra.mxu0 %v1345
    %1426 = vmatprep.subr.mxu0 %v1349
    %1427 = vmatpush1.msra.mxu0 %v1348
    %1428 = vmatprep.subr.mxu0 %v1352
    %1429 = vmatpush1.msra.mxu0 %v1351
    %1430 = vmatprep.subr.mxu0 %v1355
    %1431 = vmatpush1.msra.mxu0 %v1354
    %1432 = vmatprep.subr.mxu0 %v1358
    %1433 = vmatpush1.msra.mxu0 %v1357
    %1434 = vmatprep.subr.mxu0 %v1361
    %1435 = vmatpush1.msra.mxu0 %v1360
    %1436 = vmatprep.subr.mxu0 %v1364
    %1437 = vmatpush1.msra.mxu0 %v1363
    %1438 = vmatprep.subr.mxu0 %v1367
    %1439 = vmatpush1.msra.mxu0 %v1366
    %1440 = vmatprep.subr.mxu0 %v1370
    %1441 = vmatpush1.msra.mxu0 %v1369
    %1442 = vmatprep.subr.mxu0 %v1373
    %1443 = vmatpush1.msra.mxu0 %v1372
    %1444 = vmatprep.subr.mxu0 %v1376
    %1445 = vmatpush1.msra.mxu0 %v1375
    %1446 = vmatprep.subr.mxu0 %v1379
    %1447 = vmatpush1.msra.mxu0 %v1378
    %1448 = vmatprep.subr.mxu0 %v1382
    %1449 = vmatpush1.msra.mxu0 %v1381
    %1450 = vmatprep.subr.mxu0 %v1385
    %1451 = vmatpush1.msra.mxu0 %v1384
    %1452 = vmatprep.subr.mxu0 %v1388
    %1453 = vmatpush1.msra.mxu0 %v1387
    %1454 = vmatprep.subr.mxu0 %v1391
    %1455 = vmatpush1.msra.mxu0 %v1390
    %1456 = vmatprep.subr.mxu0 %v1394
    %1457 = vmatpush1.msra.mxu0 %v1393
    %1458 = vmatprep.subr.mxu0 %v1397
    %1459 = vmatpush1.msra.mxu0 %v1396
    %1460 = vmatprep.subr.mxu0 %v1400
    %1461 = vmatpush1.msra.mxu0 %v1399
    %1462 = vmatprep.subr.mxu0 %v1403
    %1463 = vmatpush1.msra.mxu0 %v1402
    %1464 = vmatprep.subr.mxu0 0.0
    %1465 = vmatpush1.msra.mxu0 0.0
    %1466 = vmatprep.subr.mxu0 0.0
    %1467 = vmatpush1.msra.mxu0 0.0
    %1468 = vmatprep.subr.mxu0 0.0
    %1469 = vmatpush1.msra.mxu0 0.0
    %1470 = vmatprep.subr.mxu0 0.0
    %1471 = vmatpush1.msra.mxu0 0.0
    %1472 = vmatprep.subr.mxu0 0.0
    %1473 = vmatpush1.msra.mxu0 0.0
    %1474 = vmatprep.subr.mxu0 0.0
    %1475 = vmatpush1.msra.mxu0 0.0
    %1476 = vmatprep.subr.mxu0 0.0
    %1477 = vmatpush1.msra.mxu0 0.0
    %1478 = vmatprep.mubr.f32.mxu0 %v1412
    %1479 = vmatmul.mubr.f32.gmra.mrb[0].mxu0 %v1328
    %v1480 = vpop.f32.mrb[0].mxu0
    %v1481 = vadd.f32 %v1409, %v1480
    %v1482 = vpop.f32.mrb[0].mxu0
    %v1483 = vadd.f32 %v1409, %v1482
    %1484 = vdwg.mxu0
    %1485 = vmatprep.subr.mxu0 0.0
    %1486 = vmatpush1.msra.mxu0 %v1332
    %1487 = vmatprep.subr.mxu0 0.0
    %1488 = vmatpush1.msra.mxu0 %v1335
    %1489 = vmatprep.subr.mxu0 0.0
    %1490 = vmatpush1.msra.mxu0 %v1338
    %1491 = vmatprep.subr.mxu0 0.0
    %1492 = vmatpush1.msra.mxu0 %v1341
    %1493 = vmatprep.subr.mxu0 0.0
    %1494 = vmatpush1.msra.mxu0 %v1344
    %1495 = vmatprep.subr.mxu0 0.0
    %1496 = vmatpush1.msra.mxu0 %v1347
    %1497 = vmatprep.subr.mxu0 0.0
    %1498 = vmatpush1.msra.mxu0 %v1350
    %1499 = vmatprep.subr.mxu0 0.0
    %1500 = vmatpush1.msra.mxu0 %v1353
    %1501 = vmatprep.subr.mxu0 0.0
    %1502 = vmatpush1.msra.mxu0 %v1356
    %1503 = vmatprep.subr.mxu0 0.0
    %1504 = vmatpush1.msra.mxu0 %v1359
    %1505 = vmatprep.subr.mxu0 0.0
    %1506 = vmatpush1.msra.mxu0 %v1362
    %1507 = vmatprep.subr.mxu0 0.0
    %1508 = vmatpush1.msra.mxu0 %v1365
    %1509 = vmatprep.subr.mxu0 0.0
    %1510 = vmatpush1.msra.mxu0 %v1368
    %1511 = vmatprep.subr.mxu0 0.0
    %1512 = vmatpush1.msra.mxu0 %v1371
    %1513 = vmatprep.subr.mxu0 0.0
    %1514 = vmatpush1.msra.mxu0 %v1374
    %1515 = vmatprep.subr.mxu0 0.0
    %1516 = vmatpush1.msra.mxu0 %v1377
    %1517 = vmatprep.subr.mxu0 0.0
    %1518 = vmatpush1.msra.mxu0 %v1380
    %1519 = vmatprep.subr.mxu0 0.0
    %1520 = vmatpush1.msra.mxu0 %v1383
    %1521 = vmatprep.subr.mxu0 0.0
    %1522 = vmatpush1.msra.mxu0 %v1386
    %1523 = vmatprep.subr.mxu0 0.0
    %1524 = vmatpush1.msra.mxu0 %v1389
    %1525 = vmatprep.subr.mxu0 0.0
    %1526 = vmatpush1.msra.mxu0 %v1392
    %1527 = vmatprep.subr.mxu0 0.0
    %1528 = vmatpush1.msra.mxu0 %v1395
    %1529 = vmatprep.subr.mxu0 0.0
    %1530 = vmatpush1.msra.mxu0 %v1398
    %1531 = vmatprep.subr.mxu0 0.0
    %1532 = vmatpush1.msra.mxu0 %v1401
    %1533 = vmatprep.subr.mxu0 0.0
    %1534 = vmatpush1.msra.mxu0 %v1404
    %1535 = vmatprep.subr.mxu0 0.0
    %1536 = vmatpush1.msra.mxu0 0.0
    %1537 = vmatprep.subr.mxu0 0.0
    %1538 = vmatpush1.msra.mxu0 0.0
    %1539 = vmatprep.subr.mxu0 0.0
    %1540 = vmatpush1.msra.mxu0 0.0
    %1541 = vmatprep.subr.mxu0 0.0
    %1542 = vmatpush1.msra.mxu0 0.0
    %1543 = vmatprep.subr.mxu0 0.0
    %1544 = vmatpush1.msra.mxu0 0.0
    %1545 = vmatprep.subr.mxu0 0.0
    %1546 = vmatpush1.msra.mxu0 0.0
    %1547 = vmatprep.subr.mxu0 0.0
    %1548 = vmatpush1.msra.mxu0 0.0
    %1549 = vmatprep.mubr.f32.mxu0 %v1412
    %1550 = vmatmul.mubr.f32.gmra.mrb[0].mxu0 %v1328
    %v1551 = vpop.f32.mrb[0].mxu0
    %v1552 = vadd.f32 %v1409, %v1551
    %v1553 = vpop.f32.mrb[0].mxu0
    %1554 = vdwg.mxu0
    %vm1555 = vcmp.gt.f32.partialorder %v1481, 0.0
    %vm1556 = vcmp.gt.f32.partialorder %v1483, 0.0
    %vm1557 = vcmp.gt.f32.partialorder %v1552, 0.0
    %v1558 = vmul.f32 %v1481, 0.01
    %v1559 = vmul.f32 %v1483, 0.01
    %v1560 = vmul.f32 %v1552, 0.01
    %v1561 = vsel %vm1555, %v1481, %v1558
    %v1562 = vsel %vm1556, %v1483, %v1559
    %v1563 = vsel %vm1557, %v1552, %v1560
    %1564 = vst [vmem:[#allocation12] sm:$0xff] %v1561
    %1565 = vst [vmem:[#allocation12 + $0x8] sm:$0xff] %v1562
    %1566 = vst [vmem:[#allocation12 + $0x10] sm:$0xff] %v1563
    // Predicated region
    $region42: #{tpu_custom_call.1} parent=1 // pred_check
      _
    $region43: #{tpu_custom_call.1} parent=1 // pred_check_branch
      %1568 = sbr.rel (0) target = $region45
    $region44: #{tpu_custom_call.1} parent=1 // pred_region
      %s1570 = ssub.s32 384, 384
      %1571 = vsyncadd [#allocation5], %s1570
      %s1573 = sshll.u32 [#allocation12], 4
      %s1574 = int_to_ptr.vmem [resolvable:$true] %s1573
      %1576 = dma.vmem_to_hbm [thread:$0]  %s1574, 384, %s5, [#allocation5]
    $region45: #{tpu_custom_call.1} parent=1 // pred_fallthru
      _
    // Predicated region
    $region46: #{tpu_custom_call.1} parent=1 // pred_check
      _
    $region47: #{tpu_custom_call.1} parent=1 // pred_check_branch
      %1578 = sbr.rel (0) target = $region49
    $region48: #{tpu_custom_call.1} parent=1 // pred_region
      %1579 = dma.done [#allocation5], 384
    $region49: #{tpu_custom_call.1} parent=1 // pred_fallthru
      _
    %1580 = vsyncpa [#allocation4], 1
    %1581 = vsyncpa [#allocation7], 1
    %1582 = vsyncpa [#allocation10], 1
    %1583 = vsyncpa [#allocation5], 1

// kernel: tpu_custom_call.1
$region0: #{tpu_custom_call.1}
  #allocation0 [shape = 'u32[]', space=smem, size = 0x4, offset = 0x4, fixed_abs, tag = 'smem constant byte address 0x4 - core index']
  #allocation1 [shape = 'u32[144,128]{1,0:T(1,128)}', space=vmem, size = 0x12000, scoped, tag = 'internal scratch']
  #allocation2 [shape = 'f32[200,512]{1,0:T(8,128)}', space=vmem, size = 0x64000, scoped, tag = 'scratch operand']
  %s0 = inlined_call_operand.hbm [shape: f32[2,8,256], index: 0, kind: input, shape index: {}]
  %s1 = inlined_call_operand.hbm [shape: f32[8,200], index: 1, kind: input, shape index: {}]
  %s2 = inlined_call_operand.hbm [shape: f32[8,1], index: 2, kind: input, shape index: {}]
  %s3 = inlined_call_operand.hbm [shape: f32[8,200], index: 3, kind: input, shape index: {}]
  %s4 = inlined_call_operand.hbm [shape: f32[8,1], index: 4, kind: input, shape index: {}]
  %s5 = inlined_call_operand.hbm [shape: f32[1,8,384], index: 5, kind: output, shape index: {}]
  %s6 = sld [smem:[#allocation0]]
  $region50: #{tpu_custom_call.1} parent=0
    _
  %s8 = ssub.s32 1, %s6
  %s9 = scalar_select 0, %s8, %s6
  $region1: #{tpu_custom_call.1} parent=0
    #allocation3 [shape = 'u8[16384]{0}', space=vmem, size = 0x4000, scoped, tag = 'input window, operand 0, single buffered']
    #allocation4 [shape = 's32[1]{0}', space=sflag, size = 0x4, scoped, tag = 'scoped memory for tpu_custom_call.1']
    #allocation5 [shape = 's32[1]{0}', space=sflag, size = 0x4, scoped, tag = 'scoped memory for tpu_custom_call.1']
    #allocation6 [shape = 'u8[8192]{0}', space=vmem, size = 0x2000, scoped, tag = 'input window, operand 1, single buffered']
    #allocation7 [shape = 's32[1]{0}', space=sflag, size = 0x4, scoped, tag = 'scoped memory for tpu_custom_call.1']
    #allocation8 [shape = 'u8[4096]{0}', space=vmem, size = 0x1000, scoped, tag = 'input window, operand 2, single buffered']
    #allocation9 [shape = 'u8[8192]{0}', space=vmem, size = 0x2000, scoped, tag = 'input window, operand 3, single buffered']
    #allocation10 [shape = 's32[1]{0}', space=sflag, size = 0x4, scoped, tag = 'scoped memory for tpu_custom_call.1']
    #allocation11 [shape = 'u8[4096]{0}', space=vmem, size = 0x1000, scoped, tag = 'input window, operand 4, single buffered']
    #allocation12 [shape = 'u8[12288]{0}', space=vmem, size = 0x3000, scoped, tag = 'output window, operand 0, single buffered']
    %10 = vsyncpa [#allocation4], 0
    %11 = vsyncpa [#allocation7], 0
    %12 = vsyncpa [#allocation10], 0
    %13 = vsyncpa [#allocation5], 0
    // Predicated region
    $region2: #{tpu_custom_call.1} parent=1 // pred_check
      _
    $region3: #{tpu_custom_call.1} parent=1 // pred_check_branch
      %15 = sbr.rel (0) target = $region5
    $region4: #{tpu_custom_call.1} parent=1 // pred_region
      %s17 = ssub.s32 512, 512
      %18 = vsyncadd [#allocation4], %s17
      %s19 = sshll.u32 [#allocation3], 4
      %s20 = int_to_ptr.vmem [resolvable:$true] %s19
      %25 = dma.hbm_to_vmem [thread:$0]  %s0, 512, %s20, [#allocation4], 256, 256, 16
    $region5: #{tpu_custom_call.1} parent=1 // pred_fallthru
      _
    // Predicated region
    $region6: #{tpu_custom_call.1} parent=1 // pred_check
      _
    $region7: #{tpu_custom_call.1} parent=1 // pred_check_branch
      %27 = sbr.rel (0) target = $region9
    $region8: #{tpu_custom_call.1} parent=1 // pred_region
      %s29 = ssub.s32 256, 256
      %30 = vsyncadd [#allocation7], %s29
      %s32 = sshll.u32 [#allocation6], 4
      %s33 = int_to_ptr.vmem [resolvable:$true] %s32
      %35 = dma.hbm_to_vmem [thread:$0]  %s1, 256, %s33, [#allocation7]
    $region9: #{tpu_custom_call.1} parent=1 // pred_fallthru
      _
    // Predicated region
    $region10: #{tpu_custom_call.1} parent=1 // pred_check
      _
    $region11: #{tpu_custom_call.1} parent=1 // pred_check_branch
      %37 = sbr.rel (0) target = $region13
    $region12: #{tpu_custom_call.1} parent=1 // pred_region
      %s39 = ssub.s32 128, 128
      %40 = vsyncadd [#allocation7], %s39
      %s42 = sshll.u32 [#allocation8], 4
      %s43 = int_to_ptr.vmem [resolvable:$true] %s42
      %45 = dma.hbm_to_vmem [thread:$0]  %s2, 128, %s43, [#allocation7]
    $region13: #{tpu_custom_call.1} parent=1 // pred_fallthru
      _
    // Predicated region
    $region14: #{tpu_custom_call.1} parent=1 // pred_check
      _
    $region15: #{tpu_custom_call.1} parent=1 // pred_check_branch
      %47 = sbr.rel (0) target = $region17
    $region16: #{tpu_custom_call.1} parent=1 // pred_region
      %s49 = ssub.s32 256, 256
      %50 = vsyncadd [#allocation10], %s49
      %s52 = sshll.u32 [#allocation9], 4
      %s53 = int_to_ptr.vmem [resolvable:$true] %s52
      %55 = dma.hbm_to_vmem [thread:$0]  %s3, 256, %s53, [#allocation10]
    $region17: #{tpu_custom_call.1} parent=1 // pred_fallthru
      _
    // Predicated region
    $region18: #{tpu_custom_call.1} parent=1 // pred_check
      _
    $region19: #{tpu_custom_call.1} parent=1 // pred_check_branch
      %57 = sbr.rel (0) target = $region21
    $region20: #{tpu_custom_call.1} parent=1 // pred_region
      %s59 = ssub.s32 128, 128
      %60 = vsyncadd [#allocation10], %s59
      %s62 = sshll.u32 [#allocation11], 4
      %s63 = int_to_ptr.vmem [resolvable:$true] %s62
      %65 = dma.hbm_to_vmem [thread:$0]  %s4, 128, %s63, [#allocation10]
    $region21: #{tpu_custom_call.1} parent=1 // pred_fallthru
      _
    // Predicated region
    $region22: #{tpu_custom_call.1} parent=1 // pred_check
      _
    $region23: #{tpu_custom_call.1} parent=1 // pred_check_branch
      %67 = sbr.rel (0) target = $region25
    $region24: #{tpu_custom_call.1} parent=1 // pred_region
      %68 = dma.done [#allocation4], 512
    $region25: #{tpu_custom_call.1} parent=1 // pred_fallthru
      _
    // Predicated region
    $region26: #{tpu_custom_call.1} parent=1 // pred_check
      _
    $region27: #{tpu_custom_call.1} parent=1 // pred_check_branch
      %70 = sbr.rel (0) target = $region29
    $region28: #{tpu_custom_call.1} parent=1 // pred_region
      %71 = dma.done [#allocation7], 256
    $region29: #{tpu_custom_call.1} parent=1 // pred_fallthru
      _
    // Predicated region
    $region30: #{tpu_custom_call.1} parent=1 // pred_check
      _
    $region31: #{tpu_custom_call.1} parent=1 // pred_check_branch
      %73 = sbr.rel (0) target = $region33
    $region32: #{tpu_custom_call.1} parent=1 // pred_region
      %74 = dma.done [#allocation7], 128
    $region33: #{tpu_custom_call.1} parent=1 // pred_fallthru
      _
    // Predicated region
    $region34: #{tpu_custom_call.1} parent=1 // pred_check
      _
    $region35: #{tpu_custom_call.1} parent=1 // pred_check_branch
      %76 = sbr.rel (0) target = $region37
    $region36: #{tpu_custom_call.1} parent=1 // pred_region
      %77 = dma.done [#allocation10], 256
    $region37: #{tpu_custom_call.1} parent=1 // pred_fallthru
      _
    // Predicated region
    $region38: #{tpu_custom_call.1} parent=1 // pred_check
      _
    $region39: #{tpu_custom_call.1} parent=1 // pred_check_branch
      %79 = sbr.rel (0) target = $region41
    $region40: #{tpu_custom_call.1} parent=1 // pred_region
      %80 = dma.done [#allocation10], 128
    $region41: #{tpu_custom_call.1} parent=1 // pred_fallthru
      _
    %v81 = vld [vmem:[#allocation3] sm:$0xff]
    %v82 = vld [vmem:[#allocation3 + $0x8] sm:$0xff]
    %s83 = scalar_lea.vmem [#allocation3], 16
    %v84 = vld [vmem:[%s83] sm:$0xff]
    %v85 = vld [vmem:[%s83 + $0x8] sm:$0xff]
    %86 = vst [vmem:[#allocation2] sm:$0xff] %v81
    %87 = vst [vmem:[#allocation2 + $0x8] sm:$0xff] %v82
    %88 = vst [vmem:[#allocation2 + $0x10] sm:$0xff] %v84
    %89 = vst [vmem:[#allocation2 + $0x18] sm:$0xff] %v85
    %95 = vrot.lane.b32.xlu0 %v81, 127
    %v96 = vpop.permute.xlu0 %95
    %97 = vrot.lane.b32.xlu0 %v82, 127
    %v98 = vpop.permute.xlu0 %97
    %99 = vrot.lane.b32.xlu0 %v84, 127
    %v100 = vpop.permute.xlu0 %99
    %101 = vrot.lane.b32.xlu0 %v85, 127
    %v102 = vpop.permute.xlu0 %101
    %103 = vrot.lane.b32.xlu0 0.0, 127
    %v104 = vpop.permute.xlu0 %103
    %vm105 = vcmask 1039360
    %v106 = vsel %vm105, %v96, %v98
    %v107 = vsel %vm105, %v98, %v100
    %v108 = vsel %vm105, %v100, %v102
    %v109 = vsel %vm105, %v102, %v104
    %114 = vst [vmem:[#allocation2 + $0x20] sm:$0xff] %v106
    %115 = vst [vmem:[#allocation2 + $0x28] sm:$0xff] %v107
    %116 = vst [vmem:[#allocation2 + $0x30] sm:$0xff] %v108
    %117 = vst [vmem:[#allocation2 + $0x38] sm:$0xff] %v109
    %118 = vrot.lane.b32.xlu0 %v81, 126
    %v119 = vpop.permute.xlu0 %118
    %120 = vrot.lane.b32.xlu0 %v82, 126
    %v121 = vpop.permute.xlu0 %120
    %122 = vrot.lane.b32.xlu0 %v84, 126
    %v123 = vpop.permute.xlu0 %122
    %124 = vrot.lane.b32.xlu0 %v85, 126
    %v125 = vpop.permute.xlu0 %124
    %126 = vrot.lane.b32.xlu0 0.0, 126
    %v127 = vpop.permute.xlu0 %126
    %vm128 = vcmask 1031168
    %v129 = vsel %vm128, %v119, %v121
    %v130 = vsel %vm128, %v121, %v123
    %v131 = vsel %vm128, %v123, %v125
    %v132 = vsel %vm128, %v125, %v127
    %137 = vst [vmem:[#allocation2 + $0x40] sm:$0xff] %v129
    %138 = vst [vmem:[#allocation2 + $0x48] sm:$0xff] %v130
    %139 = vst [vmem:[#allocation2 + $0x50] sm:$0xff] %v131
    %140 = vst [vmem:[#allocation2 + $0x58] sm:$0xff] %v132
    %141 = vrot.lane.b32.xlu0 %v81, 125
    %v142 = vpop.permute.xlu0 %141
    %143 = vrot.lane.b32.xlu0 %v82, 125
    %v144 = vpop.permute.xlu0 %143
    %145 = vrot.lane.b32.xlu0 %v84, 125
    %v146 = vpop.permute.xlu0 %145
    %147 = vrot.lane.b32.xlu0 %v85, 125
    %v148 = vpop.permute.xlu0 %147
    %149 = vrot.lane.b32.xlu0 0.0, 125
    %v150 = vpop.permute.xlu0 %149
    %vm151 = vcmask 1022976
    %v152 = vsel %vm151, %v142, %v144
    %v153 = vsel %vm151, %v144, %v146
    %v154 = vsel %vm151, %v146, %v148
    %v155 = vsel %vm151, %v148, %v150
    %160 = vst [vmem:[#allocation2 + $0x60] sm:$0xff] %v152
    %161 = vst [vmem:[#allocation2 + $0x68] sm:$0xff] %v153
    %162 = vst [vmem:[#allocation2 + $0x70] sm:$0xff] %v154
    %163 = vst [vmem:[#allocation2 + $0x78] sm:$0xff] %v155
    %164 = vrot.lane.b32.xlu0 %v81, 124
    %v165 = vpop.permute.xlu0 %164
    %166 = vrot.lane.b32.xlu0 %v82, 124
    %v167 = vpop.permute.xlu0 %166
    %168 = vrot.lane.b32.xlu0 %v84, 124
    %v169 = vpop.permute.xlu0 %168
    %170 = vrot.lane.b32.xlu0 %v85, 124
    %v171 = vpop.permute.xlu0 %170
    %172 = vrot.lane.b32.xlu0 0.0, 124
    %v173 = vpop.permute.xlu0 %172
    %vm174 = vcmask 1014784
    %v175 = vsel %vm174, %v165, %v167
    %v176 = vsel %vm174, %v167, %v169
    %v177 = vsel %vm174, %v169, %v171
    %v178 = vsel %vm174, %v171, %v173
    %183 = vst [vmem:[#allocation2 + $0x80] sm:$0xff] %v175
    %184 = vst [vmem:[#allocation2 + $0x88] sm:$0xff] %v176
    %185 = vst [vmem:[#allocation2 + $0x90] sm:$0xff] %v177
    %186 = vst [vmem:[#allocation2 + $0x98] sm:$0xff] %v178
    %187 = vrot.lane.b32.xlu0 %v81, 112
    %v188 = vpop.permute.xlu0 %187
    %189 = vrot.lane.b32.xlu0 %v82, 112
    %v190 = vpop.permute.xlu0 %189
    %191 = vrot.lane.b32.xlu0 %v84, 112
    %v192 = vpop.permute.xlu0 %191
    %193 = vrot.lane.b32.xlu0 %v85, 112
    %v194 = vpop.permute.xlu0 %193
    %195 = vrot.lane.b32.xlu0 0.0, 112
    %v196 = vpop.permute.xlu0 %195
    %vm197 = vcmask 916480
    %v198 = vsel %vm197, %v188, %v190
    %v199 = vsel %vm197, %v190, %v192
    %v200 = vsel %vm197, %v192, %v194
    %v201 = vsel %vm197, %v194, %v196
    %206 = vst [vmem:[#allocation2 + $0xa0] sm:$0xff] %v198
    %207 = vst [vmem:[#allocation2 + $0xa8] sm:$0xff] %v199
    %208 = vst [vmem:[#allocation2 + $0xb0] sm:$0xff] %v200
    %209 = vst [vmem:[#allocation2 + $0xb8] sm:$0xff] %v201
    %210 = vrot.lane.b32.xlu0 %v81, 111
    %v211 = vpop.permute.xlu0 %210
    %212 = vrot.lane.b32.xlu0 %v82, 111
    %v213 = vpop.permute.xlu0 %212
    %214 = vrot.lane.b32.xlu0 %v84, 111
    %v215 = vpop.permute.xlu0 %214
    %216 = vrot.lane.b32.xlu0 %v85, 111
    %v217 = vpop.permute.xlu0 %216
    %218 = vrot.lane.b32.xlu0 0.0, 111
    %v219 = vpop.permute.xlu0 %218
    %vm220 = vcmask 908288
    %v221 = vsel %vm220, %v211, %v213
    %v222 = vsel %vm220, %v213, %v215
    %v223 = vsel %vm220, %v215, %v217
    %v224 = vsel %vm220, %v217, %v219
    %229 = vst [vmem:[#allocation2 + $0xc0] sm:$0xff] %v221
    %230 = vst [vmem:[#allocation2 + $0xc8] sm:$0xff] %v222
    %231 = vst [vmem:[#allocation2 + $0xd0] sm:$0xff] %v223
    %232 = vst [vmem:[#allocation2 + $0xd8] sm:$0xff] %v224
    %233 = vrot.lane.b32.xlu0 %v81, 110
    %v234 = vpop.permute.xlu0 %233
    %235 = vrot.lane.b32.xlu0 %v82, 110
    %v236 = vpop.permute.xlu0 %235
    %237 = vrot.lane.b32.xlu0 %v84, 110
    %v238 = vpop.permute.xlu0 %237
    %239 = vrot.lane.b32.xlu0 %v85, 110
    %v240 = vpop.permute.xlu0 %239
    %241 = vrot.lane.b32.xlu0 0.0, 110
    %v242 = vpop.permute.xlu0 %241
    %vm243 = vcmask 900096
    %v244 = vsel %vm243, %v234, %v236
    %v245 = vsel %vm243, %v236, %v238
    %v246 = vsel %vm243, %v238, %v240
    %v247 = vsel %vm243, %v240, %v242
    %252 = vst [vmem:[#allocation2 + $0xe0] sm:$0xff] %v244
    %253 = vst [vmem:[#allocation2 + $0xe8] sm:$0xff] %v245
    %254 = vst [vmem:[#allocation2 + $0xf0] sm:$0xff] %v246
    %255 = vst [vmem:[#allocation2 + $0xf8] sm:$0xff] %v247
    %256 = vrot.lane.b32.xlu0 %v81, 109
    %v257 = vpop.permute.xlu0 %256
    %258 = vrot.lane.b32.xlu0 %v82, 109
    %v259 = vpop.permute.xlu0 %258
    %260 = vrot.lane.b32.xlu0 %v84, 109
    %v261 = vpop.permute.xlu0 %260
    %262 = vrot.lane.b32.xlu0 %v85, 109
    %v263 = vpop.permute.xlu0 %262
    %264 = vrot.lane.b32.xlu0 0.0, 109
    %v265 = vpop.permute.xlu0 %264
    %vm266 = vcmask 891904
    %v267 = vsel %vm266, %v257, %v259
    %v268 = vsel %vm266, %v259, %v261
    %v269 = vsel %vm266, %v261, %v263
    %v270 = vsel %vm266, %v263, %v265
    %275 = vst [vmem:[#allocation2 + $0x100] sm:$0xff] %v267
    %276 = vst [vmem:[#allocation2 + $0x108] sm:$0xff] %v268
    %277 = vst [vmem:[#allocation2 + $0x110] sm:$0xff] %v269
    %278 = vst [vmem:[#allocation2 + $0x118] sm:$0xff] %v270
    %279 = vrot.lane.b32.xlu0 %v81, 108
    %v280 = vpop.permute.xlu0 %279
    %281 = vrot.lane.b32.xlu0 %v82, 108
    %v282 = vpop.permute.xlu0 %281
    %283 = vrot.lane.b32.xlu0 %v84, 108
    %v284 = vpop.permute.xlu0 %283
    %285 = vrot.lane.b32.xlu0 %v85, 108
    %v286 = vpop.permute.xlu0 %285
    %287 = vrot.lane.b32.xlu0 0.0, 108
    %v288 = vpop.permute.xlu0 %287
    %vm289 = vcmask 883712
    %v290 = vsel %vm289, %v280, %v282
    %v291 = vsel %vm289, %v282, %v284
    %v292 = vsel %vm289, %v284, %v286
    %v293 = vsel %vm289, %v286, %v288
    %298 = vst [vmem:[#allocation2 + $0x120] sm:$0xff] %v290
    %299 = vst [vmem:[#allocation2 + $0x128] sm:$0xff] %v291
    %300 = vst [vmem:[#allocation2 + $0x130] sm:$0xff] %v292
    %301 = vst [vmem:[#allocation2 + $0x138] sm:$0xff] %v293
    %302 = vrot.lane.b32.xlu0 %v81, 96
    %v303 = vpop.permute.xlu0 %302
    %304 = vrot.lane.b32.xlu0 %v82, 96
    %v305 = vpop.permute.xlu0 %304
    %306 = vrot.lane.b32.xlu0 %v84, 96
    %v307 = vpop.permute.xlu0 %306
    %308 = vrot.lane.b32.xlu0 %v85, 96
    %v309 = vpop.permute.xlu0 %308
    %310 = vrot.lane.b32.xlu0 0.0, 96
    %v311 = vpop.permute.xlu0 %310
    %vm312 = vcmask 785408
    %v313 = vsel %vm312, %v303, %v305
    %v314 = vsel %vm312, %v305, %v307
    %v315 = vsel %vm312, %v307, %v309
    %v316 = vsel %vm312, %v309, %v311
    %321 = vst [vmem:[#allocation2 + $0x140] sm:$0xff] %v313
    %322 = vst [vmem:[#allocation2 + $0x148] sm:$0xff] %v314
    %323 = vst [vmem:[#allocation2 + $0x150] sm:$0xff] %v315
    %324 = vst [vmem:[#allocation2 + $0x158] sm:$0xff] %v316
    %325 = vrot.lane.b32.xlu0 %v81, 95
    %v326 = vpop.permute.xlu0 %325
    %327 = vrot.lane.b32.xlu0 %v82, 95
    %v328 = vpop.permute.xlu0 %327
    %329 = vrot.lane.b32.xlu0 %v84, 95
    %v330 = vpop.permute.xlu0 %329
    %331 = vrot.lane.b32.xlu0 %v85, 95
    %v332 = vpop.permute.xlu0 %331
    %333 = vrot.lane.b32.xlu0 0.0, 95
    %v334 = vpop.permute.xlu0 %333
    %vm335 = vcmask 777216
    %v336 = vsel %vm335, %v326, %v328
    %v337 = vsel %vm335, %v328, %v330
    %v338 = vsel %vm335, %v330, %v332
    %v339 = vsel %vm335, %v332, %v334
    %344 = vst [vmem:[#allocation2 + $0x160] sm:$0xff] %v336
    %345 = vst [vmem:[#allocation2 + $0x168] sm:$0xff] %v337
    %346 = vst [vmem:[#allocation2 + $0x170] sm:$0xff] %v338
    %347 = vst [vmem:[#allocation2 + $0x178] sm:$0xff] %v339
    %348 = vrot.lane.b32.xlu0 %v81, 94
    %v349 = vpop.permute.xlu0 %348
    %350 = vrot.lane.b32.xlu0 %v82, 94
    %v351 = vpop.permute.xlu0 %350
    %352 = vrot.lane.b32.xlu0 %v84, 94
    %v353 = vpop.permute.xlu0 %352
    %354 = vrot.lane.b32.xlu0 %v85, 94
    %v355 = vpop.permute.xlu0 %354
    %356 = vrot.lane.b32.xlu0 0.0, 94
    %v357 = vpop.permute.xlu0 %356
    %vm358 = vcmask 769024
    %v359 = vsel %vm358, %v349, %v351
    %v360 = vsel %vm358, %v351, %v353
    %v361 = vsel %vm358, %v353, %v355
    %v362 = vsel %vm358, %v355, %v357
    %367 = vst [vmem:[#allocation2 + $0x180] sm:$0xff] %v359
    %368 = vst [vmem:[#allocation2 + $0x188] sm:$0xff] %v360
    %369 = vst [vmem:[#allocation2 + $0x190] sm:$0xff] %v361
    %370 = vst [vmem:[#allocation2 + $0x198] sm:$0xff] %v362
    %371 = vrot.lane.b32.xlu0 %v81, 93
    %v372 = vpop.permute.xlu0 %371
    %373 = vrot.lane.b32.xlu0 %v82, 93
    %v374 = vpop.permute.xlu0 %373
    %375 = vrot.lane.b32.xlu0 %v84, 93
    %v376 = vpop.permute.xlu0 %375
    %377 = vrot.lane.b32.xlu0 %v85, 93
    %v378 = vpop.permute.xlu0 %377
    %379 = vrot.lane.b32.xlu0 0.0, 93
    %v380 = vpop.permute.xlu0 %379
    %vm381 = vcmask 760832
    %v382 = vsel %vm381, %v372, %v374
    %v383 = vsel %vm381, %v374, %v376
    %v384 = vsel %vm381, %v376, %v378
    %v385 = vsel %vm381, %v378, %v380
    %390 = vst [vmem:[#allocation2 + $0x1a0] sm:$0xff] %v382
    %391 = vst [vmem:[#allocation2 + $0x1a8] sm:$0xff] %v383
    %392 = vst [vmem:[#allocation2 + $0x1b0] sm:$0xff] %v384
    %393 = vst [vmem:[#allocation2 + $0x1b8] sm:$0xff] %v385
    %394 = vrot.lane.b32.xlu0 %v81, 92
    %v395 = vpop.permute.xlu0 %394
    %396 = vrot.lane.b32.xlu0 %v82, 92
    %v397 = vpop.permute.xlu0 %396
    %398 = vrot.lane.b32.xlu0 %v84, 92
    %v399 = vpop.permute.xlu0 %398
    %400 = vrot.lane.b32.xlu0 %v85, 92
    %v401 = vpop.permute.xlu0 %400
    %402 = vrot.lane.b32.xlu0 0.0, 92
    %v403 = vpop.permute.xlu0 %402
    %vm404 = vcmask 752640
    %v405 = vsel %vm404, %v395, %v397
    %v406 = vsel %vm404, %v397, %v399
    %v407 = vsel %vm404, %v399, %v401
    %v408 = vsel %vm404, %v401, %v403
    %413 = vst [vmem:[#allocation2 + $0x1c0] sm:$0xff] %v405
    %414 = vst [vmem:[#allocation2 + $0x1c8] sm:$0xff] %v406
    %415 = vst [vmem:[#allocation2 + $0x1d0] sm:$0xff] %v407
    %416 = vst [vmem:[#allocation2 + $0x1d8] sm:$0xff] %v408
    %417 = vrot.lane.b32.xlu0 %v81, 80
    %v418 = vpop.permute.xlu0 %417
    %419 = vrot.lane.b32.xlu0 %v82, 80
    %v420 = vpop.permute.xlu0 %419
    %421 = vrot.lane.b32.xlu0 %v84, 80
    %v422 = vpop.permute.xlu0 %421
    %423 = vrot.lane.b32.xlu0 %v85, 80
    %v424 = vpop.permute.xlu0 %423
    %425 = vrot.lane.b32.xlu0 0.0, 80
    %v426 = vpop.permute.xlu0 %425
    %vm427 = vcmask 654336
    %v428 = vsel %vm427, %v418, %v420
    %v429 = vsel %vm427, %v420, %v422
    %v430 = vsel %vm427, %v422, %v424
    %v431 = vsel %vm427, %v424, %v426
    %436 = vst [vmem:[#allocation2 + $0x1e0] sm:$0xff] %v428
    %437 = vst [vmem:[#allocation2 + $0x1e8] sm:$0xff] %v429
    %438 = vst [vmem:[#allocation2 + $0x1f0] sm:$0xff] %v430
    %439 = vst [vmem:[#allocation2 + $0x1f8] sm:$0xff] %v431
    %440 = vrot.lane.b32.xlu0 %v81, 79
    %v441 = vpop.permute.xlu0 %440
    %442 = vrot.lane.b32.xlu0 %v82, 79
    %v443 = vpop.permute.xlu0 %442
    %444 = vrot.lane.b32.xlu0 %v84, 79
    %v445 = vpop.permute.xlu0 %444
    %446 = vrot.lane.b32.xlu0 %v85, 79
    %v447 = vpop.permute.xlu0 %446
    %448 = vrot.lane.b32.xlu0 0.0, 79
    %v449 = vpop.permute.xlu0 %448
    %vm450 = vcmask 646144
    %v451 = vsel %vm450, %v441, %v443
    %v452 = vsel %vm450, %v443, %v445
    %v453 = vsel %vm450, %v445, %v447
    %v454 = vsel %vm450, %v447, %v449
    %459 = vst [vmem:[#allocation2 + $0x200] sm:$0xff] %v451
    %460 = vst [vmem:[#allocation2 + $0x208] sm:$0xff] %v452
    %461 = vst [vmem:[#allocation2 + $0x210] sm:$0xff] %v453
    %462 = vst [vmem:[#allocation2 + $0x218] sm:$0xff] %v454
    %463 = vrot.lane.b32.xlu0 %v81, 78
    %v464 = vpop.permute.xlu0 %463
    %465 = vrot.lane.b32.xlu0 %v82, 78
    %v466 = vpop.permute.xlu0 %465
    %467 = vrot.lane.b32.xlu0 %v84, 78
    %v468 = vpop.permute.xlu0 %467
    %469 = vrot.lane.b32.xlu0 %v85, 78
    %v470 = vpop.permute.xlu0 %469
    %471 = vrot.lane.b32.xlu0 0.0, 78
    %v472 = vpop.permute.xlu0 %471
    %vm473 = vcmask 637952
    %v474 = vsel %vm473, %v464, %v466
    %v475 = vsel %vm473, %v466, %v468
    %v476 = vsel %vm473, %v468, %v470
    %v477 = vsel %vm473, %v470, %v472
    %482 = vst [vmem:[#allocation2 + $0x220] sm:$0xff] %v474
    %483 = vst [vmem:[#allocation2 + $0x228] sm:$0xff] %v475
    %484 = vst [vmem:[#allocation2 + $0x230] sm:$0xff] %v476
    %485 = vst [vmem:[#allocation2 + $0x238] sm:$0xff] %v477
    %486 = vrot.lane.b32.xlu0 %v81, 77
    %v487 = vpop.permute.xlu0 %486
    %488 = vrot.lane.b32.xlu0 %v82, 77
    %v489 = vpop.permute.xlu0 %488
    %490 = vrot.lane.b32.xlu0 %v84, 77
    %v491 = vpop.permute.xlu0 %490
    %492 = vrot.lane.b32.xlu0 %v85, 77
    %v493 = vpop.permute.xlu0 %492
    %494 = vrot.lane.b32.xlu0 0.0, 77
    %v495 = vpop.permute.xlu0 %494
    %vm496 = vcmask 629760
    %v497 = vsel %vm496, %v487, %v489
    %v498 = vsel %vm496, %v489, %v491
    %v499 = vsel %vm496, %v491, %v493
    %v500 = vsel %vm496, %v493, %v495
    %505 = vst [vmem:[#allocation2 + $0x240] sm:$0xff] %v497
    %506 = vst [vmem:[#allocation2 + $0x248] sm:$0xff] %v498
    %507 = vst [vmem:[#allocation2 + $0x250] sm:$0xff] %v499
    %508 = vst [vmem:[#allocation2 + $0x258] sm:$0xff] %v500
    %509 = vrot.lane.b32.xlu0 %v81, 76
    %v510 = vpop.permute.xlu0 %509
    %511 = vrot.lane.b32.xlu0 %v82, 76
    %v512 = vpop.permute.xlu0 %511
    %513 = vrot.lane.b32.xlu0 %v84, 76
    %v514 = vpop.permute.xlu0 %513
    %515 = vrot.lane.b32.xlu0 %v85, 76
    %v516 = vpop.permute.xlu0 %515
    %517 = vrot.lane.b32.xlu0 0.0, 76
    %v518 = vpop.permute.xlu0 %517
    %vm519 = vcmask 621568
    %v520 = vsel %vm519, %v510, %v512
    %v521 = vsel %vm519, %v512, %v514
    %v522 = vsel %vm519, %v514, %v516
    %v523 = vsel %vm519, %v516, %v518
    %528 = vst [vmem:[#allocation2 + $0x260] sm:$0xff] %v520
    %529 = vst [vmem:[#allocation2 + $0x268] sm:$0xff] %v521
    %530 = vst [vmem:[#allocation2 + $0x270] sm:$0xff] %v522
    %531 = vst [vmem:[#allocation2 + $0x278] sm:$0xff] %v523
    %532 = vrot.lane.b32.xlu0 %v81, 64
    %v533 = vpop.permute.xlu0 %532
    %534 = vrot.lane.b32.xlu0 %v82, 64
    %v535 = vpop.permute.xlu0 %534
    %536 = vrot.lane.b32.xlu0 %v84, 64
    %v537 = vpop.permute.xlu0 %536
    %538 = vrot.lane.b32.xlu0 %v85, 64
    %v539 = vpop.permute.xlu0 %538
    %540 = vrot.lane.b32.xlu0 0.0, 64
    %v541 = vpop.permute.xlu0 %540
    %vm542 = vcmask 523264
    %v543 = vsel %vm542, %v533, %v535
    %v544 = vsel %vm542, %v535, %v537
    %v545 = vsel %vm542, %v537, %v539
    %v546 = vsel %vm542, %v539, %v541
    %551 = vst [vmem:[#allocation2 + $0x280] sm:$0xff] %v543
    %552 = vst [vmem:[#allocation2 + $0x288] sm:$0xff] %v544
    %553 = vst [vmem:[#allocation2 + $0x290] sm:$0xff] %v545
    %554 = vst [vmem:[#allocation2 + $0x298] sm:$0xff] %v546
    %555 = vrot.lane.b32.xlu0 %v81, 63
    %v556 = vpop.permute.xlu0 %555
    %557 = vrot.lane.b32.xlu0 %v82, 63
    %v558 = vpop.permute.xlu0 %557
    %559 = vrot.lane.b32.xlu0 %v84, 63
    %v560 = vpop.permute.xlu0 %559
    %561 = vrot.lane.b32.xlu0 %v85, 63
    %v562 = vpop.permute.xlu0 %561
    %563 = vrot.lane.b32.xlu0 0.0, 63
    %v564 = vpop.permute.xlu0 %563
    %vm565 = vcmask 515072
    %v566 = vsel %vm565, %v556, %v558
    %v567 = vsel %vm565, %v558, %v560
    %v568 = vsel %vm565, %v560, %v562
    %v569 = vsel %vm565, %v562, %v564
    %574 = vst [vmem:[#allocation2 + $0x2a0] sm:$0xff] %v566
    %575 = vst [vmem:[#allocation2 + $0x2a8] sm:$0xff] %v567
    %576 = vst [vmem:[#allocation2 + $0x2b0] sm:$0xff] %v568
    %577 = vst [vmem:[#allocation2 + $0x2b8] sm:$0xff] %v569
    %578 = vrot.lane.b32.xlu0 %v81, 62
    %v579 = vpop.permute.xlu0 %578
    %580 = vrot.lane.b32.xlu0 %v82, 62
    %v581 = vpop.permute.xlu0 %580
    %582 = vrot.lane.b32.xlu0 %v84, 62
    %v583 = vpop.permute.xlu0 %582
    %584 = vrot.lane.b32.xlu0 %v85, 62
    %v585 = vpop.permute.xlu0 %584
    %586 = vrot.lane.b32.xlu0 0.0, 62
    %v587 = vpop.permute.xlu0 %586
    %vm588 = vcmask 506880
    %v589 = vsel %vm588, %v579, %v581
    %v590 = vsel %vm588, %v581, %v583
    %v591 = vsel %vm588, %v583, %v585
    %v592 = vsel %vm588, %v585, %v587
    %597 = vst [vmem:[#allocation2 + $0x2c0] sm:$0xff] %v589
    %598 = vst [vmem:[#allocation2 + $0x2c8] sm:$0xff] %v590
    %599 = vst [vmem:[#allocation2 + $0x2d0] sm:$0xff] %v591
    %600 = vst [vmem:[#allocation2 + $0x2d8] sm:$0xff] %v592
    %601 = vrot.lane.b32.xlu0 %v81, 61
    %v602 = vpop.permute.xlu0 %601
    %603 = vrot.lane.b32.xlu0 %v82, 61
    %v604 = vpop.permute.xlu0 %603
    %605 = vrot.lane.b32.xlu0 %v84, 61
    %v606 = vpop.permute.xlu0 %605
    %607 = vrot.lane.b32.xlu0 %v85, 61
    %v608 = vpop.permute.xlu0 %607
    %609 = vrot.lane.b32.xlu0 0.0, 61
    %v610 = vpop.permute.xlu0 %609
    %vm611 = vcmask 498688
    %v612 = vsel %vm611, %v602, %v604
    %v613 = vsel %vm611, %v604, %v606
    %v614 = vsel %vm611, %v606, %v608
    %v615 = vsel %vm611, %v608, %v610
    %620 = vst [vmem:[#allocation2 + $0x2e0] sm:$0xff] %v612
    %621 = vst [vmem:[#allocation2 + $0x2e8] sm:$0xff] %v613
    %622 = vst [vmem:[#allocation2 + $0x2f0] sm:$0xff] %v614
    %623 = vst [vmem:[#allocation2 + $0x2f8] sm:$0xff] %v615
    %624 = vrot.lane.b32.xlu0 %v81, 60
    %v625 = vpop.permute.xlu0 %624
    %626 = vrot.lane.b32.xlu0 %v82, 60
    %v627 = vpop.permute.xlu0 %626
    %628 = vrot.lane.b32.xlu0 %v84, 60
    %v629 = vpop.permute.xlu0 %628
    %630 = vrot.lane.b32.xlu0 %v85, 60
    %v631 = vpop.permute.xlu0 %630
    %632 = vrot.lane.b32.xlu0 0.0, 60
    %v633 = vpop.permute.xlu0 %632
    %vm634 = vcmask 490496
    %v635 = vsel %vm634, %v625, %v627
    %v636 = vsel %vm634, %v627, %v629
    %v637 = vsel %vm634, %v629, %v631
    %v638 = vsel %vm634, %v631, %v633
    %643 = vst [vmem:[#allocation2 + $0x300] sm:$0xff] %v635
    %644 = vst [vmem:[#allocation2 + $0x308] sm:$0xff] %v636
    %645 = vst [vmem:[#allocation2 + $0x310] sm:$0xff] %v637
    %646 = vst [vmem:[#allocation2 + $0x318] sm:$0xff] %v638
    %v647 = vld [vmem:[#allocation6] sm:$0xff]
    %v648 = vld [vmem:[#allocation6 + $0x8] sm:$0xff]
    %v649 = vld [vmem:[#allocation2] sm:$0xff]
    %v650 = vld [vmem:[#allocation2 + $0x8] sm:$0xff]
    %v651 = vld [vmem:[#allocation2 + $0x10] sm:$0xff]
    %v652 = vld [vmem:[#allocation2 + $0x18] sm:$0xff]
    %v653 = vld [vmem:[#allocation2 + $0x20] sm:$0xff]
    %v654 = vld [vmem:[#allocation2 + $0x28] sm:$0xff]
    %v655 = vld [vmem:[#allocation2 + $0x30] sm:$0xff]
    %v656 = vld [vmem:[#allocation2 + $0x38] sm:$0xff]
    %v657 = vld [vmem:[#allocation2 + $0x40] sm:$0xff]
    %v658 = vld [vmem:[#allocation2 + $0x48] sm:$0xff]
    %v659 = vld [vmem:[#allocation2 + $0x50] sm:$0xff]
    %v660 = vld [vmem:[#allocation2 + $0x58] sm:$0xff]
    %v661 = vld [vmem:[#allocation2 + $0x60] sm:$0xff]
    %v662 = vld [vmem:[#allocation2 + $0x68] sm:$0xff]
    %v663 = vld [vmem:[#allocation2 + $0x70] sm:$0xff]
    %v664 = vld [vmem:[#allocation2 + $0x78] sm:$0xff]
    %v665 = vld [vmem:[#allocation2 + $0x80] sm:$0xff]
    %v666 = vld [vmem:[#allocation2 + $0x88] sm:$0xff]
    %v667 = vld [vmem:[#allocation2 + $0x90] sm:$0xff]
    %v668 = vld [vmem:[#allocation2 + $0x98] sm:$0xff]
    %v669 = vld [vmem:[#allocation2 + $0xa0] sm:$0xff]
    %v670 = vld [vmem:[#allocation2 + $0xa8] sm:$0xff]
    %v671 = vld [vmem:[#allocation2 + $0xb0] sm:$0xff]
    %v672 = vld [vmem:[#allocation2 + $0xb8] sm:$0xff]
    %v673 = vld [vmem:[#allocation2 + $0xc0] sm:$0xff]
    %v674 = vld [vmem:[#allocation2 + $0xc8] sm:$0xff]
    %v675 = vld [vmem:[#allocation2 + $0xd0] sm:$0xff]
    %v676 = vld [vmem:[#allocation2 + $0xd8] sm:$0xff]
    %v677 = vld [vmem:[#allocation2 + $0xe0] sm:$0xff]
    %v678 = vld [vmem:[#allocation2 + $0xe8] sm:$0xff]
    %v679 = vld [vmem:[#allocation2 + $0xf0] sm:$0xff]
    %v680 = vld [vmem:[#allocation2 + $0xf8] sm:$0xff]
    %v681 = vld [vmem:[#allocation2 + $0x100] sm:$0xff]
    %v682 = vld [vmem:[#allocation2 + $0x108] sm:$0xff]
    %v683 = vld [vmem:[#allocation2 + $0x110] sm:$0xff]
    %v684 = vld [vmem:[#allocation2 + $0x118] sm:$0xff]
    %v685 = vld [vmem:[#allocation2 + $0x120] sm:$0xff]
    %v686 = vld [vmem:[#allocation2 + $0x128] sm:$0xff]
    %v687 = vld [vmem:[#allocation2 + $0x130] sm:$0xff]
    %v688 = vld [vmem:[#allocation2 + $0x138] sm:$0xff]
    %v689 = vld [vmem:[#allocation2 + $0x140] sm:$0xff]
    %v690 = vld [vmem:[#allocation2 + $0x148] sm:$0xff]
    %v691 = vld [vmem:[#allocation2 + $0x150] sm:$0xff]
    %v692 = vld [vmem:[#allocation2 + $0x158] sm:$0xff]
    %v693 = vld [vmem:[#allocation2 + $0x160] sm:$0xff]
    %v694 = vld [vmem:[#allocation2 + $0x168] sm:$0xff]
    %v695 = vld [vmem:[#allocation2 + $0x170] sm:$0xff]
    %v696 = vld [vmem:[#allocation2 + $0x178] sm:$0xff]
    %v697 = vld [vmem:[#allocation2 + $0x180] sm:$0xff]
    %v698 = vld [vmem:[#allocation2 + $0x188] sm:$0xff]
    %v699 = vld [vmem:[#allocation2 + $0x190] sm:$0xff]
    %v700 = vld [vmem:[#allocation2 + $0x198] sm:$0xff]
    %v701 = vld [vmem:[#allocation2 + $0x1a0] sm:$0xff]
    %v702 = vld [vmem:[#allocation2 + $0x1a8] sm:$0xff]
    %v703 = vld [vmem:[#allocation2 + $0x1b0] sm:$0xff]
    %v704 = vld [vmem:[#allocation2 + $0x1b8] sm:$0xff]
    %v705 = vld [vmem:[#allocation2 + $0x1c0] sm:$0xff]
    %v706 = vld [vmem:[#allocation2 + $0x1c8] sm:$0xff]
    %v707 = vld [vmem:[#allocation2 + $0x1d0] sm:$0xff]
    %v708 = vld [vmem:[#allocation2 + $0x1d8] sm:$0xff]
    %v709 = vld [vmem:[#allocation2 + $0x1e0] sm:$0xff]
    %v710 = vld [vmem:[#allocation2 + $0x1e8] sm:$0xff]
    %v711 = vld [vmem:[#allocation2 + $0x1f0] sm:$0xff]
    %v712 = vld [vmem:[#allocation2 + $0x1f8] sm:$0xff]
    %v713 = vld [vmem:[#allocation2 + $0x200] sm:$0xff]
    %v714 = vld [vmem:[#allocation2 + $0x208] sm:$0xff]
    %v715 = vld [vmem:[#allocation2 + $0x210] sm:$0xff]
    %v716 = vld [vmem:[#allocation2 + $0x218] sm:$0xff]
    %v717 = vld [vmem:[#allocation2 + $0x220] sm:$0xff]
    %v718 = vld [vmem:[#allocation2 + $0x228] sm:$0xff]
    %v719 = vld [vmem:[#allocation2 + $0x230] sm:$0xff]
    %v720 = vld [vmem:[#allocation2 + $0x238] sm:$0xff]
    %v721 = vld [vmem:[#allocation2 + $0x240] sm:$0xff]
    %v722 = vld [vmem:[#allocation2 + $0x248] sm:$0xff]
    %v723 = vld [vmem:[#allocation2 + $0x250] sm:$0xff]
    %v724 = vld [vmem:[#allocation2 + $0x258] sm:$0xff]
    %v725 = vld [vmem:[#allocation2 + $0x260] sm:$0xff]
    %v726 = vld [vmem:[#allocation2 + $0x268] sm:$0xff]
    %v727 = vld [vmem:[#allocation2 + $0x270] sm:$0xff]
    %v728 = vld [vmem:[#allocation2 + $0x278] sm:$0xff]
    %v729 = vld [vmem:[#allocation2 + $0x280] sm:$0xff]
    %v730 = vld [vmem:[#allocation2 + $0x288] sm:$0xff]
    %v731 = vld [vmem:[#allocation2 + $0x290] sm:$0xff]
    %v732 = vld [vmem:[#allocation2 + $0x298] sm:$0xff]
    %v733 = vld [vmem:[#allocation2 + $0x2a0] sm:$0xff]
    %v734 = vld [vmem:[#allocation2 + $0x2a8] sm:$0xff]
    %v735 = vld [vmem:[#allocation2 + $0x2b0] sm:$0xff]
    %v736 = vld [vmem:[#allocation2 + $0x2b8] sm:$0xff]
    %v737 = vld [vmem:[#allocation2 + $0x2c0] sm:$0xff]
    %v738 = vld [vmem:[#allocation2 + $0x2c8] sm:$0xff]
    %v739 = vld [vmem:[#allocation2 + $0x2d0] sm:$0xff]
    %v740 = vld [vmem:[#allocation2 + $0x2d8] sm:$0xff]
    %v741 = vld [vmem:[#allocation2 + $0x2e0] sm:$0xff]
    %v742 = vld [vmem:[#allocation2 + $0x2e8] sm:$0xff]
    %v743 = vld [vmem:[#allocation2 + $0x2f0] sm:$0xff]
    %v744 = vld [vmem:[#allocation2 + $0x2f8] sm:$0xff]
    %v745 = vld [vmem:[#allocation2 + $0x300] sm:$0xff]
    %v746 = vld [vmem:[#allocation2 + $0x308] sm:$0xff]
    %v747 = vld [vmem:[#allocation2 + $0x310] sm:$0xff]
    %v748 = vld [vmem:[#allocation2 + $0x318] sm:$0xff]
    %v749 = vld [vmem:[#allocation8] sm:$0xff]
    %751 = vset.pattern.permute.xlu0 0
    %752 = vperm.xlu0 %751, %v749
    %v753 = vpop.permute.xlu0 %752
    %vm755 = vcmask 588800
    %v757 = vsel %vm755, %v648, 0
    %759 = vmatprep.subr.mxu0 %v650
    %760 = vmatpush1.msra.mxu0 %v649
    %761 = vmatprep.subr.mxu0 %v654
    %762 = vmatpush1.msra.mxu0 %v653
    %763 = vmatprep.subr.mxu0 %v658
    %764 = vmatpush1.msra.mxu0 %v657
    %765 = vmatprep.subr.mxu0 %v662
    %766 = vmatpush1.msra.mxu0 %v661
    %767 = vmatprep.subr.mxu0 %v666
    %768 = vmatpush1.msra.mxu0 %v665
    %769 = vmatprep.subr.mxu0 %v670
    %770 = vmatpush1.msra.mxu0 %v669
    %771 = vmatprep.subr.mxu0 %v674
    %772 = vmatpush1.msra.mxu0 %v673
    %773 = vmatprep.subr.mxu0 %v678
    %774 = vmatpush1.msra.mxu0 %v677
    %775 = vmatprep.subr.mxu0 %v682
    %776 = vmatpush1.msra.mxu0 %v681
    %777 = vmatprep.subr.mxu0 %v686
    %778 = vmatpush1.msra.mxu0 %v685
    %779 = vmatprep.subr.mxu0 %v690
    %780 = vmatpush1.msra.mxu0 %v689
    %781 = vmatprep.subr.mxu0 %v694
    %782 = vmatpush1.msra.mxu0 %v693
    %783 = vmatprep.subr.mxu0 %v698
    %784 = vmatpush1.msra.mxu0 %v697
    %785 = vmatprep.subr.mxu0 %v702
    %786 = vmatpush1.msra.mxu0 %v701
    %787 = vmatprep.subr.mxu0 %v706
    %788 = vmatpush1.msra.mxu0 %v705
    %789 = vmatprep.subr.mxu0 %v710
    %790 = vmatpush1.msra.mxu0 %v709
    %791 = vmatprep.subr.mxu0 %v714
    %792 = vmatpush1.msra.mxu0 %v713
    %793 = vmatprep.subr.mxu0 %v718
    %794 = vmatpush1.msra.mxu0 %v717
    %795 = vmatprep.subr.mxu0 %v722
    %796 = vmatpush1.msra.mxu0 %v721
    %797 = vmatprep.subr.mxu0 %v726
    %798 = vmatpush1.msra.mxu0 %v725
    %799 = vmatprep.subr.mxu0 %v730
    %800 = vmatpush1.msra.mxu0 %v729
    %801 = vmatprep.subr.mxu0 %v734
    %802 = vmatpush1.msra.mxu0 %v733
    %803 = vmatprep.subr.mxu0 %v738
    %804 = vmatpush1.msra.mxu0 %v737
    %805 = vmatprep.subr.mxu0 %v742
    %806 = vmatpush1.msra.mxu0 %v741
    %807 = vmatprep.subr.mxu0 %v746
    %808 = vmatpush1.msra.mxu0 %v745
    %809 = vmatprep.subr.mxu0 0.0
    %810 = vmatpush1.msra.mxu0 0.0
    %811 = vmatprep.subr.mxu0 0.0
    %812 = vmatpush1.msra.mxu0 0.0
    %813 = vmatprep.subr.mxu0 0.0
    %814 = vmatpush1.msra.mxu0 0.0
    %815 = vmatprep.subr.mxu0 0.0
    %816 = vmatpush1.msra.mxu0 0.0
    %817 = vmatprep.subr.mxu0 0.0
    %818 = vmatpush1.msra.mxu0 0.0
    %819 = vmatprep.subr.mxu0 0.0
    %820 = vmatpush1.msra.mxu0 0.0
    %821 = vmatprep.subr.mxu0 0.0
    %822 = vmatpush1.msra.mxu0 0.0
    %823 = vmatprep.mubr.f32.mxu0 %v757
    %824 = vmatmul.mubr.f32.gmra.mrb[0].mxu0 %v647
    %v825 = vpop.f32.mrb[0].mxu0
    %v826 = vadd.f32 %v753, %v825
    %v827 = vpop.f32.mrb[0].mxu0
    %v828 = vadd.f32 %v753, %v827
    %829 = vdwg.mxu0
    %830 = vmatprep.subr.mxu0 %v652
    %831 = vmatpush1.msra.mxu0 %v651
    %832 = vmatprep.subr.mxu0 %v656
    %833 = vmatpush1.msra.mxu0 %v655
    %834 = vmatprep.subr.mxu0 %v660
    %835 = vmatpush1.msra.mxu0 %v659
    %836 = vmatprep.subr.mxu0 %v664
    %837 = vmatpush1.msra.mxu0 %v663
    %838 = vmatprep.subr.mxu0 %v668
    %839 = vmatpush1.msra.mxu0 %v667
    %840 = vmatprep.subr.mxu0 %v672
    %841 = vmatpush1.msra.mxu0 %v671
    %842 = vmatprep.subr.mxu0 %v676
    %843 = vmatpush1.msra.mxu0 %v675
    %844 = vmatprep.subr.mxu0 %v680
    %845 = vmatpush1.msra.mxu0 %v679
    %846 = vmatprep.subr.mxu0 %v684
    %847 = vmatpush1.msra.mxu0 %v683
    %848 = vmatprep.subr.mxu0 %v688
    %849 = vmatpush1.msra.mxu0 %v687
    %850 = vmatprep.subr.mxu0 %v692
    %851 = vmatpush1.msra.mxu0 %v691
    %852 = vmatprep.subr.mxu0 %v696
    %853 = vmatpush1.msra.mxu0 %v695
    %854 = vmatprep.subr.mxu0 %v700
    %855 = vmatpush1.msra.mxu0 %v699
    %856 = vmatprep.subr.mxu0 %v704
    %857 = vmatpush1.msra.mxu0 %v703
    %858 = vmatprep.subr.mxu0 %v708
    %859 = vmatpush1.msra.mxu0 %v707
    %860 = vmatprep.subr.mxu0 %v712
    %861 = vmatpush1.msra.mxu0 %v711
    %862 = vmatprep.subr.mxu0 %v716
    %863 = vmatpush1.msra.mxu0 %v715
    %864 = vmatprep.subr.mxu0 %v720
    %865 = vmatpush1.msra.mxu0 %v719
    %866 = vmatprep.subr.mxu0 %v724
    %867 = vmatpush1.msra.mxu0 %v723
    %868 = vmatprep.subr.mxu0 %v728
    %869 = vmatpush1.msra.mxu0 %v727
    %870 = vmatprep.subr.mxu0 %v732
    %871 = vmatpush1.msra.mxu0 %v731
    %872 = vmatprep.subr.mxu0 %v736
    %873 = vmatpush1.msra.mxu0 %v735
    %874 = vmatprep.subr.mxu0 %v740
    %875 = vmatpush1.msra.mxu0 %v739
    %876 = vmatprep.subr.mxu0 %v744
    %877 = vmatpush1.msra.mxu0 %v743
    %878 = vmatprep.subr.mxu0 %v748
    %879 = vmatpush1.msra.mxu0 %v747
    %880 = vmatprep.subr.mxu0 0.0
    %881 = vmatpush1.msra.mxu0 0.0
    %882 = vmatprep.subr.mxu0 0.0
    %883 = vmatpush1.msra.mxu0 0.0
    %884 = vmatprep.subr.mxu0 0.0
    %885 = vmatpush1.msra.mxu0 0.0
    %886 = vmatprep.subr.mxu0 0.0
    %887 = vmatpush1.msra.mxu0 0.0
    %888 = vmatprep.subr.mxu0 0.0
    %889 = vmatpush1.msra.mxu0 0.0
    %890 = vmatprep.subr.mxu0 0.0
    %891 = vmatpush1.msra.mxu0 0.0
    %892 = vmatprep.subr.mxu0 0.0
    %893 = vmatpush1.msra.mxu0 0.0
    %894 = vmatprep.mubr.f32.mxu0 %v757
    %895 = vmatmul.mubr.f32.gmra.mrb[0].mxu0 %v647
    %v896 = vpop.f32.mrb[0].mxu0
    %v897 = vadd.f32 %v753, %v896
    %v898 = vpop.f32.mrb[0].mxu0
    %v899 = vadd.f32 %v753, %v898
    %900 = vdwg.mxu0
    %vm901 = vcmp.gt.f32.partialorder %v826, 0.0
    %vm902 = vcmp.gt.f32.partialorder %v828, 0.0
    %vm903 = vcmp.gt.f32.partialorder %v897, 0.0
    %vm904 = vcmp.gt.f32.partialorder %v899, 0.0
    %v905 = vmul.f32 %v826, 0.01
    %v906 = vmul.f32 %v828, 0.01
    %v907 = vmul.f32 %v897, 0.01
    %v908 = vmul.f32 %v899, 0.01
    %v909 = vsel %vm901, %v826, %v905
    %v910 = vsel %vm902, %v828, %v906
    %v911 = vsel %vm903, %v897, %v907
    %v912 = vsel %vm904, %v899, %v908
    %913 = vst [vmem:[#allocation2] sm:$0xff] %v909
    %914 = vst [vmem:[#allocation2 + $0x8] sm:$0xff] %v910
    %915 = vst [vmem:[#allocation2 + $0x10] sm:$0xff] %v911
    %920 = vrot.lane.b32.xlu0 %v909, 127
    %v921 = vpop.permute.xlu0 %920
    %922 = vrot.lane.b32.xlu0 %v910, 127
    %v923 = vpop.permute.xlu0 %922
    %924 = vrot.lane.b32.xlu0 %v911, 127
    %v925 = vpop.permute.xlu0 %924
    %926 = vrot.lane.b32.xlu0 %v912, 127
    %v927 = vpop.permute.xlu0 %926
    %v928 = vsel %vm105, %v921, %v923
    %v929 = vsel %vm105, %v923, %v925
    %v930 = vsel %vm105, %v925, %v927
    %934 = vst [vmem:[#allocation2 + $0x20] sm:$0xff] %v928
    %935 = vst [vmem:[#allocation2 + $0x28] sm:$0xff] %v929
    %936 = vst [vmem:[#allocation2 + $0x30] sm:$0xff] %v930
    %937 = vrot.lane.b32.xlu0 %v909, 126
    %v938 = vpop.permute.xlu0 %937
    %939 = vrot.lane.b32.xlu0 %v910, 126
    %v940 = vpop.permute.xlu0 %939
    %941 = vrot.lane.b32.xlu0 %v911, 126
    %v942 = vpop.permute.xlu0 %941
    %943 = vrot.lane.b32.xlu0 %v912, 126
    %v944 = vpop.permute.xlu0 %943
    %v945 = vsel %vm128, %v938, %v940
    %v946 = vsel %vm128, %v940, %v942
    %v947 = vsel %vm128, %v942, %v944
    %951 = vst [vmem:[#allocation2 + $0x40] sm:$0xff] %v945
    %952 = vst [vmem:[#allocation2 + $0x48] sm:$0xff] %v946
    %953 = vst [vmem:[#allocation2 + $0x50] sm:$0xff] %v947
    %954 = vrot.lane.b32.xlu0 %v909, 125
    %v955 = vpop.permute.xlu0 %954
    %956 = vrot.lane.b32.xlu0 %v910, 125
    %v957 = vpop.permute.xlu0 %956
    %958 = vrot.lane.b32.xlu0 %v911, 125
    %v959 = vpop.permute.xlu0 %958
    %960 = vrot.lane.b32.xlu0 %v912, 125
    %v961 = vpop.permute.xlu0 %960
    %v962 = vsel %vm151, %v955, %v957
    %v963 = vsel %vm151, %v957, %v959
    %v964 = vsel %vm151, %v959, %v961
    %968 = vst [vmem:[#allocation2 + $0x60] sm:$0xff] %v962
    %969 = vst [vmem:[#allocation2 + $0x68] sm:$0xff] %v963
    %970 = vst [vmem:[#allocation2 + $0x70] sm:$0xff] %v964
    %971 = vrot.lane.b32.xlu0 %v909, 124
    %v972 = vpop.permute.xlu0 %971
    %973 = vrot.lane.b32.xlu0 %v910, 124
    %v974 = vpop.permute.xlu0 %973
    %975 = vrot.lane.b32.xlu0 %v911, 124
    %v976 = vpop.permute.xlu0 %975
    %977 = vrot.lane.b32.xlu0 %v912, 124
    %v978 = vpop.permute.xlu0 %977
    %v979 = vsel %vm174, %v972, %v974
    %v980 = vsel %vm174, %v974, %v976
    %v981 = vsel %vm174, %v976, %v978
    %985 = vst [vmem:[#allocation2 + $0x80] sm:$0xff] %v979
    %986 = vst [vmem:[#allocation2 + $0x88] sm:$0xff] %v980
    %987 = vst [vmem:[#allocation2 + $0x90] sm:$0xff] %v981
    %988 = vrot.lane.b32.xlu0 %v909, 112
    %v989 = vpop.permute.xlu0 %988
    %990 = vrot.lane.b32.xlu0 %v910, 112
    %v991 = vpop.permute.xlu0 %990
    %992 = vrot.lane.b32.xlu0 %v911, 112
    %v993 = vpop.permute.xlu0 %992
    %994 = vrot.lane.b32.xlu0 %v912, 112
    %v995 = vpop.permute.xlu0 %994
    %v996 = vsel %vm197, %v989, %v991
    %v997 = vsel %vm197, %v991, %v993
    %v998 = vsel %vm197, %v993, %v995
    %1002 = vst [vmem:[#allocation2 + $0xa0] sm:$0xff] %v996
    %1003 = vst [vmem:[#allocation2 + $0xa8] sm:$0xff] %v997
    %1004 = vst [vmem:[#allocation2 + $0xb0] sm:$0xff] %v998
    %1005 = vrot.lane.b32.xlu0 %v909, 111
    %v1006 = vpop.permute.xlu0 %1005
    %1007 = vrot.lane.b32.xlu0 %v910, 111
    %v1008 = vpop.permute.xlu0 %1007
    %1009 = vrot.lane.b32.xlu0 %v911, 111
    %v1010 = vpop.permute.xlu0 %1009
    %1011 = vrot.lane.b32.xlu0 %v912, 111
    %v1012 = vpop.permute.xlu0 %1011
    %v1013 = vsel %vm220, %v1006, %v1008
    %v1014 = vsel %vm220, %v1008, %v1010
    %v1015 = vsel %vm220, %v1010, %v1012
    %1019 = vst [vmem:[#allocation2 + $0xc0] sm:$0xff] %v1013
    %1020 = vst [vmem:[#allocation2 + $0xc8] sm:$0xff] %v1014
    %1021 = vst [vmem:[#allocation2 + $0xd0] sm:$0xff] %v1015
    %1022 = vrot.lane.b32.xlu0 %v909, 110
    %v1023 = vpop.permute.xlu0 %1022
    %1024 = vrot.lane.b32.xlu0 %v910, 110
    %v1025 = vpop.permute.xlu0 %1024
    %1026 = vrot.lane.b32.xlu0 %v911, 110
    %v1027 = vpop.permute.xlu0 %1026
    %1028 = vrot.lane.b32.xlu0 %v912, 110
    %v1029 = vpop.permute.xlu0 %1028
    %v1030 = vsel %vm243, %v1023, %v1025
    %v1031 = vsel %vm243, %v1025, %v1027
    %v1032 = vsel %vm243, %v1027, %v1029
    %1036 = vst [vmem:[#allocation2 + $0xe0] sm:$0xff] %v1030
    %1037 = vst [vmem:[#allocation2 + $0xe8] sm:$0xff] %v1031
    %1038 = vst [vmem:[#allocation2 + $0xf0] sm:$0xff] %v1032
    %1039 = vrot.lane.b32.xlu0 %v909, 109
    %v1040 = vpop.permute.xlu0 %1039
    %1041 = vrot.lane.b32.xlu0 %v910, 109
    %v1042 = vpop.permute.xlu0 %1041
    %1043 = vrot.lane.b32.xlu0 %v911, 109
    %v1044 = vpop.permute.xlu0 %1043
    %1045 = vrot.lane.b32.xlu0 %v912, 109
    %v1046 = vpop.permute.xlu0 %1045
    %v1047 = vsel %vm266, %v1040, %v1042
    %v1048 = vsel %vm266, %v1042, %v1044
    %v1049 = vsel %vm266, %v1044, %v1046
    %1053 = vst [vmem:[#allocation2 + $0x100] sm:$0xff] %v1047
    %1054 = vst [vmem:[#allocation2 + $0x108] sm:$0xff] %v1048
    %1055 = vst [vmem:[#allocation2 + $0x110] sm:$0xff] %v1049
    %1056 = vrot.lane.b32.xlu0 %v909, 108
    %v1057 = vpop.permute.xlu0 %1056
    %1058 = vrot.lane.b32.xlu0 %v910, 108
    %v1059 = vpop.permute.xlu0 %1058
    %1060 = vrot.lane.b32.xlu0 %v911, 108
    %v1061 = vpop.permute.xlu0 %1060
    %1062 = vrot.lane.b32.xlu0 %v912, 108
    %v1063 = vpop.permute.xlu0 %1062
    %v1064 = vsel %vm289, %v1057, %v1059
    %v1065 = vsel %vm289, %v1059, %v1061
    %v1066 = vsel %vm289, %v1061, %v1063
    %1070 = vst [vmem:[#allocation2 + $0x120] sm:$0xff] %v1064
    %1071 = vst [vmem:[#allocation2 + $0x128] sm:$0xff] %v1065
    %1072 = vst [vmem:[#allocation2 + $0x130] sm:$0xff] %v1066
    %1073 = vrot.lane.b32.xlu0 %v909, 96
    %v1074 = vpop.permute.xlu0 %1073
    %1075 = vrot.lane.b32.xlu0 %v910, 96
    %v1076 = vpop.permute.xlu0 %1075
    %1077 = vrot.lane.b32.xlu0 %v911, 96
    %v1078 = vpop.permute.xlu0 %1077
    %1079 = vrot.lane.b32.xlu0 %v912, 96
    %v1080 = vpop.permute.xlu0 %1079
    %v1081 = vsel %vm312, %v1074, %v1076
    %v1082 = vsel %vm312, %v1076, %v1078
    %v1083 = vsel %vm312, %v1078, %v1080
    %1087 = vst [vmem:[#allocation2 + $0x140] sm:$0xff] %v1081
    %1088 = vst [vmem:[#allocation2 + $0x148] sm:$0xff] %v1082
    %1089 = vst [vmem:[#allocation2 + $0x150] sm:$0xff] %v1083
    %1090 = vrot.lane.b32.xlu0 %v909, 95
    %v1091 = vpop.permute.xlu0 %1090
    %1092 = vrot.lane.b32.xlu0 %v910, 95
    %v1093 = vpop.permute.xlu0 %1092
    %1094 = vrot.lane.b32.xlu0 %v911, 95
    %v1095 = vpop.permute.xlu0 %1094
    %1096 = vrot.lane.b32.xlu0 %v912, 95
    %v1097 = vpop.permute.xlu0 %1096
    %v1098 = vsel %vm335, %v1091, %v1093
    %v1099 = vsel %vm335, %v1093, %v1095
    %v1100 = vsel %vm335, %v1095, %v1097
    %1104 = vst [vmem:[#allocation2 + $0x160] sm:$0xff] %v1098
    %1105 = vst [vmem:[#allocation2 + $0x168] sm:$0xff] %v1099
    %1106 = vst [vmem:[#allocation2 + $0x170] sm:$0xff] %v1100
    %1107 = vrot.lane.b32.xlu0 %v909, 94
    %v1108 = vpop.permute.xlu0 %1107
    %1109 = vrot.lane.b32.xlu0 %v910, 94
    %v1110 = vpop.permute.xlu0 %1109
    %1111 = vrot.lane.b32.xlu0 %v911, 94
    %v1112 = vpop.permute.xlu0 %1111
    %1113 = vrot.lane.b32.xlu0 %v912, 94
    %v1114 = vpop.permute.xlu0 %1113
    %v1115 = vsel %vm358, %v1108, %v1110
    %v1116 = vsel %vm358, %v1110, %v1112
    %v1117 = vsel %vm358, %v1112, %v1114
    %1121 = vst [vmem:[#allocation2 + $0x180] sm:$0xff] %v1115
    %1122 = vst [vmem:[#allocation2 + $0x188] sm:$0xff] %v1116
    %1123 = vst [vmem:[#allocation2 + $0x190] sm:$0xff] %v1117
    %1124 = vrot.lane.b32.xlu0 %v909, 93
    %v1125 = vpop.permute.xlu0 %1124
    %1126 = vrot.lane.b32.xlu0 %v910, 93
    %v1127 = vpop.permute.xlu0 %1126
    %1128 = vrot.lane.b32.xlu0 %v911, 93
    %v1129 = vpop.permute.xlu0 %1128
    %1130 = vrot.lane.b32.xlu0 %v912, 93
    %v1131 = vpop.permute.xlu0 %1130
    %v1132 = vsel %vm381, %v1125, %v1127
    %v1133 = vsel %vm381, %v1127, %v1129
    %v1134 = vsel %vm381, %v1129, %v1131
    %1138 = vst [vmem:[#allocation2 + $0x1a0] sm:$0xff] %v1132
    %1139 = vst [vmem:[#allocation2 + $0x1a8] sm:$0xff] %v1133
    %1140 = vst [vmem:[#allocation2 + $0x1b0] sm:$0xff] %v1134
    %1141 = vrot.lane.b32.xlu0 %v909, 92
    %v1142 = vpop.permute.xlu0 %1141
    %1143 = vrot.lane.b32.xlu0 %v910, 92
    %v1144 = vpop.permute.xlu0 %1143
    %1145 = vrot.lane.b32.xlu0 %v911, 92
    %v1146 = vpop.permute.xlu0 %1145
    %1147 = vrot.lane.b32.xlu0 %v912, 92
    %v1148 = vpop.permute.xlu0 %1147
    %v1149 = vsel %vm404, %v1142, %v1144
    %v1150 = vsel %vm404, %v1144, %v1146
    %v1151 = vsel %vm404, %v1146, %v1148
    %1155 = vst [vmem:[#allocation2 + $0x1c0] sm:$0xff] %v1149
    %1156 = vst [vmem:[#allocation2 + $0x1c8] sm:$0xff] %v1150
    %1157 = vst [vmem:[#allocation2 + $0x1d0] sm:$0xff] %v1151
    %1158 = vrot.lane.b32.xlu0 %v909, 80
    %v1159 = vpop.permute.xlu0 %1158
    %1160 = vrot.lane.b32.xlu0 %v910, 80
    %v1161 = vpop.permute.xlu0 %1160
    %1162 = vrot.lane.b32.xlu0 %v911, 80
    %v1163 = vpop.permute.xlu0 %1162
    %1164 = vrot.lane.b32.xlu0 %v912, 80
    %v1165 = vpop.permute.xlu0 %1164
    %v1166 = vsel %vm427, %v1159, %v1161
    %v1167 = vsel %vm427, %v1161, %v1163
    %v1168 = vsel %vm427, %v1163, %v1165
    %1172 = vst [vmem:[#allocation2 + $0x1e0] sm:$0xff] %v1166
    %1173 = vst [vmem:[#allocation2 + $0x1e8] sm:$0xff] %v1167
    %1174 = vst [vmem:[#allocation2 + $0x1f0] sm:$0xff] %v1168
    %1175 = vrot.lane.b32.xlu0 %v909, 79
    %v1176 = vpop.permute.xlu0 %1175
    %1177 = vrot.lane.b32.xlu0 %v910, 79
    %v1178 = vpop.permute.xlu0 %1177
    %1179 = vrot.lane.b32.xlu0 %v911, 79
    %v1180 = vpop.permute.xlu0 %1179
    %1181 = vrot.lane.b32.xlu0 %v912, 79
    %v1182 = vpop.permute.xlu0 %1181
    %v1183 = vsel %vm450, %v1176, %v1178
    %v1184 = vsel %vm450, %v1178, %v1180
    %v1185 = vsel %vm450, %v1180, %v1182
    %1189 = vst [vmem:[#allocation2 + $0x200] sm:$0xff] %v1183
    %1190 = vst [vmem:[#allocation2 + $0x208] sm:$0xff] %v1184
    %1191 = vst [vmem:[#allocation2 + $0x210] sm:$0xff] %v1185
    %1192 = vrot.lane.b32.xlu0 %v909, 78
    %v1193 = vpop.permute.xlu0 %1192
    %1194 = vrot.lane.b32.xlu0 %v910, 78
    %v1195 = vpop.permute.xlu0 %1194
    %1196 = vrot.lane.b32.xlu0 %v911, 78
    %v1197 = vpop.permute.xlu0 %1196
    %1198 = vrot.lane.b32.xlu0 %v912, 78
    %v1199 = vpop.permute.xlu0 %1198
    %v1200 = vsel %vm473, %v1193, %v1195
    %v1201 = vsel %vm473, %v1195, %v1197
    %v1202 = vsel %vm473, %v1197, %v1199
    %1206 = vst [vmem:[#allocation2 + $0x220] sm:$0xff] %v1200
    %1207 = vst [vmem:[#allocation2 + $0x228] sm:$0xff] %v1201
    %1208 = vst [vmem:[#allocation2 + $0x230] sm:$0xff] %v1202
    %1209 = vrot.lane.b32.xlu0 %v909, 77
    %v1210 = vpop.permute.xlu0 %1209
    %1211 = vrot.lane.b32.xlu0 %v910, 77
    %v1212 = vpop.permute.xlu0 %1211
    %1213 = vrot.lane.b32.xlu0 %v911, 77
    %v1214 = vpop.permute.xlu0 %1213
    %1215 = vrot.lane.b32.xlu0 %v912, 77
    %v1216 = vpop.permute.xlu0 %1215
    %v1217 = vsel %vm496, %v1210, %v1212
    %v1218 = vsel %vm496, %v1212, %v1214
    %v1219 = vsel %vm496, %v1214, %v1216
    %1223 = vst [vmem:[#allocation2 + $0x240] sm:$0xff] %v1217
    %1224 = vst [vmem:[#allocation2 + $0x248] sm:$0xff] %v1218
    %1225 = vst [vmem:[#allocation2 + $0x250] sm:$0xff] %v1219
    %1226 = vrot.lane.b32.xlu0 %v909, 76
    %v1227 = vpop.permute.xlu0 %1226
    %1228 = vrot.lane.b32.xlu0 %v910, 76
    %v1229 = vpop.permute.xlu0 %1228
    %1230 = vrot.lane.b32.xlu0 %v911, 76
    %v1231 = vpop.permute.xlu0 %1230
    %1232 = vrot.lane.b32.xlu0 %v912, 76
    %v1233 = vpop.permute.xlu0 %1232
    %v1234 = vsel %vm519, %v1227, %v1229
    %v1235 = vsel %vm519, %v1229, %v1231
    %v1236 = vsel %vm519, %v1231, %v1233
    %1240 = vst [vmem:[#allocation2 + $0x260] sm:$0xff] %v1234
    %1241 = vst [vmem:[#allocation2 + $0x268] sm:$0xff] %v1235
    %1242 = vst [vmem:[#allocation2 + $0x270] sm:$0xff] %v1236
    %1243 = vrot.lane.b32.xlu0 %v909, 64
    %v1244 = vpop.permute.xlu0 %1243
    %1245 = vrot.lane.b32.xlu0 %v910, 64
    %v1246 = vpop.permute.xlu0 %1245
    %1247 = vrot.lane.b32.xlu0 %v911, 64
    %v1248 = vpop.permute.xlu0 %1247
    %1249 = vrot.lane.b32.xlu0 %v912, 64
    %v1250 = vpop.permute.xlu0 %1249
    %v1251 = vsel %vm542, %v1244, %v1246
    %v1252 = vsel %vm542, %v1246, %v1248
    %v1253 = vsel %vm542, %v1248, %v1250
    %1257 = vst [vmem:[#allocation2 + $0x280] sm:$0xff] %v1251
    %1258 = vst [vmem:[#allocation2 + $0x288] sm:$0xff] %v1252
    %1259 = vst [vmem:[#allocation2 + $0x290] sm:$0xff] %v1253
    %1260 = vrot.lane.b32.xlu0 %v909, 63
    %v1261 = vpop.permute.xlu0 %1260
    %1262 = vrot.lane.b32.xlu0 %v910, 63
    %v1263 = vpop.permute.xlu0 %1262
    %1264 = vrot.lane.b32.xlu0 %v911, 63
    %v1265 = vpop.permute.xlu0 %1264
    %1266 = vrot.lane.b32.xlu0 %v912, 63
    %v1267 = vpop.permute.xlu0 %1266
    %v1268 = vsel %vm565, %v1261, %v1263
    %v1269 = vsel %vm565, %v1263, %v1265
    %v1270 = vsel %vm565, %v1265, %v1267
    %1274 = vst [vmem:[#allocation2 + $0x2a0] sm:$0xff] %v1268
    %1275 = vst [vmem:[#allocation2 + $0x2a8] sm:$0xff] %v1269
    %1276 = vst [vmem:[#allocation2 + $0x2b0] sm:$0xff] %v1270
    %1277 = vrot.lane.b32.xlu0 %v909, 62
    %v1278 = vpop.permute.xlu0 %1277
    %1279 = vrot.lane.b32.xlu0 %v910, 62
    %v1280 = vpop.permute.xlu0 %1279
    %1281 = vrot.lane.b32.xlu0 %v911, 62
    %v1282 = vpop.permute.xlu0 %1281
    %1283 = vrot.lane.b32.xlu0 %v912, 62
    %v1284 = vpop.permute.xlu0 %1283
    %v1285 = vsel %vm588, %v1278, %v1280
    %v1286 = vsel %vm588, %v1280, %v1282
    %v1287 = vsel %vm588, %v1282, %v1284
    %1291 = vst [vmem:[#allocation2 + $0x2c0] sm:$0xff] %v1285
    %1292 = vst [vmem:[#allocation2 + $0x2c8] sm:$0xff] %v1286
    %1293 = vst [vmem:[#allocation2 + $0x2d0] sm:$0xff] %v1287
    %1294 = vrot.lane.b32.xlu0 %v909, 61
    %v1295 = vpop.permute.xlu0 %1294
    %1296 = vrot.lane.b32.xlu0 %v910, 61
    %v1297 = vpop.permute.xlu0 %1296
    %1298 = vrot.lane.b32.xlu0 %v911, 61
    %v1299 = vpop.permute.xlu0 %1298
    %1300 = vrot.lane.b32.xlu0 %v912, 61
    %v1301 = vpop.permute.xlu0 %1300
    %v1302 = vsel %vm611, %v1295, %v1297
    %v1303 = vsel %vm611, %v1297, %v1299
    %v1304 = vsel %vm611, %v1299, %v1301
    %1308 = vst [vmem:[#allocation2 + $0x2e0] sm:$0xff] %v1302
    %1309 = vst [vmem:[#allocation2 + $0x2e8] sm:$0xff] %v1303
    %1310 = vst [vmem:[#allocation2 + $0x2f0] sm:$0xff] %v1304
    %1311 = vrot.lane.b32.xlu0 %v909, 60
    %v1312 = vpop.permute.xlu0 %1311
    %1313 = vrot.lane.b32.xlu0 %v910, 60
    %v1314 = vpop.permute.xlu0 %1313
    %1315 = vrot.lane.b32.xlu0 %v911, 60
    %v1316 = vpop.permute.xlu0 %1315
    %1317 = vrot.lane.b32.xlu0 %v912, 60
    %v1318 = vpop.permute.xlu0 %1317
    %v1319 = vsel %vm634, %v1312, %v1314
    %v1320 = vsel %vm634, %v1314, %v1316
    %v1321 = vsel %vm634, %v1316, %v1318
    %1325 = vst [vmem:[#allocation2 + $0x300] sm:$0xff] %v1319
    %1326 = vst [vmem:[#allocation2 + $0x308] sm:$0xff] %v1320
    %1327 = vst [vmem:[#allocation2 + $0x310] sm:$0xff] %v1321
    %v1328 = vld [vmem:[#allocation9] sm:$0xff]
    %v1329 = vld [vmem:[#allocation9 + $0x8] sm:$0xff]
    %v1330 = vld [vmem:[#allocation2] sm:$0xff]
    %v1331 = vld [vmem:[#allocation2 + $0x8] sm:$0xff]
    %v1332 = vld [vmem:[#allocation2 + $0x10] sm:$0xff]
    %v1333 = vld [vmem:[#allocation2 + $0x20] sm:$0xff]
    %v1334 = vld [vmem:[#allocation2 + $0x28] sm:$0xff]
    %v1335 = vld [vmem:[#allocation2 + $0x30] sm:$0xff]
    %v1336 = vld [vmem:[#allocation2 + $0x40] sm:$0xff]
    %v1337 = vld [vmem:[#allocation2 + $0x48] sm:$0xff]
    %v1338 = vld [vmem:[#allocation2 + $0x50] sm:$0xff]
    %v1339 = vld [vmem:[#allocation2 + $0x60] sm:$0xff]
    %v1340 = vld [vmem:[#allocation2 + $0x68] sm:$0xff]
    %v1341 = vld [vmem:[#allocation2 + $0x70] sm:$0xff]
    %v1342 = vld [vmem:[#allocation2 + $0x80] sm:$0xff]
    %v1343 = vld [vmem:[#allocation2 + $0x88] sm:$0xff]
    %v1344 = vld [vmem:[#allocation2 + $0x90] sm:$0xff]
    %v1345 = vld [vmem:[#allocation2 + $0xa0] sm:$0xff]
    %v1346 = vld [vmem:[#allocation2 + $0xa8] sm:$0xff]
    %v1347 = vld [vmem:[#allocation2 + $0xb0] sm:$0xff]
    %v1348 = vld [vmem:[#allocation2 + $0xc0] sm:$0xff]
    %v1349 = vld [vmem:[#allocation2 + $0xc8] sm:$0xff]
    %v1350 = vld [vmem:[#allocation2 + $0xd0] sm:$0xff]
    %v1351 = vld [vmem:[#allocation2 + $0xe0] sm:$0xff]
    %v1352 = vld [vmem:[#allocation2 + $0xe8] sm:$0xff]
    %v1353 = vld [vmem:[#allocation2 + $0xf0] sm:$0xff]
    %v1354 = vld [vmem:[#allocation2 + $0x100] sm:$0xff]
    %v1355 = vld [vmem:[#allocation2 + $0x108] sm:$0xff]
    %v1356 = vld [vmem:[#allocation2 + $0x110] sm:$0xff]
    %v1357 = vld [vmem:[#allocation2 + $0x120] sm:$0xff]
    %v1358 = vld [vmem:[#allocation2 + $0x128] sm:$0xff]
    %v1359 = vld [vmem:[#allocation2 + $0x130] sm:$0xff]
    %v1360 = vld [vmem:[#allocation2 + $0x140] sm:$0xff]
    %v1361 = vld [vmem:[#allocation2 + $0x148] sm:$0xff]
    %v1362 = vld [vmem:[#allocation2 + $0x150] sm:$0xff]
    %v1363 = vld [vmem:[#allocation2 + $0x160] sm:$0xff]
    %v1364 = vld [vmem:[#allocation2 + $0x168] sm:$0xff]
    %v1365 = vld [vmem:[#allocation2 + $0x170] sm:$0xff]
    %v1366 = vld [vmem:[#allocation2 + $0x180] sm:$0xff]
    %v1367 = vld [vmem:[#allocation2 + $0x188] sm:$0xff]
    %v1368 = vld [vmem:[#allocation2 + $0x190] sm:$0xff]
    %v1369 = vld [vmem:[#allocation2 + $0x1a0] sm:$0xff]
    %v1370 = vld [vmem:[#allocation2 + $0x1a8] sm:$0xff]
    %v1371 = vld [vmem:[#allocation2 + $0x1b0] sm:$0xff]
    %v1372 = vld [vmem:[#allocation2 + $0x1c0] sm:$0xff]
    %v1373 = vld [vmem:[#allocation2 + $0x1c8] sm:$0xff]
    %v1374 = vld [vmem:[#allocation2 + $0x1d0] sm:$0xff]
    %v1375 = vld [vmem:[#allocation2 + $0x1e0] sm:$0xff]
    %v1376 = vld [vmem:[#allocation2 + $0x1e8] sm:$0xff]
    %v1377 = vld [vmem:[#allocation2 + $0x1f0] sm:$0xff]
    %v1378 = vld [vmem:[#allocation2 + $0x200] sm:$0xff]
    %v1379 = vld [vmem:[#allocation2 + $0x208] sm:$0xff]
    %v1380 = vld [vmem:[#allocation2 + $0x210] sm:$0xff]
    %v1381 = vld [vmem:[#allocation2 + $0x220] sm:$0xff]
    %v1382 = vld [vmem:[#allocation2 + $0x228] sm:$0xff]
    %v1383 = vld [vmem:[#allocation2 + $0x230] sm:$0xff]
    %v1384 = vld [vmem:[#allocation2 + $0x240] sm:$0xff]
    %v1385 = vld [vmem:[#allocation2 + $0x248] sm:$0xff]
    %v1386 = vld [vmem:[#allocation2 + $0x250] sm:$0xff]
    %v1387 = vld [vmem:[#allocation2 + $0x260] sm:$0xff]
    %v1388 = vld [vmem:[#allocation2 + $0x268] sm:$0xff]
    %v1389 = vld [vmem:[#allocation2 + $0x270] sm:$0xff]
    %v1390 = vld [vmem:[#allocation2 + $0x280] sm:$0xff]
    %v1391 = vld [vmem:[#allocation2 + $0x288] sm:$0xff]
    %v1392 = vld [vmem:[#allocation2 + $0x290] sm:$0xff]
    %v1393 = vld [vmem:[#allocation2 + $0x2a0] sm:$0xff]
    %v1394 = vld [vmem:[#allocation2 + $0x2a8] sm:$0xff]
    %v1395 = vld [vmem:[#allocation2 + $0x2b0] sm:$0xff]
    %v1396 = vld [vmem:[#allocation2 + $0x2c0] sm:$0xff]
    %v1397 = vld [vmem:[#allocation2 + $0x2c8] sm:$0xff]
    %v1398 = vld [vmem:[#allocation2 + $0x2d0] sm:$0xff]
    %v1399 = vld [vmem:[#allocation2 + $0x2e0] sm:$0xff]
    %v1400 = vld [vmem:[#allocation2 + $0x2e8] sm:$0xff]
    %v1401 = vld [vmem:[#allocation2 + $0x2f0] sm:$0xff]
    %v1402 = vld [vmem:[#allocation2 + $0x300] sm:$0xff]
    %v1403 = vld [vmem:[#allocation2 + $0x308] sm:$0xff]
    %v1404 = vld [vmem:[#allocation2 + $0x310] sm:$0xff]
    %v1405 = vld [vmem:[#allocation11] sm:$0xff]
    %1407 = vset.pattern.permute.xlu0 0
    %1408 = vperm.xlu0 %1407, %v1405
    %v1409 = vpop.permute.xlu0 %1408
    %v1412 = vsel %vm755, %v1329, 0
    %1414 = vmatprep.subr.mxu0 %v1331
    %1415 = vmatpush1.msra.mxu0 %v1330
    %1416 = vmatprep.subr.mxu0 %v1334
    %1417 = vmatpush1.msra.mxu0 %v1333
    %1418 = vmatprep.subr.mxu0 %v1337
    %1419 = vmatpush1.msra.mxu0 %v1336
    %1420 = vmatprep.subr.mxu0 %v1340
    %1421 = vmatpush1.msra.mxu0 %v1339
    %1422 = vmatprep.subr.mxu0 %v1343
    %1423 = vmatpush1.msra.mxu0 %v1342
    %1424 = vmatprep.subr.mxu0 %v1346
    %1425 = vmatpush1.msra.mxu0 %v1345
    %1426 = vmatprep.subr.mxu0 %v1349
    %1427 = vmatpush1.msra.mxu0 %v1348
    %1428 = vmatprep.subr.mxu0 %v1352
    %1429 = vmatpush1.msra.mxu0 %v1351
    %1430 = vmatprep.subr.mxu0 %v1355
    %1431 = vmatpush1.msra.mxu0 %v1354
    %1432 = vmatprep.subr.mxu0 %v1358
    %1433 = vmatpush1.msra.mxu0 %v1357
    %1434 = vmatprep.subr.mxu0 %v1361
    %1435 = vmatpush1.msra.mxu0 %v1360
    %1436 = vmatprep.subr.mxu0 %v1364
    %1437 = vmatpush1.msra.mxu0 %v1363
    %1438 = vmatprep.subr.mxu0 %v1367
    %1439 = vmatpush1.msra.mxu0 %v1366
    %1440 = vmatprep.subr.mxu0 %v1370
    %1441 = vmatpush1.msra.mxu0 %v1369
    %1442 = vmatprep.subr.mxu0 %v1373
    %1443 = vmatpush1.msra.mxu0 %v1372
    %1444 = vmatprep.subr.mxu0 %v1376
    %1445 = vmatpush1.msra.mxu0 %v1375
    %1446 = vmatprep.subr.mxu0 %v1379
    %1447 = vmatpush1.msra.mxu0 %v1378
    %1448 = vmatprep.subr.mxu0 %v1382
    %1449 = vmatpush1.msra.mxu0 %v1381
    %1450 = vmatprep.subr.mxu0 %v1385
    %1451 = vmatpush1.msra.mxu0 %v1384
    %1452 = vmatprep.subr.mxu0 %v1388
    %1453 = vmatpush1.msra.mxu0 %v1387
    %1454 = vmatprep.subr.mxu0 %v1391
    %1455 = vmatpush1.msra.mxu0 %v1390
    %1456 = vmatprep.subr.mxu0 %v1394
    %1457 = vmatpush1.msra.mxu0 %v1393
    %1458 = vmatprep.subr.mxu0 %v1397
    %1459 = vmatpush1.msra.mxu0 %v1396
    %1460 = vmatprep.subr.mxu0 %v1400
    %1461 = vmatpush1.msra.mxu0 %v1399
    %1462 = vmatprep.subr.mxu0 %v1403
    %1463 = vmatpush1.msra.mxu0 %v1402
    %1464 = vmatprep.subr.mxu0 0.0
    %1465 = vmatpush1.msra.mxu0 0.0
    %1466 = vmatprep.subr.mxu0 0.0
    %1467 = vmatpush1.msra.mxu0 0.0
    %1468 = vmatprep.subr.mxu0 0.0
    %1469 = vmatpush1.msra.mxu0 0.0
    %1470 = vmatprep.subr.mxu0 0.0
    %1471 = vmatpush1.msra.mxu0 0.0
    %1472 = vmatprep.subr.mxu0 0.0
    %1473 = vmatpush1.msra.mxu0 0.0
    %1474 = vmatprep.subr.mxu0 0.0
    %1475 = vmatpush1.msra.mxu0 0.0
    %1476 = vmatprep.subr.mxu0 0.0
    %1477 = vmatpush1.msra.mxu0 0.0
    %1478 = vmatprep.mubr.f32.mxu0 %v1412
    %1479 = vmatmul.mubr.f32.gmra.mrb[0].mxu0 %v1328
    %v1480 = vpop.f32.mrb[0].mxu0
    %v1481 = vadd.f32 %v1409, %v1480
    %v1482 = vpop.f32.mrb[0].mxu0
    %v1483 = vadd.f32 %v1409, %v1482
    %1484 = vdwg.mxu0
    %1485 = vmatprep.subr.mxu0 0.0
    %1486 = vmatpush1.msra.mxu0 %v1332
    %1487 = vmatprep.subr.mxu0 0.0
    %1488 = vmatpush1.msra.mxu0 %v1335
    %1489 = vmatprep.subr.mxu0 0.0
    %1490 = vmatpush1.msra.mxu0 %v1338
    %1491 = vmatprep.subr.mxu0 0.0
    %1492 = vmatpush1.msra.mxu0 %v1341
    %1493 = vmatprep.subr.mxu0 0.0
    %1494 = vmatpush1.msra.mxu0 %v1344
    %1495 = vmatprep.subr.mxu0 0.0
    %1496 = vmatpush1.msra.mxu0 %v1347
    %1497 = vmatprep.subr.mxu0 0.0
    %1498 = vmatpush1.msra.mxu0 %v1350
    %1499 = vmatprep.subr.mxu0 0.0
    %1500 = vmatpush1.msra.mxu0 %v1353
    %1501 = vmatprep.subr.mxu0 0.0
    %1502 = vmatpush1.msra.mxu0 %v1356
    %1503 = vmatprep.subr.mxu0 0.0
    %1504 = vmatpush1.msra.mxu0 %v1359
    %1505 = vmatprep.subr.mxu0 0.0
    %1506 = vmatpush1.msra.mxu0 %v1362
    %1507 = vmatprep.subr.mxu0 0.0
    %1508 = vmatpush1.msra.mxu0 %v1365
    %1509 = vmatprep.subr.mxu0 0.0
    %1510 = vmatpush1.msra.mxu0 %v1368
    %1511 = vmatprep.subr.mxu0 0.0
    %1512 = vmatpush1.msra.mxu0 %v1371
    %1513 = vmatprep.subr.mxu0 0.0
    %1514 = vmatpush1.msra.mxu0 %v1374
    %1515 = vmatprep.subr.mxu0 0.0
    %1516 = vmatpush1.msra.mxu0 %v1377
    %1517 = vmatprep.subr.mxu0 0.0
    %1518 = vmatpush1.msra.mxu0 %v1380
    %1519 = vmatprep.subr.mxu0 0.0
    %1520 = vmatpush1.msra.mxu0 %v1383
    %1521 = vmatprep.subr.mxu0 0.0
    %1522 = vmatpush1.msra.mxu0 %v1386
    %1523 = vmatprep.subr.mxu0 0.0
    %1524 = vmatpush1.msra.mxu0 %v1389
    %1525 = vmatprep.subr.mxu0 0.0
    %1526 = vmatpush1.msra.mxu0 %v1392
    %1527 = vmatprep.subr.mxu0 0.0
    %1528 = vmatpush1.msra.mxu0 %v1395
    %1529 = vmatprep.subr.mxu0 0.0
    %1530 = vmatpush1.msra.mxu0 %v1398
    %1531 = vmatprep.subr.mxu0 0.0
    %1532 = vmatpush1.msra.mxu0 %v1401
    %1533 = vmatprep.subr.mxu0 0.0
    %1534 = vmatpush1.msra.mxu0 %v1404
    %1535 = vmatprep.subr.mxu0 0.0
    %1536 = vmatpush1.msra.mxu0 0.0
    %1537 = vmatprep.subr.mxu0 0.0
    %1538 = vmatpush1.msra.mxu0 0.0
    %1539 = vmatprep.subr.mxu0 0.0
    %1540 = vmatpush1.msra.mxu0 0.0
    %1541 = vmatprep.subr.mxu0 0.0
    %1542 = vmatpush1.msra.mxu0 0.0
    %1543 = vmatprep.subr.mxu0 0.0
    %1544 = vmatpush1.msra.mxu0 0.0
    %1545 = vmatprep.subr.mxu0 0.0
    %1546 = vmatpush1.msra.mxu0 0.0
    %1547 = vmatprep.subr.mxu0 0.0
    %1548 = vmatpush1.msra.mxu0 0.0
    %1549 = vmatprep.mubr.f32.mxu0 %v1412
    %1550 = vmatmul.mubr.f32.gmra.mrb[0].mxu0 %v1328
    %v1551 = vpop.f32.mrb[0].mxu0
    %v1552 = vadd.f32 %v1409, %v1551
    %v1553 = vpop.f32.mrb[0].mxu0
    %1554 = vdwg.mxu0
    %vm1555 = vcmp.gt.f32.partialorder %v1481, 0.0
    %vm1556 = vcmp.gt.f32.partialorder %v1483, 0.0
    %vm1557 = vcmp.gt.f32.partialorder %v1552, 0.0
    %v1558 = vmul.f32 %v1481, 0.01
    %v1559 = vmul.f32 %v1483, 0.01
    %v1560 = vmul.f32 %v1552, 0.01
    %v1561 = vsel %vm1555, %v1481, %v1558
    %v1562 = vsel %vm1556, %v1483, %v1559
    %v1563 = vsel %vm1557, %v1552, %v1560
    %1564 = vst [vmem:[#allocation12] sm:$0xff] %v1561
    %1565 = vst [vmem:[#allocation12 + $0x8] sm:$0xff] %v1562
    %1566 = vst [vmem:[#allocation12 + $0x10] sm:$0xff] %v1563
    // Predicated region
    $region42: #{tpu_custom_call.1} parent=1 // pred_check
      _
    $region43: #{tpu_custom_call.1} parent=1 // pred_check_branch
      %1568 = sbr.rel (0) target = $region45
    $region44: #{tpu_custom_call.1} parent=1 // pred_region
      %s1570 = ssub.s32 384, 384
      %1571 = vsyncadd [#allocation5], %s1570
      %s1573 = sshll.u32 [#allocation12], 4
      %s1574 = int_to_ptr.vmem [resolvable:$true] %s1573
      %1576 = dma.vmem_to_hbm [thread:$0]  %s1574, 384, %s5, [#allocation5]
    $region45: #{tpu_custom_call.1} parent=1 // pred_fallthru
      _
    // Predicated region
    $region46: #{tpu_custom_call.1} parent=1 // pred_check
      _
    $region47: #{tpu_custom_call.1} parent=1 // pred_check_branch
      %1578 = sbr.rel (0) target = $region49
    $region48: #{tpu_custom_call.1} parent=1 // pred_region
      %1579 = dma.done [#allocation5], 384
    $region49: #{tpu_custom_call.1} parent=1 // pred_fallthru
      _
    %1580 = vsyncpa [#allocation4], 1
    %1581 = vsyncpa [#allocation7], 1
    %1582 = vsyncpa [#allocation10], 1
    %1583 = vsyncpa [#allocation5], 1

</llo_original>
